<compile_context>
chip_gen: v6e
topology: v6e:2x2x1
jax: 0.10.0
libtpu: 0.0.40
codegen_flags: <defaults>
</compile_context>

<pallas_src>
import functools
import math

import jax
import jax.numpy as jnp
from jax.experimental import pallas as pl
from jax.experimental.pallas import tpu as pltpu


# --------------------------- shared math helpers -----------------------------
def gelu_tanh(x):
    # TODO(synk): PyTorch F.gelu defaults to the exact erf form; the tanh
    # approximation is used here (and in the reference) since erf has no
    # guaranteed Mosaic lowering. Max activation deviation ~3e-3.
    c = math.sqrt(2.0 / math.pi)
    return 0.5 * x * (1.0 + jnp.tanh(c * (x + 0.044715 * x * x * x)))


def sinusoidal_pos_emb(seq_len, hidden_size, max_len):
    position = jnp.arange(max_len, dtype=jnp.float32)[:, None]
    freq = jnp.exp(jnp.arange(0, hidden_size, 2, dtype=jnp.float32)
                   / hidden_size * (-math.log(10000.0)))
    emb = jnp.concatenate([jnp.sin(position * freq), jnp.cos(position * freq)],
                          axis=1)
    return emb[:seq_len]  # (seq_len, hidden_size)


# ------------------------------ Pallas kernel --------------------------------
def qanet_stack_kernel(
    x_ref, pos_ref, maskcol_ref, kmk_ref, kmb_ref,
    ln_g_ref, ln_b_ref, wc_ref, bc_ref,
    wqkv_ref, bqkv_ref, wo_ref, bo_ref,
    w1_ref, b1_ref, w2_ref, b2_ref,
    out_ref,
    oheads_scr, xpad_scr,
    *, B, L, H, num_head, cnn_layer, ksize, gain,
):
    """One grid step == one QANetBlock applied to the resident residual stream."""
    A = H
    hs = A // num_head
    BL = B * L
    pad = (ksize - 1) // 2
    f32 = jnp.float32

    # Layer 0: load the residual stream from the input; afterwards the output
    # block (constant index map -> stays in VMEM) carries it across layers.
    @pl.when(pl.program_id(0) == 0)
    def _init():
        out_ref[...] = x_ref[...]

    def layer_norm(v, idx):
        g = ln_g_ref[0, idx]              # (1, H)
        b = ln_b_ref[0, idx]              # (1, H)
        mu = jnp.mean(v, axis=-1, keepdims=True)
        vc = v - mu
        var = jnp.mean(vc * vc, axis=-1, keepdims=True)
        return vc * jax.lax.rsqrt(var + 1e-5) * g + b

    def softmax_last(s):
        m = jnp.max(s, axis=-1, keepdims=True)
        e = jnp.exp(s - m)
        d = jnp.sum(e, axis=-1, keepdims=True)
        r = pl.reciprocal(d, approx=True)   # EUP slot (otherwise idle)
        r = r * (2.0 - d * r)               # one Newton step -> ~f32 accurate
        return e * r

    x2 = out_ref[...] + pos_ref[...]        # (BL, H): residual stream + pos emb
    maskcol = maskcol_ref[...]              # (BL, 1) row validity mask

    # -------------------------- CNN residual blocks --------------------------
    xpad_scr[...] = jnp.zeros((B, L + 2 * pad, H), f32)   # zero borders once
    for c in range(cnn_layer):
        y2 = layer_norm(x2, 2 * c)
        xpad_scr[:, pad:pad + L, :] = (y2 * maskcol).reshape(B, L, H)
        acc = jnp.zeros((BL, H), f32)
        for j in range(ksize):              # conv as K shifted matmuls (MXU)
            tap = xpad_scr[:, j:j + L, :].reshape(BL, H)
            acc = acc + jnp.dot(tap, wc_ref[0, c * ksize + j],
                                preferred_element_type=f32)
        y2 = layer_norm(acc + bc_ref[0, c], 2 * c + 1)
        x2 = x2 + y2 * gain

    # ----------------------- self-attention residual block -------------------
    i0 = 2 * cnn_layer
    y2 = layer_norm(x2, i0)
    # Fused QKV projection: one (BL, H) @ (H, 3A) matmul.
    qkv = jnp.dot(y2, wqkv_ref[0], preferred_element_type=f32) + bqkv_ref[0]
    q3 = (qkv[:, 0:A] * (1.0 / math.sqrt(hs))).reshape(B, L, A)
    k3 = qkv[:, A:2 * A].reshape(B, L, A)
    v3 = qkv[:, 2 * A:3 * A].reshape(B, L, A)

    # Key-mask keep/bias precomputed in the wrapper; broadcast hoisted out of
    # the head loop (JAX does not CSE broadcast_in_dim).
    kmk = jnp.broadcast_to(kmk_ref[...], (B, L, L))
    kmb = jnp.broadcast_to(kmb_ref[...], (B, L, L))

    for h in range(num_head):               # static unroll over heads
        lo = h * hs
        qh = q3[:, :, lo:lo + hs]
        kh = k3[:, :, lo:lo + hs]
        vh = v3[:, :, lo:lo + hs]
        # scores without any explicit transpose (batched dot_general)
        s = jax.lax.dot_general(qh, kh, (((2,), (2,)), ((0,), (0,))),
                                preferred_element_type=f32)      # (B, L, L)
        p = softmax_last(s * kmk + kmb)
        oh = jax.lax.dot_general(p, vh, (((2,), (1,)), ((0,), (0,))),
                                 preferred_element_type=f32)     # (B, L, hs)
        oheads_scr[:, :, lo:lo + hs] = oh    # no jnp.concatenate of head slices

    o2 = oheads_scr[...].reshape(BL, A)
    o2 = jnp.dot(o2, wo_ref[0], preferred_element_type=f32) + bo_ref[0]
    y2 = layer_norm(o2, i0 + 1)
    x2 = x2 + y2 * gain

    # ---------------------------- feed-forward block --------------------------
    y2 = layer_norm(x2, i0 + 2)
    h1 = jnp.dot(y2, w1_ref[0], preferred_element_type=f32) + b1_ref[0]
    h1 = gelu_tanh(h1)
    y2 = jnp.dot(h1, w2_ref[0], preferred_element_type=f32) + b2_ref[0]
    y2 = layer_norm(y2, i0 + 3)
    x2 = x2 + y2 * gain

    out_ref[...] = x2


# --------------------------------- wrapper ------------------------------------
def qanet_stack_pallas(x, mask, params, *, num_head, kernel_size, gain, max_len):
    B, L, H = x.shape
    layers = params["layers"]
    NL = len(layers)
    C = len(layers[0]["cnn"])
    A = H                       # attention_size == hidden_size in QANetBlock
    K = kernel_size
    BL = B * L
    pad = (K - 1) // 2
    f32 = jnp.float32

    mask_f = mask.astype(f32)
    pos = jnp.tile(sinusoidal_pos_emb(L, H, max_len), (B, 1))          # (BL, H)
    maskcol = mask_f.reshape(BL, 1)                                    # (BL, 1)
    km_keep = mask_f[:, None, :]                                       # (B, 1, L)
    km_bias = (-100000.0 * (1.0 - mask_f))[:, None, :]                 # (B, 1, L)
    x2d = x.reshape(BL, H).astype(f32)

    def stack(fn):
        return jnp.stack([fn(lp) for lp in layers], axis=0)

    def ln_stack(lp, sfx):
        rows = []
        for c in range(C):
            rows.append(lp["cnn"][c]["ln1_" + sfx])
            rows.append(lp["cnn"][c]["ln2_" + sfx])
        rows += [lp["attn"]["ln1_" + sfx], lp["attn"]["ln2_" + sfx],
                 lp["ff"]["ln1_" + sfx], lp["ff"]["ln2_" + sfx]]
        return jnp.stack(rows, axis=0)[:, None, :]                     # (NLN, 1, H)

    ln_g = stack(lambda lp: ln_stack(lp, "g"))                         # (NL, NLN, 1, H)
    ln_b = stack(lambda lp: ln_stack(lp, "b"))

    # Conv weights: torch (Cout, Cin, K) -> per-tap (Cin, Cout), flattened taps.
    wc = stack(lambda lp: jnp.concatenate(
        [jnp.transpose(lp["cnn"][c]["w"], (2, 1, 0)) for c in range(C)],
        axis=0))                                                       # (NL, C*K, H, H)
    bc = stack(lambda lp: jnp.stack(
        [lp["cnn"][c]["b"] for c in range(C)], axis=0)[:, None, :])    # (NL, C, 1, H)

    # Fused QKV weights (H, 3A) and output projection (A, H), biases as rows.
    wqkv = stack(lambda lp: jnp.concatenate(
        [lp["attn"]["wq"].T, lp["attn"]["wk"].T, lp["attn"]["wv"].T], axis=1))
    bqkv = stack(lambda lp: jnp.concatenate(
        [lp["attn"]["bq"], lp["attn"]["bk"], lp["attn"]["bv"]])[None, :])
    wo = stack(lambda lp: lp["attn"]["wo"].T)
    bo = stack(lambda lp: lp["attn"]["bo"][None, :])
    w1 = stack(lambda lp: lp["ff"]["w1"].T)
    b1 = stack(lambda lp: lp["ff"]["b1"][None, :])
    w2 = stack(lambda lp: lp["ff"]["w2"].T)
    b2 = stack(lambda lp: lp["ff"]["b2"][None, :])

    def per_layer_spec(a):
        rest = a.shape[1:]
        return pl.BlockSpec((1,) + rest, lambda l, _n=len(rest): (l,) + (0,) * _n)

    def const_spec(a):
        return pl.BlockSpec(a.shape, lambda l, _n=a.ndim: (0,) * _n)

    kernel = functools.partial(
        qanet_stack_kernel, B=B, L=L, H=H, num_head=num_head,
        cnn_layer=C, ksize=K, gain=float(gain))

    out = pl.pallas_call(
        kernel,
        out_shape=jax.ShapeDtypeStruct((BL, H), f32),
        grid_spec=pltpu.PrefetchScalarGridSpec(
            num_scalar_prefetch=0,
            grid=(NL,),
            in_specs=[
                const_spec(x2d), const_spec(pos), const_spec(maskcol),
                const_spec(km_keep), const_spec(km_bias),
                per_layer_spec(ln_g), per_layer_spec(ln_b),
                per_layer_spec(wc), per_layer_spec(bc),
                per_layer_spec(wqkv), per_layer_spec(bqkv),
                per_layer_spec(wo), per_layer_spec(bo),
                per_layer_spec(w1), per_layer_spec(b1),
                per_layer_spec(w2), per_layer_spec(b2),
            ],
            out_specs=pl.BlockSpec((BL, H), lambda l: (0, 0)),
            scratch_shapes=[
                pltpu.VMEM((B, L, A), f32),             # per-head attn outputs
                pltpu.VMEM((B, L + 2 * pad, H), f32),   # zero-padded conv input
            ],
        ),
        compiler_params=pltpu.CompilerParams(
            dimension_semantics=("arbitrary",),  # residual carry across layers
        ),
    )(x2d, pos, maskcol, km_keep, km_bias, ln_g, ln_b, wc, bc,
      wqkv, bqkv, wo, bo, w1, b1, w2, b2)
    return out.reshape(B, L, H)


# ---------------------------- pure-JAX reference -------------------------------
def layer_norm_ref(x, g, b, eps=1e-5):
    mu = jnp.mean(x, axis=-1, keepdims=True)
    var = jnp.mean((x - mu) ** 2, axis=-1, keepdims=True)
    return (x - mu) / jnp.sqrt(var + eps) * g + b


def conv1d_same_ref(y, w, b):
    # y: (B, L, Cin); w: (Cout, Cin, K) -- PyTorch Conv1d layout, padding='same'.
    out = jax.lax.conv_general_dilated(
        jnp.transpose(y, (0, 2, 1)), w, window_strides=(1,), padding="SAME",
        dimension_numbers=("NCH", "OIH", "NCH"))
    return jnp.transpose(out, (0, 2, 1)) + b


def self_attention_ref(x, mask_f, p, num_head):
    B, L, _ = x.shape
    A = p["wq"].shape[0]
    hs = A // num_head

    def lin(v, w, bias):
        return v @ w.T + bias

    def split(v):
        return v.reshape(B, L, num_head, hs).transpose(0, 2, 1, 3)

    q = split(lin(x, p["wq"], p["bq"]))
    k = split(lin(x, p["wk"], p["bk"]))
    v = split(lin(x, p["wv"], p["bv"]))
    attn = jnp.einsum("bhsd,bhtd->bhst", q, k) / math.sqrt(hs)
    m = mask_f[:, None, None, :]
    attn = attn * m - 100000.0 * (1.0 - m)
    attn = jax.nn.softmax(attn, axis=-1)
    o = jnp.einsum("bhst,bhtd->bhsd", attn, v)
    o = o.transpose(0, 2, 1, 3).reshape(B, L, A)
    return lin(o, p["wo"], p["bo"])


def qanet_stack_ref(x, mask, params, *, num_head, kernel_size, gain, max_len):
    B, L, H = x.shape
    mask_f = mask.astype(jnp.float32)
    pos = sinusoidal_pos_emb(L, H, max_len)
    for lp in params["layers"]:
        x = x + pos[None]
        for cp in lp["cnn"]:
            y = layer_norm_ref(x, cp["ln1_g"], cp["ln1_b"])
            y = y * mask_f[:, :, None]
            y = conv1d_same_ref(y, cp["w"], cp["b"])
            y = layer_norm_ref(y, cp["ln2_g"], cp["ln2_b"])
            x = x + y * gain
        ap = lp["attn"]
        y = layer_norm_ref(x, ap["ln1_g"], ap["ln1_b"])
        y = self_attention_ref(y, mask_f, ap, num_head)
        y = layer_norm_ref(y, ap["ln2_g"], ap["ln2_b"])
        x = x + y * gain
        fp = lp["ff"]
        y = layer_norm_ref(x, fp["ln1_g"], fp["ln1_b"])
        y = gelu_tanh(y @ fp["w1"].T + fp["b1"])
        y = y @ fp["w2"].T + fp["b2"]
        y = layer_norm_ref(y, fp["ln2_g"], fp["ln2_b"])
        x = x + y * gain
    return x


# ------------------------------------ main --------------------------------------
if __name__ == "__main__":
    B, L = 2, 16
    hidden_size = 32
    num_head = 4
    num_layers = 2
    kernel_size = 5
    cnn_layer = 2
    max_len = 64
    gain = 0.5

    keys = iter(jax.random.split(jax.random.PRNGKey(0), 256))
    nk = lambda: next(keys)

    def init_linear(out_f, in_f):
        bound = 1.0 / math.sqrt(in_f)
        w = jax.random.uniform(nk(), (out_f, in_f), jnp.float32, -bound, bound)
        b = jax.random.uniform(nk(), (out_f,), jnp.float32, -bound, bound)
        return w, b

    def init_ln(h):
        g = 1.0 + 0.1 * jax.random.normal(nk(), (h,), jnp.float32)
        b = 0.1 * jax.random.normal(nk(), (h,), jnp.float32)
        return g, b

    layers = []
    for _ in range(num_layers):
        cnn_blocks = []
        for _ in range(cnn_layer):
            g1, be1 = init_ln(hidden_size)
            bound = 1.0 / math.sqrt(hidden_size * kernel_size)
            cw = jax.random.uniform(nk(), (hidden_size, hidden_size, kernel_size),
                                    jnp.float32, -bound, bound)
            cb = jax.random.uniform(nk(), (hidden_size,), jnp.float32, -bound, bound)
            g2, be2 = init_ln(hidden_size)
            cnn_blocks.append(dict(ln1_g=g1, ln1_b=be1, w=cw, b=cb,
                                   ln2_g=g2, ln2_b=be2))
        ag1, ab1 = init_ln(hidden_size)
        wq, bq = init_linear(hidden_size, hidden_size)
        wk, bk = init_linear(hidden_size, hidden_size)
        wv, bv = init_linear(hidden_size, hidden_size)
        wo, bo = init_linear(hidden_size, hidden_size)
        ag2, ab2 = init_ln(hidden_size)
        attn = dict(ln1_g=ag1, ln1_b=ab1, wq=wq, bq=bq, wk=wk, bk=bk,
                    wv=wv, bv=bv, wo=wo, bo=bo, ln2_g=ag2, ln2_b=ab2)
        fg1, fb1 = init_ln(hidden_size)
        fw1, fbb1 = init_linear(hidden_size, hidden_size)
        fw2, fbb2 = init_linear(hidden_size, hidden_size)
        fg2, fb2 = init_ln(hidden_size)
        ff = dict(ln1_g=fg1, ln1_b=fb1, w1=fw1, b1=fbb1, w2=fw2, b2=fbb2,
                  ln2_g=fg2, ln2_b=fb2)
        layers.append(dict(cnn=cnn_blocks, attn=attn, ff=ff))
    params = dict(layers=layers)

    x = jax.random.normal(nk(), (B, L, hidden_size), dtype=jnp.float32)
    mask = jnp.arange(L)[None, :] < jnp.array([L, L - 5])[:, None]   # (B, L) bool

    out = qanet_stack_pallas(x, mask, params, num_head=num_head,
                             kernel_size=kernel_size, gain=gain, max_len=max_len)
    jax.block_until_ready(out)

    ref = qanet_stack_ref(x, mask, params, num_head=num_head,
                          kernel_size=kernel_size, gain=gain, max_len=max_len)
    assert out.shape == ref.shape
    assert jnp.allclose(out, ref, rtol=2e-3, atol=2e-3), \
        float(jnp.max(jnp.abs(out - ref)))
    print("KERNEL_OK")
</pallas_src>

<mosaic_0001>
module attributes {stable_mosaic.version = 11 : i64} {
  func.func @qanet_stack_kernel(%arg0: i32, %arg1: memref<32x32xf32, #tpu.memory_space<vmem>>, %arg2: memref<32x32xf32, #tpu.memory_space<vmem>>, %arg3: memref<32x1xf32, #tpu.memory_space<vmem>>, %arg4: memref<2x1x16xf32, #tpu.memory_space<vmem>>, %arg5: memref<2x1x16xf32, #tpu.memory_space<vmem>>, %arg6: memref<1x8x1x32xf32, #tpu.memory_space<vmem>>, %arg7: memref<1x8x1x32xf32, #tpu.memory_space<vmem>>, %arg8: memref<1x10x32x32xf32, #tpu.memory_space<vmem>>, %arg9: memref<1x2x1x32xf32, #tpu.memory_space<vmem>>, %arg10: memref<1x32x96xf32, #tpu.memory_space<vmem>>, %arg11: memref<1x1x96xf32, #tpu.memory_space<vmem>>, %arg12: memref<1x32x32xf32, #tpu.memory_space<vmem>>, %arg13: memref<1x1x32xf32, #tpu.memory_space<vmem>>, %arg14: memref<1x32x32xf32, #tpu.memory_space<vmem>>, %arg15: memref<1x1x32xf32, #tpu.memory_space<vmem>>, %arg16: memref<1x32x32xf32, #tpu.memory_space<vmem>>, %arg17: memref<1x1x32xf32, #tpu.memory_space<vmem>>, %arg18: memref<32x32xf32, #tpu.memory_space<vmem>>, %arg19: memref<2x16x32xf32, #tpu.memory_space<vmem>>, %arg20: memref<2x20x32xf32, #tpu.memory_space<vmem>>) attributes {dimension_semantics = [#tpu.dimension_semantics<arbitrary>], iteration_bounds = array<i64: 2>, scalar_prefetch = 0 : i64, scratch_operands = 2 : i64, tpu.core_type = #tpu.core_type<tc>, window_params = [{pipeline_mode = #tpu.pipeline_mode<synchronous>, transform_indices = @transform_0, window_bounds = array<i64: 32, 32>}, {pipeline_mode = #tpu.pipeline_mode<synchronous>, transform_indices = @transform_1, window_bounds = array<i64: 32, 32>}, {pipeline_mode = #tpu.pipeline_mode<synchronous>, transform_indices = @transform_2, window_bounds = array<i64: 32, 1>}, {pipeline_mode = #tpu.pipeline_mode<synchronous>, transform_indices = @transform_3, window_bounds = array<i64: 2, 1, 16>}, {pipeline_mode = #tpu.pipeline_mode<synchronous>, transform_indices = @transform_4, window_bounds = array<i64: 2, 1, 16>}, {transform_indices = @transform_5, window_bounds = array<i64: 1, 8, 1, 32>}, {transform_indices = @transform_6, window_bounds = array<i64: 1, 8, 1, 32>}, {transform_indices = @transform_7, window_bounds = array<i64: 1, 10, 32, 32>}, {transform_indices = @transform_8, window_bounds = array<i64: 1, 2, 1, 32>}, {transform_indices = @transform_9, window_bounds = array<i64: 1, 32, 96>}, {transform_indices = @transform_10, window_bounds = array<i64: 1, 1, 96>}, {transform_indices = @transform_11, window_bounds = array<i64: 1, 32, 32>}, {transform_indices = @transform_12, window_bounds = array<i64: 1, 1, 32>}, {transform_indices = @transform_13, window_bounds = array<i64: 1, 32, 32>}, {transform_indices = @transform_14, window_bounds = array<i64: 1, 1, 32>}, {transform_indices = @transform_15, window_bounds = array<i64: 1, 32, 32>}, {transform_indices = @transform_16, window_bounds = array<i64: 1, 1, 32>}, {pipeline_mode = #tpu.pipeline_mode<synchronous>, transform_indices = @transform_17, window_bounds = array<i64: 32, 32>}]} {
    %c0_i32 = arith.constant 0 : i32
    %0 = arith.cmpi eq, %arg0, %c0_i32 : i32
    %1 = arith.extui %0 : i1 to i32
    %c0_i32_0 = arith.constant 0 : i32
    %2 = arith.cmpi ne, %1, %c0_i32_0 : i32
    scf.if %2 {
      %c0_278 = arith.constant 0 : index
      %c0_279 = arith.constant 0 : index
      %437 = vector.load %arg1[%c0_278, %c0_279] : memref<32x32xf32, #tpu.memory_space<vmem>>, vector<32x32xf32>
      %c0_280 = arith.constant 0 : index
      %c0_281 = arith.constant 0 : index
      %438 = vector.load %arg18[%c0_280, %c0_281] : memref<32x32xf32, #tpu.memory_space<vmem>>, vector<32x32xf32>
      tpu.vector_store %arg18[%c0_280, %c0_281], %437 {strides = array<i32>} : memref<32x32xf32, #tpu.memory_space<vmem>>, vector<32x32xf32>,
    } else {
    }
    %c0 = arith.constant 0 : index
    %c0_1 = arith.constant 0 : index
    %3 = vector.load %arg18[%c0, %c0_1] : memref<32x32xf32, #tpu.memory_space<vmem>>, vector<32x32xf32>
    %c0_2 = arith.constant 0 : index
    %c0_3 = arith.constant 0 : index
    %4 = vector.load %arg2[%c0_2, %c0_3] : memref<32x32xf32, #tpu.memory_space<vmem>>, vector<32x32xf32>
    %5 = arith.addf %3, %4 : vector<32x32xf32>
    %c0_4 = arith.constant 0 : index
    %c0_5 = arith.constant 0 : index
    %6 = vector.load %arg3[%c0_4, %c0_5] : memref<32x1xf32, #tpu.memory_space<vmem>>, vector<32x1xf32>
    %cst = arith.constant 0.000000e+00 : f32
    %7 = vector.broadcast %cst : f32 to vector<2x20x32xf32>
    %c0_6 = arith.constant 0 : index
    %c0_7 = arith.constant 0 : index
    %c0_8 = arith.constant 0 : index
    %8 = vector.load %arg20[%c0_6, %c0_7, %c0_8] : memref<2x20x32xf32, #tpu.memory_space<vmem>>, vector<2x20x32xf32>
    tpu.vector_store %arg20[%c0_6, %c0_7, %c0_8], %7 {strides = array<i32>} : memref<2x20x32xf32, #tpu.memory_space<vmem>>, vector<2x20x32xf32>,
    %c0_9 = arith.constant 0 : index
    %c0_10 = arith.constant 0 : index
    %c0_11 = arith.constant 0 : index
    %c0_12 = arith.constant 0 : index
    %9 = vector.load %arg6[%c0_9, %c0_10, %c0_11, %c0_12] : memref<1x8x1x32xf32, #tpu.memory_space<vmem>>, vector<1x1x1x32xf32>
    %10 = vector.shape_cast %9 : vector<1x1x1x32xf32> to vector<1x32xf32>
    %c0_13 = arith.constant 0 : index
    %c0_14 = arith.constant 0 : index
    %c0_15 = arith.constant 0 : index
    %c0_16 = arith.constant 0 : index
    %11 = vector.load %arg7[%c0_13, %c0_14, %c0_15, %c0_16] : memref<1x8x1x32xf32, #tpu.memory_space<vmem>>, vector<1x1x1x32xf32>
    %12 = vector.shape_cast %11 : vector<1x1x1x32xf32> to vector<1x32xf32>
    %cst_17 = arith.constant dense<0.000000e+00> : vector<32xf32>
    %13 = vector.multi_reduction <add>, %5, %cst_17 [1] : vector<32x32xf32> to vector<32xf32>
    %14 = vector.shape_cast %13 : vector<32xf32> to vector<32x1xf32>
    %cst_18 = arith.constant 3.200000e+01 : f32
    %15 = vector.broadcast %cst_18 : f32 to vector<32x1xf32>
    %16 = arith.divf %14, %15 : vector<32x1xf32>
    %17 = vector.broadcast %16 : vector<32x1xf32> to vector<32x32xf32>
    %18 = arith.subf %5, %17 : vector<32x32xf32>
    %19 = arith.mulf %18, %18 : vector<32x32xf32>
    %cst_19 = arith.constant dense<0.000000e+00> : vector<32xf32>
    %20 = vector.multi_reduction <add>, %19, %cst_19 [1] : vector<32x32xf32> to vector<32xf32>
    %21 = vector.shape_cast %20 : vector<32xf32> to vector<32x1xf32>
    %cst_20 = arith.constant 3.200000e+01 : f32
    %22 = vector.broadcast %cst_20 : f32 to vector<32x1xf32>
    %23 = arith.divf %21, %22 : vector<32x1xf32>
    %cst_21 = arith.constant 9.99999974E-6 : f32
    %24 = vector.broadcast %cst_21 : f32 to vector<32x1xf32>
    %25 = arith.addf %23, %24 : vector<32x1xf32>
    %26 = math.rsqrt %25 : vector<32x1xf32>
    %27 = vector.broadcast %26 : vector<32x1xf32> to vector<32x32xf32>
    %28 = arith.mulf %18, %27 : vector<32x32xf32>
    %29 = vector.broadcast %10 : vector<1x32xf32> to vector<32x32xf32>
    %30 = arith.mulf %28, %29 : vector<32x32xf32>
    %31 = vector.broadcast %12 : vector<1x32xf32> to vector<32x32xf32>
    %32 = arith.addf %30, %31 : vector<32x32xf32>
    %33 = vector.broadcast %6 : vector<32x1xf32> to vector<32x32xf32>
    %34 = arith.mulf %32, %33 : vector<32x32xf32>
    %35 = vector.shape_cast %34 : vector<32x32xf32> to vector<2x16x32xf32>
    %c0_22 = arith.constant 0 : index
    %c2 = arith.constant 2 : index
    %c0_23 = arith.constant 0 : index
    %36 = vector.load %arg20[%c0_22, %c2, %c0_23] : memref<2x20x32xf32, #tpu.memory_space<vmem>>, vector<2x16x32xf32>
    tpu.vector_store %arg20[%c0_22, %c2, %c0_23], %35 {strides = array<i32>} : memref<2x20x32xf32, #tpu.memory_space<vmem>>, vector<2x16x32xf32>,
    %cst_24 = arith.constant 0.000000e+00 : f32
    %37 = vector.broadcast %cst_24 : f32 to vector<32x32xf32>
    %c0_25 = arith.constant 0 : index
    %c0_26 = arith.constant 0 : index
    %c0_27 = arith.constant 0 : index
    %38 = vector.load %arg20[%c0_25, %c0_26, %c0_27] : memref<2x20x32xf32, #tpu.memory_space<vmem>>, vector<2x16x32xf32>
    %39 = vector.shape_cast %38 : vector<2x16x32xf32> to vector<32x32xf32>
    %c0_28 = arith.constant 0 : index
    %c0_29 = arith.constant 0 : index
    %c0_30 = arith.constant 0 : index
    %c0_31 = arith.constant 0 : index
    %40 = vector.load %arg8[%c0_28, %c0_29, %c0_30, %c0_31] : memref<1x10x32x32xf32, #tpu.memory_space<vmem>>, vector<1x1x32x32xf32>
    %41 = vector.shape_cast %40 : vector<1x1x32x32xf32> to vector<32x32xf32>
    %cst_32 = arith.constant dense<0.000000e+00> : vector<32x32xf32>
    %42 = tpu.matmul %39, %41, %cst_32 {dimension_numbers = #tpu.dot_dimension_numbers<[1], [0], [0], [1], [0, 0, 1, 1], [], []>} : vector<32x32xf32>, vector<32x32xf32>, vector<32x32xf32> -> vector<32x32xf32>
    %43 = arith.addf %37, %42 : vector<32x32xf32>
    %c0_33 = arith.constant 0 : index
    %c1 = arith.constant 1 : index
    %c0_34 = arith.constant 0 : index
    %44 = vector.load %arg20[%c0_33, %c1, %c0_34] : memref<2x20x32xf32, #tpu.memory_space<vmem>>, vector<2x16x32xf32>
    %45 = vector.shape_cast %44 : vector<2x16x32xf32> to vector<32x32xf32>
    %c0_35 = arith.constant 0 : index
    %c1_36 = arith.constant 1 : index
    %c0_37 = arith.constant 0 : index
    %c0_38 = arith.constant 0 : index
    %46 = vector.load %arg8[%c0_35, %c1_36, %c0_37, %c0_38] : memref<1x10x32x32xf32, #tpu.memory_space<vmem>>, vector<1x1x32x32xf32>
    %47 = vector.shape_cast %46 : vector<1x1x32x32xf32> to vector<32x32xf32>
    %cst_39 = arith.constant dense<0.000000e+00> : vector<32x32xf32>
    %48 = tpu.matmul %45, %47, %cst_39 {dimension_numbers = #tpu.dot_dimension_numbers<[1], [0], [0], [1], [0, 0, 1, 1], [], []>} : vector<32x32xf32>, vector<32x32xf32>, vector<32x32xf32> -> vector<32x32xf32>
    %49 = arith.addf %43, %48 : vector<32x32xf32>
    %c0_40 = arith.constant 0 : index
    %c2_41 = arith.constant 2 : index
    %c0_42 = arith.constant 0 : index
    %50 = vector.load %arg20[%c0_40, %c2_41, %c0_42] : memref<2x20x32xf32, #tpu.memory_space<vmem>>, vector<2x16x32xf32>
    %51 = vector.shape_cast %50 : vector<2x16x32xf32> to vector<32x32xf32>
    %c0_43 = arith.constant 0 : index
    %c2_44 = arith.constant 2 : index
    %c0_45 = arith.constant 0 : index
    %c0_46 = arith.constant 0 : index
    %52 = vector.load %arg8[%c0_43, %c2_44, %c0_45, %c0_46] : memref<1x10x32x32xf32, #tpu.memory_space<vmem>>, vector<1x1x32x32xf32>
    %53 = vector.shape_cast %52 : vector<1x1x32x32xf32> to vector<32x32xf32>
    %cst_47 = arith.constant dense<0.000000e+00> : vector<32x32xf32>
    %54 = tpu.matmul %51, %53, %cst_47 {dimension_numbers = #tpu.dot_dimension_numbers<[1], [0], [0], [1], [0, 0, 1, 1], [], []>} : vector<32x32xf32>, vector<32x32xf32>, vector<32x32xf32> -> vector<32x32xf32>
    %55 = arith.addf %49, %54 : vector<32x32xf32>
    %c0_48 = arith.constant 0 : index
    %c3 = arith.constant 3 : index
    %c0_49 = arith.constant 0 : index
    %56 = vector.load %arg20[%c0_48, %c3, %c0_49] : memref<2x20x32xf32, #tpu.memory_space<vmem>>, vector<2x16x32xf32>
    %57 = vector.shape_cast %56 : vector<2x16x32xf32> to vector<32x32xf32>
    %c0_50 = arith.constant 0 : index
    %c3_51 = arith.constant 3 : index
    %c0_52 = arith.constant 0 : index
    %c0_53 = arith.constant 0 : index
    %58 = vector.load %arg8[%c0_50, %c3_51, %c0_52, %c0_53] : memref<1x10x32x32xf32, #tpu.memory_space<vmem>>, vector<1x1x32x32xf32>
    %59 = vector.shape_cast %58 : vector<1x1x32x32xf32> to vector<32x32xf32>
    %cst_54 = arith.constant dense<0.000000e+00> : vector<32x32xf32>
    %60 = tpu.matmul %57, %59, %cst_54 {dimension_numbers = #tpu.dot_dimension_numbers<[1], [0], [0], [1], [0, 0, 1, 1], [], []>} : vector<32x32xf32>, vector<32x32xf32>, vector<32x32xf32> -> vector<32x32xf32>
    %61 = arith.addf %55, %60 : vector<32x32xf32>
    %c0_55 = arith.constant 0 : index
    %c4 = arith.constant 4 : index
    %c0_56 = arith.constant 0 : index
    %62 = vector.load %arg20[%c0_55, %c4, %c0_56] : memref<2x20x32xf32, #tpu.memory_space<vmem>>, vector<2x16x32xf32>
    %63 = vector.shape_cast %62 : vector<2x16x32xf32> to vector<32x32xf32>
    %c0_57 = arith.constant 0 : index
    %c4_58 = arith.constant 4 : index
    %c0_59 = arith.constant 0 : index
    %c0_60 = arith.constant 0 : index
    %64 = vector.load %arg8[%c0_57, %c4_58, %c0_59, %c0_60] : memref<1x10x32x32xf32, #tpu.memory_space<vmem>>, vector<1x1x32x32xf32>
    %65 = vector.shape_cast %64 : vector<1x1x32x32xf32> to vector<32x32xf32>
    %cst_61 = arith.constant dense<0.000000e+00> : vector<32x32xf32>
    %66 = tpu.matmul %63, %65, %cst_61 {dimension_numbers = #tpu.dot_dimension_numbers<[1], [0], [0], [1], [0, 0, 1, 1], [], []>} : vector<32x32xf32>, vector<32x32xf32>, vector<32x32xf32> -> vector<32x32xf32>
    %67 = arith.addf %61, %66 : vector<32x32xf32>
    %c0_62 = arith.constant 0 : index
    %c0_63 = arith.constant 0 : index
    %c0_64 = arith.constant 0 : index
    %c0_65 = arith.constant 0 : index
    %68 = vector.load %arg9[%c0_62, %c0_63, %c0_64, %c0_65] : memref<1x2x1x32xf32, #tpu.memory_space<vmem>>, vector<1x1x1x32xf32>
    %69 = vector.shape_cast %68 : vector<1x1x1x32xf32> to vector<1x32xf32>
    %70 = vector.broadcast %69 : vector<1x32xf32> to vector<32x32xf32>
    %71 = arith.addf %67, %70 : vector<32x32xf32>
    %c0_66 = arith.constant 0 : index
    %c1_67 = arith.constant 1 : index
    %c0_68 = arith.constant 0 : index
    %c0_69 = arith.constant 0 : index
    %72 = vector.load %arg6[%c0_66, %c1_67, %c0_68, %c0_69] : memref<1x8x1x32xf32, #tpu.memory_space<vmem>>, vector<1x1x1x32xf32>
    %73 = vector.shape_cast %72 : vector<1x1x1x32xf32> to vector<1x32xf32>
    %c0_70 = arith.constant 0 : index
    %c1_71 = arith.constant 1 : index
    %c0_72 = arith.constant 0 : index
    %c0_73 = arith.constant 0 : index
    %74 = vector.load %arg7[%c0_70, %c1_71, %c0_72, %c0_73] : memref<1x8x1x32xf32, #tpu.memory_space<vmem>>, vector<1x1x1x32xf32>
    %75 = vector.shape_cast %74 : vector<1x1x1x32xf32> to vector<1x32xf32>
    %cst_74 = arith.constant dense<0.000000e+00> : vector<32xf32>
    %76 = vector.multi_reduction <add>, %71, %cst_74 [1] : vector<32x32xf32> to vector<32xf32>
    %77 = vector.shape_cast %76 : vector<32xf32> to vector<32x1xf32>
    %cst_75 = arith.constant 3.200000e+01 : f32
    %78 = vector.broadcast %cst_75 : f32 to vector<32x1xf32>
    %79 = arith.divf %77, %78 : vector<32x1xf32>
    %80 = vector.broadcast %79 : vector<32x1xf32> to vector<32x32xf32>
    %81 = arith.subf %71, %80 : vector<32x32xf32>
    %82 = arith.mulf %81, %81 : vector<32x32xf32>
    %cst_76 = arith.constant dense<0.000000e+00> : vector<32xf32>
    %83 = vector.multi_reduction <add>, %82, %cst_76 [1] : vector<32x32xf32> to vector<32xf32>
    %84 = vector.shape_cast %83 : vector<32xf32> to vector<32x1xf32>
    %cst_77 = arith.constant 3.200000e+01 : f32
    %85 = vector.broadcast %cst_77 : f32 to vector<32x1xf32>
    %86 = arith.divf %84, %85 : vector<32x1xf32>
    %cst_78 = arith.constant 9.99999974E-6 : f32
    %87 = vector.broadcast %cst_78 : f32 to vector<32x1xf32>
    %88 = arith.addf %86, %87 : vector<32x1xf32>
    %89 = math.rsqrt %88 : vector<32x1xf32>
    %90 = vector.broadcast %89 : vector<32x1xf32> to vector<32x32xf32>
    %91 = arith.mulf %81, %90 : vector<32x32xf32>
    %92 = vector.broadcast %73 : vector<1x32xf32> to vector<32x32xf32>
    %93 = arith.mulf %91, %92 : vector<32x32xf32>
    %94 = vector.broadcast %75 : vector<1x32xf32> to vector<32x32xf32>
    %95 = arith.addf %93, %94 : vector<32x32xf32>
    %cst_79 = arith.constant 5.000000e-01 : f32
    %96 = vector.broadcast %cst_79 : f32 to vector<32x32xf32>
    %97 = arith.mulf %95, %96 : vector<32x32xf32>
    %98 = arith.addf %5, %97 : vector<32x32xf32>
    %c0_80 = arith.constant 0 : index
    %c2_81 = arith.constant 2 : index
    %c0_82 = arith.constant 0 : index
    %c0_83 = arith.constant 0 : index
    %99 = vector.load %arg6[%c0_80, %c2_81, %c0_82, %c0_83] : memref<1x8x1x32xf32, #tpu.memory_space<vmem>>, vector<1x1x1x32xf32>
    %100 = vector.shape_cast %99 : vector<1x1x1x32xf32> to vector<1x32xf32>
    %c0_84 = arith.constant 0 : index
    %c2_85 = arith.constant 2 : index
    %c0_86 = arith.constant 0 : index
    %c0_87 = arith.constant 0 : index
    %101 = vector.load %arg7[%c0_84, %c2_85, %c0_86, %c0_87] : memref<1x8x1x32xf32, #tpu.memory_space<vmem>>, vector<1x1x1x32xf32>
    %102 = vector.shape_cast %101 : vector<1x1x1x32xf32> to vector<1x32xf32>
    %cst_88 = arith.constant dense<0.000000e+00> : vector<32xf32>
    %103 = vector.multi_reduction <add>, %98, %cst_88 [1] : vector<32x32xf32> to vector<32xf32>
    %104 = vector.shape_cast %103 : vector<32xf32> to vector<32x1xf32>
    %cst_89 = arith.constant 3.200000e+01 : f32
    %105 = vector.broadcast %cst_89 : f32 to vector<32x1xf32>
    %106 = arith.divf %104, %105 : vector<32x1xf32>
    %107 = vector.broadcast %106 : vector<32x1xf32> to vector<32x32xf32>
    %108 = arith.subf %98, %107 : vector<32x32xf32>
    %109 = arith.mulf %108, %108 : vector<32x32xf32>
    %cst_90 = arith.constant dense<0.000000e+00> : vector<32xf32>
    %110 = vector.multi_reduction <add>, %109, %cst_90 [1] : vector<32x32xf32> to vector<32xf32>
    %111 = vector.shape_cast %110 : vector<32xf32> to vector<32x1xf32>
    %cst_91 = arith.constant 3.200000e+01 : f32
    %112 = vector.broadcast %cst_91 : f32 to vector<32x1xf32>
    %113 = arith.divf %111, %112 : vector<32x1xf32>
    %cst_92 = arith.constant 9.99999974E-6 : f32
    %114 = vector.broadcast %cst_92 : f32 to vector<32x1xf32>
    %115 = arith.addf %113, %114 : vector<32x1xf32>
    %116 = math.rsqrt %115 : vector<32x1xf32>
    %117 = vector.broadcast %116 : vector<32x1xf32> to vector<32x32xf32>
    %118 = arith.mulf %108, %117 : vector<32x32xf32>
    %119 = vector.broadcast %100 : vector<1x32xf32> to vector<32x32xf32>
    %120 = arith.mulf %118, %119 : vector<32x32xf32>
    %121 = vector.broadcast %102 : vector<1x32xf32> to vector<32x32xf32>
    %122 = arith.addf %120, %121 : vector<32x32xf32>
    %123 = vector.broadcast %6 : vector<32x1xf32> to vector<32x32xf32>
    %124 = arith.mulf %122, %123 : vector<32x32xf32>
    %125 = vector.shape_cast %124 : vector<32x32xf32> to vector<2x16x32xf32>
    %c0_93 = arith.constant 0 : index
    %c2_94 = arith.constant 2 : index
    %c0_95 = arith.constant 0 : index
    %126 = vector.load %arg20[%c0_93, %c2_94, %c0_95] : memref<2x20x32xf32, #tpu.memory_space<vmem>>, vector<2x16x32xf32>
    tpu.vector_store %arg20[%c0_93, %c2_94, %c0_95], %125 {strides = array<i32>} : memref<2x20x32xf32, #tpu.memory_space<vmem>>, vector<2x16x32xf32>,
    %cst_96 = arith.constant 0.000000e+00 : f32
    %127 = vector.broadcast %cst_96 : f32 to vector<32x32xf32>
    %c0_97 = arith.constant 0 : index
    %c0_98 = arith.constant 0 : index
    %c0_99 = arith.constant 0 : index
    %128 = vector.load %arg20[%c0_97, %c0_98, %c0_99] : memref<2x20x32xf32, #tpu.memory_space<vmem>>, vector<2x16x32xf32>
    %129 = vector.shape_cast %128 : vector<2x16x32xf32> to vector<32x32xf32>
    %c0_100 = arith.constant 0 : index
    %c5 = arith.constant 5 : index
    %c0_101 = arith.constant 0 : index
    %c0_102 = arith.constant 0 : index
    %130 = vector.load %arg8[%c0_100, %c5, %c0_101, %c0_102] : memref<1x10x32x32xf32, #tpu.memory_space<vmem>>, vector<1x1x32x32xf32>
    %131 = vector.shape_cast %130 : vector<1x1x32x32xf32> to vector<32x32xf32>
    %cst_103 = arith.constant dense<0.000000e+00> : vector<32x32xf32>
    %132 = tpu.matmul %129, %131, %cst_103 {dimension_numbers = #tpu.dot_dimension_numbers<[1], [0], [0], [1], [0, 0, 1, 1], [], []>} : vector<32x32xf32>, vector<32x32xf32>, vector<32x32xf32> -> vector<32x32xf32>
    %133 = arith.addf %127, %132 : vector<32x32xf32>
    %c0_104 = arith.constant 0 : index
    %c1_105 = arith.constant 1 : index
    %c0_106 = arith.constant 0 : index
    %134 = vector.load %arg20[%c0_104, %c1_105, %c0_106] : memref<2x20x32xf32, #tpu.memory_space<vmem>>, vector<2x16x32xf32>
    %135 = vector.shape_cast %134 : vector<2x16x32xf32> to vector<32x32xf32>
    %c0_107 = arith.constant 0 : index
    %c6 = arith.constant 6 : index
    %c0_108 = arith.constant 0 : index
    %c0_109 = arith.constant 0 : index
    %136 = vector.load %arg8[%c0_107, %c6, %c0_108, %c0_109] : memref<1x10x32x32xf32, #tpu.memory_space<vmem>>, vector<1x1x32x32xf32>
    %137 = vector.shape_cast %136 : vector<1x1x32x32xf32> to vector<32x32xf32>
    %cst_110 = arith.constant dense<0.000000e+00> : vector<32x32xf32>
    %138 = tpu.matmul %135, %137, %cst_110 {dimension_numbers = #tpu.dot_dimension_numbers<[1], [0], [0], [1], [0, 0, 1, 1], [], []>} : vector<32x32xf32>, vector<32x32xf32>, vector<32x32xf32> -> vector<32x32xf32>
    %139 = arith.addf %133, %138 : vector<32x32xf32>
    %c0_111 = arith.constant 0 : index
    %c2_112 = arith.constant 2 : index
    %c0_113 = arith.constant 0 : index
    %140 = vector.load %arg20[%c0_111, %c2_112, %c0_113] : memref<2x20x32xf32, #tpu.memory_space<vmem>>, vector<2x16x32xf32>
    %141 = vector.shape_cast %140 : vector<2x16x32xf32> to vector<32x32xf32>
    %c0_114 = arith.constant 0 : index
    %c7 = arith.constant 7 : index
    %c0_115 = arith.constant 0 : index
    %c0_116 = arith.constant 0 : index
    %142 = vector.load %arg8[%c0_114, %c7, %c0_115, %c0_116] : memref<1x10x32x32xf32, #tpu.memory_space<vmem>>, vector<1x1x32x32xf32>
    %143 = vector.shape_cast %142 : vector<1x1x32x32xf32> to vector<32x32xf32>
    %cst_117 = arith.constant dense<0.000000e+00> : vector<32x32xf32>
    %144 = tpu.matmul %141, %143, %cst_117 {dimension_numbers = #tpu.dot_dimension_numbers<[1], [0], [0], [1], [0, 0, 1, 1], [], []>} : vector<32x32xf32>, vector<32x32xf32>, vector<32x32xf32> -> vector<32x32xf32>
    %145 = arith.addf %139, %144 : vector<32x32xf32>
    %c0_118 = arith.constant 0 : index
    %c3_119 = arith.constant 3 : index
    %c0_120 = arith.constant 0 : index
    %146 = vector.load %arg20[%c0_118, %c3_119, %c0_120] : memref<2x20x32xf32, #tpu.memory_space<vmem>>, vector<2x16x32xf32>
    %147 = vector.shape_cast %146 : vector<2x16x32xf32> to vector<32x32xf32>
    %c0_121 = arith.constant 0 : index
    %c8 = arith.constant 8 : index
    %c0_122 = arith.constant 0 : index
    %c0_123 = arith.constant 0 : index
    %148 = vector.load %arg8[%c0_121, %c8, %c0_122, %c0_123] : memref<1x10x32x32xf32, #tpu.memory_space<vmem>>, vector<1x1x32x32xf32>
    %149 = vector.shape_cast %148 : vector<1x1x32x32xf32> to vector<32x32xf32>
    %cst_124 = arith.constant dense<0.000000e+00> : vector<32x32xf32>
    %150 = tpu.matmul %147, %149, %cst_124 {dimension_numbers = #tpu.dot_dimension_numbers<[1], [0], [0], [1], [0, 0, 1, 1], [], []>} : vector<32x32xf32>, vector<32x32xf32>, vector<32x32xf32> -> vector<32x32xf32>
    %151 = arith.addf %145, %150 : vector<32x32xf32>
    %c0_125 = arith.constant 0 : index
    %c4_126 = arith.constant 4 : index
    %c0_127 = arith.constant 0 : index
    %152 = vector.load %arg20[%c0_125, %c4_126, %c0_127] : memref<2x20x32xf32, #tpu.memory_space<vmem>>, vector<2x16x32xf32>
    %153 = vector.shape_cast %152 : vector<2x16x32xf32> to vector<32x32xf32>
    %c0_128 = arith.constant 0 : index
    %c9 = arith.constant 9 : index
    %c0_129 = arith.constant 0 : index
    %c0_130 = arith.constant 0 : index
    %154 = vector.load %arg8[%c0_128, %c9, %c0_129, %c0_130] : memref<1x10x32x32xf32, #tpu.memory_space<vmem>>, vector<1x1x32x32xf32>
    %155 = vector.shape_cast %154 : vector<1x1x32x32xf32> to vector<32x32xf32>
    %cst_131 = arith.constant dense<0.000000e+00> : vector<32x32xf32>
    %156 = tpu.matmul %153, %155, %cst_131 {dimension_numbers = #tpu.dot_dimension_numbers<[1], [0], [0], [1], [0, 0, 1, 1], [], []>} : vector<32x32xf32>, vector<32x32xf32>, vector<32x32xf32> -> vector<32x32xf32>
    %157 = arith.addf %151, %156 : vector<32x32xf32>
    %c0_132 = arith.constant 0 : index
    %c1_133 = arith.constant 1 : index
    %c0_134 = arith.constant 0 : index
    %c0_135 = arith.constant 0 : index
    %158 = vector.load %arg9[%c0_132, %c1_133, %c0_134, %c0_135] : memref<1x2x1x32xf32, #tpu.memory_space<vmem>>, vector<1x1x1x32xf32>
    %159 = vector.shape_cast %158 : vector<1x1x1x32xf32> to vector<1x32xf32>
    %160 = vector.broadcast %159 : vector<1x32xf32> to vector<32x32xf32>
    %161 = arith.addf %157, %160 : vector<32x32xf32>
    %c0_136 = arith.constant 0 : index
    %c3_137 = arith.constant 3 : index
    %c0_138 = arith.constant 0 : index
    %c0_139 = arith.constant 0 : index
    %162 = vector.load %arg6[%c0_136, %c3_137, %c0_138, %c0_139] : memref<1x8x1x32xf32, #tpu.memory_space<vmem>>, vector<1x1x1x32xf32>
    %163 = vector.shape_cast %162 : vector<1x1x1x32xf32> to vector<1x32xf32>
    %c0_140 = arith.constant 0 : index
    %c3_141 = arith.constant 3 : index
    %c0_142 = arith.constant 0 : index
    %c0_143 = arith.constant 0 : index
    %164 = vector.load %arg7[%c0_140, %c3_141, %c0_142, %c0_143] : memref<1x8x1x32xf32, #tpu.memory_space<vmem>>, vector<1x1x1x32xf32>
    %165 = vector.shape_cast %164 : vector<1x1x1x32xf32> to vector<1x32xf32>
    %cst_144 = arith.constant dense<0.000000e+00> : vector<32xf32>
    %166 = vector.multi_reduction <add>, %161, %cst_144 [1] : vector<32x32xf32> to vector<32xf32>
    %167 = vector.shape_cast %166 : vector<32xf32> to vector<32x1xf32>
    %cst_145 = arith.constant 3.200000e+01 : f32
    %168 = vector.broadcast %cst_145 : f32 to vector<32x1xf32>
    %169 = arith.divf %167, %168 : vector<32x1xf32>
    %170 = vector.broadcast %169 : vector<32x1xf32> to vector<32x32xf32>
    %171 = arith.subf %161, %170 : vector<32x32xf32>
    %172 = arith.mulf %171, %171 : vector<32x32xf32>
    %cst_146 = arith.constant dense<0.000000e+00> : vector<32xf32>
    %173 = vector.multi_reduction <add>, %172, %cst_146 [1] : vector<32x32xf32> to vector<32xf32>
    %174 = vector.shape_cast %173 : vector<32xf32> to vector<32x1xf32>
    %cst_147 = arith.constant 3.200000e+01 : f32
    %175 = vector.broadcast %cst_147 : f32 to vector<32x1xf32>
    %176 = arith.divf %174, %175 : vector<32x1xf32>
    %cst_148 = arith.constant 9.99999974E-6 : f32
    %177 = vector.broadcast %cst_148 : f32 to vector<32x1xf32>
    %178 = arith.addf %176, %177 : vector<32x1xf32>
    %179 = math.rsqrt %178 : vector<32x1xf32>
    %180 = vector.broadcast %179 : vector<32x1xf32> to vector<32x32xf32>
    %181 = arith.mulf %171, %180 : vector<32x32xf32>
    %182 = vector.broadcast %163 : vector<1x32xf32> to vector<32x32xf32>
    %183 = arith.mulf %181, %182 : vector<32x32xf32>
    %184 = vector.broadcast %165 : vector<1x32xf32> to vector<32x32xf32>
    %185 = arith.addf %183, %184 : vector<32x32xf32>
    %cst_149 = arith.constant 5.000000e-01 : f32
    %186 = vector.broadcast %cst_149 : f32 to vector<32x32xf32>
    %187 = arith.mulf %185, %186 : vector<32x32xf32>
    %188 = arith.addf %98, %187 : vector<32x32xf32>
    %c0_150 = arith.constant 0 : index
    %c4_151 = arith.constant 4 : index
    %c0_152 = arith.constant 0 : index
    %c0_153 = arith.constant 0 : index
    %189 = vector.load %arg6[%c0_150, %c4_151, %c0_152, %c0_153] : memref<1x8x1x32xf32, #tpu.memory_space<vmem>>, vector<1x1x1x32xf32>
    %190 = vector.shape_cast %189 : vector<1x1x1x32xf32> to vector<1x32xf32>
    %c0_154 = arith.constant 0 : index
    %c4_155 = arith.constant 4 : index
    %c0_156 = arith.constant 0 : index
    %c0_157 = arith.constant 0 : index
    %191 = vector.load %arg7[%c0_154, %c4_155, %c0_156, %c0_157] : memref<1x8x1x32xf32, #tpu.memory_space<vmem>>, vector<1x1x1x32xf32>
    %192 = vector.shape_cast %191 : vector<1x1x1x32xf32> to vector<1x32xf32>
    %cst_158 = arith.constant dense<0.000000e+00> : vector<32xf32>
    %193 = vector.multi_reduction <add>, %188, %cst_158 [1] : vector<32x32xf32> to vector<32xf32>
    %194 = vector.shape_cast %193 : vector<32xf32> to vector<32x1xf32>
    %cst_159 = arith.constant 3.200000e+01 : f32
    %195 = vector.broadcast %cst_159 : f32 to vector<32x1xf32>
    %196 = arith.divf %194, %195 : vector<32x1xf32>
    %197 = vector.broadcast %196 : vector<32x1xf32> to vector<32x32xf32>
    %198 = arith.subf %188, %197 : vector<32x32xf32>
    %199 = arith.mulf %198, %198 : vector<32x32xf32>
    %cst_160 = arith.constant dense<0.000000e+00> : vector<32xf32>
    %200 = vector.multi_reduction <add>, %199, %cst_160 [1] : vector<32x32xf32> to vector<32xf32>
    %201 = vector.shape_cast %200 : vector<32xf32> to vector<32x1xf32>
    %cst_161 = arith.constant 3.200000e+01 : f32
    %202 = vector.broadcast %cst_161 : f32 to vector<32x1xf32>
    %203 = arith.divf %201, %202 : vector<32x1xf32>
    %cst_162 = arith.constant 9.99999974E-6 : f32
    %204 = vector.broadcast %cst_162 : f32 to vector<32x1xf32>
    %205 = arith.addf %203, %204 : vector<32x1xf32>
    %206 = math.rsqrt %205 : vector<32x1xf32>
    %207 = vector.broadcast %206 : vector<32x1xf32> to vector<32x32xf32>
    %208 = arith.mulf %198, %207 : vector<32x32xf32>
    %209 = vector.broadcast %190 : vector<1x32xf32> to vector<32x32xf32>
    %210 = arith.mulf %208, %209 : vector<32x32xf32>
    %211 = vector.broadcast %192 : vector<1x32xf32> to vector<32x32xf32>
    %212 = arith.addf %210, %211 : vector<32x32xf32>
    %c0_163 = arith.constant 0 : index
    %c0_164 = arith.constant 0 : index
    %c0_165 = arith.constant 0 : index
    %213 = vector.load %arg10[%c0_163, %c0_164, %c0_165] : memref<1x32x96xf32, #tpu.memory_space<vmem>>, vector<1x32x96xf32>
    %214 = vector.shape_cast %213 : vector<1x32x96xf32> to vector<32x96xf32>
    %cst_166 = arith.constant dense<0.000000e+00> : vector<32x96xf32>
    %215 = tpu.matmul %212, %214, %cst_166 {dimension_numbers = #tpu.dot_dimension_numbers<[1], [0], [0], [1], [0, 0, 1, 1], [], []>} : vector<32x32xf32>, vector<32x96xf32>, vector<32x96xf32> -> vector<32x96xf32>
    %c0_167 = arith.constant 0 : index
    %c0_168 = arith.constant 0 : index
    %c0_169 = arith.constant 0 : index
    %216 = vector.load %arg11[%c0_167, %c0_168, %c0_169] : memref<1x1x96xf32, #tpu.memory_space<vmem>>, vector<1x1x96xf32>
    %217 = vector.shape_cast %216 : vector<1x1x96xf32> to vector<1x96xf32>
    %218 = vector.broadcast %217 : vector<1x96xf32> to vector<32x96xf32>
    %219 = arith.addf %215, %218 : vector<32x96xf32>
    %220 = vector.extract_strided_slice %219 {offsets = [0, 0], sizes = [32, 32], strides = [1, 1]} : vector<32x96xf32> to vector<32x32xf32>
    %cst_170 = arith.constant 0.353553385 : f32
    %221 = vector.broadcast %cst_170 : f32 to vector<32x32xf32>
    %222 = arith.mulf %220, %221 : vector<32x32xf32>
    %223 = vector.shape_cast %222 : vector<32x32xf32> to vector<2x16x32xf32>
    %224 = vector.extract_strided_slice %219 {offsets = [0, 32], sizes = [32, 32], strides = [1, 1]} : vector<32x96xf32> to vector<32x32xf32>
    %225 = vector.shape_cast %224 : vector<32x32xf32> to vector<2x16x32xf32>
    %226 = vector.extract_strided_slice %219 {offsets = [0, 64], sizes = [32, 32], strides = [1, 1]} : vector<32x96xf32> to vector<32x32xf32>
    %227 = vector.shape_cast %226 : vector<32x32xf32> to vector<2x16x32xf32>
    %c0_171 = arith.constant 0 : index
    %c0_172 = arith.constant 0 : index
    %c0_173 = arith.constant 0 : index
    %228 = vector.load %arg4[%c0_171, %c0_172, %c0_173] : memref<2x1x16xf32, #tpu.memory_space<vmem>>, vector<2x1x16xf32>
    %229 = vector.shape_cast %228 : vector<2x1x16xf32> to vector<2x1x16xf32>
    %230 = vector.broadcast %229 : vector<2x1x16xf32> to vector<2x16x16xf32>
    %c0_174 = arith.constant 0 : index
    %c0_175 = arith.constant 0 : index
    %c0_176 = arith.constant 0 : index
    %231 = vector.load %arg5[%c0_174, %c0_175, %c0_176] : memref<2x1x16xf32, #tpu.memory_space<vmem>>, vector<2x1x16xf32>
    %232 = vector.shape_cast %231 : vector<2x1x16xf32> to vector<2x1x16xf32>
    %233 = vector.broadcast %232 : vector<2x1x16xf32> to vector<2x16x16xf32>
    %234 = vector.extract_strided_slice %223 {offsets = [0, 0, 0], sizes = [2, 16, 8], strides = [1, 1, 1]} : vector<2x16x32xf32> to vector<2x16x8xf32>
    %235 = vector.extract_strided_slice %225 {offsets = [0, 0, 0], sizes = [2, 16, 8], strides = [1, 1, 1]} : vector<2x16x32xf32> to vector<2x16x8xf32>
    %236 = vector.extract_strided_slice %227 {offsets = [0, 0, 0], sizes = [2, 16, 8], strides = [1, 1, 1]} : vector<2x16x32xf32> to vector<2x16x8xf32>
    %cst_177 = arith.constant dense<0.000000e+00> : vector<2x16x16xf32>
    %237 = tpu.matmul %234, %235, %cst_177 {dimension_numbers = #tpu.dot_dimension_numbers<[2], [2], [1], [1], [0, 0, 0, 1, 1, 1], [0], [0]>} : vector<2x16x8xf32>, vector<2x16x8xf32>, vector<2x16x16xf32> -> vector<2x16x16xf32>
    %238 = arith.mulf %237, %230 : vector<2x16x16xf32>
    %239 = arith.addf %238, %233 : vector<2x16x16xf32>
    %cst_178 = arith.constant dense<0xFF800000> : vector<2x16xf32>
    %240 = vector.multi_reduction <maximumf>, %239, %cst_178 [2] : vector<2x16x16xf32> to vector<2x16xf32>
    %241 = vector.shape_cast %240 : vector<2x16xf32> to vector<2x16x1xf32>
    %242 = vector.broadcast %241 : vector<2x16x1xf32> to vector<2x16x16xf32>
    %243 = arith.subf %239, %242 : vector<2x16x16xf32>
    %244 = math.exp %243 : vector<2x16x16xf32>
    %cst_179 = arith.constant dense<0.000000e+00> : vector<2x16xf32>
    %245 = vector.multi_reduction <add>, %244, %cst_179 [2] : vector<2x16x16xf32> to vector<2x16xf32>
    %246 = vector.shape_cast %245 : vector<2x16xf32> to vector<2x16x1xf32>
    %247 = tpu.reciprocal %246 {approx = true} : vector<2x16x1xf32> -> vector<2x16x1xf32>
    %248 = arith.mulf %246, %247 : vector<2x16x1xf32>
    %cst_180 = arith.constant 2.000000e+00 : f32
    %249 = vector.broadcast %cst_180 : f32 to vector<2x16x1xf32>
    %250 = arith.subf %249, %248 : vector<2x16x1xf32>
    %251 = arith.mulf %247, %250 : vector<2x16x1xf32>
    %252 = vector.broadcast %251 : vector<2x16x1xf32> to vector<2x16x16xf32>
    %253 = arith.mulf %244, %252 : vector<2x16x16xf32>
    %cst_181 = arith.constant dense<0.000000e+00> : vector<2x16x8xf32>
    %254 = tpu.matmul %253, %236, %cst_181 {dimension_numbers = #tpu.dot_dimension_numbers<[2], [1], [1], [2], [0, 0, 0, 1, 1, 2], [0], [0]>} : vector<2x16x16xf32>, vector<2x16x8xf32>, vector<2x16x8xf32> -> vector<2x16x8xf32>
    %c0_182 = arith.constant 0 : index
    %c0_183 = arith.constant 0 : index
    %c0_184 = arith.constant 0 : index
    %255 = vector.load %arg19[%c0_182, %c0_183, %c0_184] : memref<2x16x32xf32, #tpu.memory_space<vmem>>, vector<2x16x8xf32>
    tpu.vector_store %arg19[%c0_182, %c0_183, %c0_184], %254 {strides = array<i32>} : memref<2x16x32xf32, #tpu.memory_space<vmem>>, vector<2x16x8xf32>,
    %256 = vector.extract_strided_slice %223 {offsets = [0, 0, 8], sizes = [2, 16, 8], strides = [1, 1, 1]} : vector<2x16x32xf32> to vector<2x16x8xf32>
    %257 = vector.extract_strided_slice %225 {offsets = [0, 0, 8], sizes = [2, 16, 8], strides = [1, 1, 1]} : vector<2x16x32xf32> to vector<2x16x8xf32>
    %258 = vector.extract_strided_slice %227 {offsets = [0, 0, 8], sizes = [2, 16, 8], strides = [1, 1, 1]} : vector<2x16x32xf32> to vector<2x16x8xf32>
    %cst_185 = arith.constant dense<0.000000e+00> : vector<2x16x16xf32>
    %259 = tpu.matmul %256, %257, %cst_185 {dimension_numbers = #tpu.dot_dimension_numbers<[2], [2], [1], [1], [0, 0, 0, 1, 1, 1], [0], [0]>} : vector<2x16x8xf32>, vector<2x16x8xf32>, vector<2x16x16xf32> -> vector<2x16x16xf32>
    %260 = arith.mulf %259, %230 : vector<2x16x16xf32>
    %261 = arith.addf %260, %233 : vector<2x16x16xf32>
    %cst_186 = arith.constant dense<0xFF800000> : vector<2x16xf32>
    %262 = vector.multi_reduction <maximumf>, %261, %cst_186 [2] : vector<2x16x16xf32> to vector<2x16xf32>
    %263 = vector.shape_cast %262 : vector<2x16xf32> to vector<2x16x1xf32>
    %264 = vector.broadcast %263 : vector<2x16x1xf32> to vector<2x16x16xf32>
    %265 = arith.subf %261, %264 : vector<2x16x16xf32>
    %266 = math.exp %265 : vector<2x16x16xf32>
    %cst_187 = arith.constant dense<0.000000e+00> : vector<2x16xf32>
    %267 = vector.multi_reduction <add>, %266, %cst_187 [2] : vector<2x16x16xf32> to vector<2x16xf32>
    %268 = vector.shape_cast %267 : vector<2x16xf32> to vector<2x16x1xf32>
    %269 = tpu.reciprocal %268 {approx = true} : vector<2x16x1xf32> -> vector<2x16x1xf32>
    %270 = arith.mulf %268, %269 : vector<2x16x1xf32>
    %cst_188 = arith.constant 2.000000e+00 : f32
    %271 = vector.broadcast %cst_188 : f32 to vector<2x16x1xf32>
    %272 = arith.subf %271, %270 : vector<2x16x1xf32>
    %273 = arith.mulf %269, %272 : vector<2x16x1xf32>
    %274 = vector.broadcast %273 : vector<2x16x1xf32> to vector<2x16x16xf32>
    %275 = arith.mulf %266, %274 : vector<2x16x16xf32>
    %cst_189 = arith.constant dense<0.000000e+00> : vector<2x16x8xf32>
    %276 = tpu.matmul %275, %258, %cst_189 {dimension_numbers = #tpu.dot_dimension_numbers<[2], [1], [1], [2], [0, 0, 0, 1, 1, 2], [0], [0]>} : vector<2x16x16xf32>, vector<2x16x8xf32>, vector<2x16x8xf32> -> vector<2x16x8xf32>
    %c0_190 = arith.constant 0 : index
    %c0_191 = arith.constant 0 : index
    %c8_192 = arith.constant 8 : index
    %277 = vector.load %arg19[%c0_190, %c0_191, %c8_192] : memref<2x16x32xf32, #tpu.memory_space<vmem>>, vector<2x16x8xf32>
    tpu.vector_store %arg19[%c0_190, %c0_191, %c8_192], %276 {strides = array<i32>} : memref<2x16x32xf32, #tpu.memory_space<vmem>>, vector<2x16x8xf32>,
    %278 = vector.extract_strided_slice %223 {offsets = [0, 0, 16], sizes = [2, 16, 8], strides = [1, 1, 1]} : vector<2x16x32xf32> to vector<2x16x8xf32>
    %279 = vector.extract_strided_slice %225 {offsets = [0, 0, 16], sizes = [2, 16, 8], strides = [1, 1, 1]} : vector<2x16x32xf32> to vector<2x16x8xf32>
    %280 = vector.extract_strided_slice %227 {offsets = [0, 0, 16], sizes = [2, 16, 8], strides = [1, 1, 1]} : vector<2x16x32xf32> to vector<2x16x8xf32>
    %cst_193 = arith.constant dense<0.000000e+00> : vector<2x16x16xf32>
    %281 = tpu.matmul %278, %279, %cst_193 {dimension_numbers = #tpu.dot_dimension_numbers<[2], [2], [1], [1], [0, 0, 0, 1, 1, 1], [0], [0]>} : vector<2x16x8xf32>, vector<2x16x8xf32>, vector<2x16x16xf32> -> vector<2x16x16xf32>
    %282 = arith.mulf %281, %230 : vector<2x16x16xf32>
    %283 = arith.addf %282, %233 : vector<2x16x16xf32>
    %cst_194 = arith.constant dense<0xFF800000> : vector<2x16xf32>
    %284 = vector.multi_reduction <maximumf>, %283, %cst_194 [2] : vector<2x16x16xf32> to vector<2x16xf32>
    %285 = vector.shape_cast %284 : vector<2x16xf32> to vector<2x16x1xf32>
    %286 = vector.broadcast %285 : vector<2x16x1xf32> to vector<2x16x16xf32>
    %287 = arith.subf %283, %286 : vector<2x16x16xf32>
    %288 = math.exp %287 : vector<2x16x16xf32>
    %cst_195 = arith.constant dense<0.000000e+00> : vector<2x16xf32>
    %289 = vector.multi_reduction <add>, %288, %cst_195 [2] : vector<2x16x16xf32> to vector<2x16xf32>
    %290 = vector.shape_cast %289 : vector<2x16xf32> to vector<2x16x1xf32>
    %291 = tpu.reciprocal %290 {approx = true} : vector<2x16x1xf32> -> vector<2x16x1xf32>
    %292 = arith.mulf %290, %291 : vector<2x16x1xf32>
    %cst_196 = arith.constant 2.000000e+00 : f32
    %293 = vector.broadcast %cst_196 : f32 to vector<2x16x1xf32>
    %294 = arith.subf %293, %292 : vector<2x16x1xf32>
    %295 = arith.mulf %291, %294 : vector<2x16x1xf32>
    %296 = vector.broadcast %295 : vector<2x16x1xf32> to vector<2x16x16xf32>
    %297 = arith.mulf %288, %296 : vector<2x16x16xf32>
    %cst_197 = arith.constant dense<0.000000e+00> : vector<2x16x8xf32>
    %298 = tpu.matmul %297, %280, %cst_197 {dimension_numbers = #tpu.dot_dimension_numbers<[2], [1], [1], [2], [0, 0, 0, 1, 1, 2], [0], [0]>} : vector<2x16x16xf32>, vector<2x16x8xf32>, vector<2x16x8xf32> -> vector<2x16x8xf32>
    %c0_198 = arith.constant 0 : index
    %c0_199 = arith.constant 0 : index
    %c16 = arith.constant 16 : index
    %299 = vector.load %arg19[%c0_198, %c0_199, %c16] : memref<2x16x32xf32, #tpu.memory_space<vmem>>, vector<2x16x8xf32>
    tpu.vector_store %arg19[%c0_198, %c0_199, %c16], %298 {strides = array<i32>} : memref<2x16x32xf32, #tpu.memory_space<vmem>>, vector<2x16x8xf32>,
    %300 = vector.extract_strided_slice %223 {offsets = [0, 0, 24], sizes = [2, 16, 8], strides = [1, 1, 1]} : vector<2x16x32xf32> to vector<2x16x8xf32>
    %301 = vector.extract_strided_slice %225 {offsets = [0, 0, 24], sizes = [2, 16, 8], strides = [1, 1, 1]} : vector<2x16x32xf32> to vector<2x16x8xf32>
    %302 = vector.extract_strided_slice %227 {offsets = [0, 0, 24], sizes = [2, 16, 8], strides = [1, 1, 1]} : vector<2x16x32xf32> to vector<2x16x8xf32>
    %cst_200 = arith.constant dense<0.000000e+00> : vector<2x16x16xf32>
    %303 = tpu.matmul %300, %301, %cst_200 {dimension_numbers = #tpu.dot_dimension_numbers<[2], [2], [1], [1], [0, 0, 0, 1, 1, 1], [0], [0]>} : vector<2x16x8xf32>, vector<2x16x8xf32>, vector<2x16x16xf32> -> vector<2x16x16xf32>
    %304 = arith.mulf %303, %230 : vector<2x16x16xf32>
    %305 = arith.addf %304, %233 : vector<2x16x16xf32>
    %cst_201 = arith.constant dense<0xFF800000> : vector<2x16xf32>
    %306 = vector.multi_reduction <maximumf>, %305, %cst_201 [2] : vector<2x16x16xf32> to vector<2x16xf32>
    %307 = vector.shape_cast %306 : vector<2x16xf32> to vector<2x16x1xf32>
    %308 = vector.broadcast %307 : vector<2x16x1xf32> to vector<2x16x16xf32>
    %309 = arith.subf %305, %308 : vector<2x16x16xf32>
    %310 = math.exp %309 : vector<2x16x16xf32>
    %cst_202 = arith.constant dense<0.000000e+00> : vector<2x16xf32>
    %311 = vector.multi_reduction <add>, %310, %cst_202 [2] : vector<2x16x16xf32> to vector<2x16xf32>
    %312 = vector.shape_cast %311 : vector<2x16xf32> to vector<2x16x1xf32>
    %313 = tpu.reciprocal %312 {approx = true} : vector<2x16x1xf32> -> vector<2x16x1xf32>
    %314 = arith.mulf %312, %313 : vector<2x16x1xf32>
    %cst_203 = arith.constant 2.000000e+00 : f32
    %315 = vector.broadcast %cst_203 : f32 to vector<2x16x1xf32>
    %316 = arith.subf %315, %314 : vector<2x16x1xf32>
    %317 = arith.mulf %313, %316 : vector<2x16x1xf32>
    %318 = vector.broadcast %317 : vector<2x16x1xf32> to vector<2x16x16xf32>
    %319 = arith.mulf %310, %318 : vector<2x16x16xf32>
    %cst_204 = arith.constant dense<0.000000e+00> : vector<2x16x8xf32>
    %320 = tpu.matmul %319, %302, %cst_204 {dimension_numbers = #tpu.dot_dimension_numbers<[2], [1], [1], [2], [0, 0, 0, 1, 1, 2], [0], [0]>} : vector<2x16x16xf32>, vector<2x16x8xf32>, vector<2x16x8xf32> -> vector<2x16x8xf32>
    %c0_205 = arith.constant 0 : index
    %c0_206 = arith.constant 0 : index
    %c24 = arith.constant 24 : index
    %321 = vector.load %arg19[%c0_205, %c0_206, %c24] : memref<2x16x32xf32, #tpu.memory_space<vmem>>, vector<2x16x8xf32>
    tpu.vector_store %arg19[%c0_205, %c0_206, %c24], %320 {strides = array<i32>} : memref<2x16x32xf32, #tpu.memory_space<vmem>>, vector<2x16x8xf32>,
    %c0_207 = arith.constant 0 : index
    %c0_208 = arith.constant 0 : index
    %c0_209 = arith.constant 0 : index
    %322 = vector.load %arg19[%c0_207, %c0_208, %c0_209] : memref<2x16x32xf32, #tpu.memory_space<vmem>>, vector<2x16x32xf32>
    %323 = vector.shape_cast %322 : vector<2x16x32xf32> to vector<32x32xf32>
    %c0_210 = arith.constant 0 : index
    %c0_211 = arith.constant 0 : index
    %c0_212 = arith.constant 0 : index
    %324 = vector.load %arg12[%c0_210, %c0_211, %c0_212] : memref<1x32x32xf32, #tpu.memory_space<vmem>>, vector<1x32x32xf32>
    %325 = vector.shape_cast %324 : vector<1x32x32xf32> to vector<32x32xf32>
    %cst_213 = arith.constant dense<0.000000e+00> : vector<32x32xf32>
    %326 = tpu.matmul %323, %325, %cst_213 {dimension_numbers = #tpu.dot_dimension_numbers<[1], [0], [0], [1], [0, 0, 1, 1], [], []>} : vector<32x32xf32>, vector<32x32xf32>, vector<32x32xf32> -> vector<32x32xf32>
    %c0_214 = arith.constant 0 : index
    %c0_215 = arith.constant 0 : index
    %c0_216 = arith.constant 0 : index
    %327 = vector.load %arg13[%c0_214, %c0_215, %c0_216] : memref<1x1x32xf32, #tpu.memory_space<vmem>>, vector<1x1x32xf32>
    %328 = vector.shape_cast %327 : vector<1x1x32xf32> to vector<1x32xf32>
    %329 = vector.broadcast %328 : vector<1x32xf32> to vector<32x32xf32>
    %330 = arith.addf %326, %329 : vector<32x32xf32>
    %c0_217 = arith.constant 0 : index
    %c5_218 = arith.constant 5 : index
    %c0_219 = arith.constant 0 : index
    %c0_220 = arith.constant 0 : index
    %331 = vector.load %arg6[%c0_217, %c5_218, %c0_219, %c0_220] : memref<1x8x1x32xf32, #tpu.memory_space<vmem>>, vector<1x1x1x32xf32>
    %332 = vector.shape_cast %331 : vector<1x1x1x32xf32> to vector<1x32xf32>
    %c0_221 = arith.constant 0 : index
    %c5_222 = arith.constant 5 : index
    %c0_223 = arith.constant 0 : index
    %c0_224 = arith.constant 0 : index
    %333 = vector.load %arg7[%c0_221, %c5_222, %c0_223, %c0_224] : memref<1x8x1x32xf32, #tpu.memory_space<vmem>>, vector<1x1x1x32xf32>
    %334 = vector.shape_cast %333 : vector<1x1x1x32xf32> to vector<1x32xf32>
    %cst_225 = arith.constant dense<0.000000e+00> : vector<32xf32>
    %335 = vector.multi_reduction <add>, %330, %cst_225 [1] : vector<32x32xf32> to vector<32xf32>
    %336 = vector.shape_cast %335 : vector<32xf32> to vector<32x1xf32>
    %cst_226 = arith.constant 3.200000e+01 : f32
    %337 = vector.broadcast %cst_226 : f32 to vector<32x1xf32>
    %338 = arith.divf %336, %337 : vector<32x1xf32>
    %339 = vector.broadcast %338 : vector<32x1xf32> to vector<32x32xf32>
    %340 = arith.subf %330, %339 : vector<32x32xf32>
    %341 = arith.mulf %340, %340 : vector<32x32xf32>
    %cst_227 = arith.constant dense<0.000000e+00> : vector<32xf32>
    %342 = vector.multi_reduction <add>, %341, %cst_227 [1] : vector<32x32xf32> to vector<32xf32>
    %343 = vector.shape_cast %342 : vector<32xf32> to vector<32x1xf32>
    %cst_228 = arith.constant 3.200000e+01 : f32
    %344 = vector.broadcast %cst_228 : f32 to vector<32x1xf32>
    %345 = arith.divf %343, %344 : vector<32x1xf32>
    %cst_229 = arith.constant 9.99999974E-6 : f32
    %346 = vector.broadcast %cst_229 : f32 to vector<32x1xf32>
    %347 = arith.addf %345, %346 : vector<32x1xf32>
    %348 = math.rsqrt %347 : vector<32x1xf32>
    %349 = vector.broadcast %348 : vector<32x1xf32> to vector<32x32xf32>
    %350 = arith.mulf %340, %349 : vector<32x32xf32>
    %351 = vector.broadcast %332 : vector<1x32xf32> to vector<32x32xf32>
    %352 = arith.mulf %350, %351 : vector<32x32xf32>
    %353 = vector.broadcast %334 : vector<1x32xf32> to vector<32x32xf32>
    %354 = arith.addf %352, %353 : vector<32x32xf32>
    %cst_230 = arith.constant 5.000000e-01 : f32
    %355 = vector.broadcast %cst_230 : f32 to vector<32x32xf32>
    %356 = arith.mulf %354, %355 : vector<32x32xf32>
    %357 = arith.addf %188, %356 : vector<32x32xf32>
    %c0_231 = arith.constant 0 : index
    %c6_232 = arith.constant 6 : index
    %c0_233 = arith.constant 0 : index
    %c0_234 = arith.constant 0 : index
    %358 = vector.load %arg6[%c0_231, %c6_232, %c0_233, %c0_234] : memref<1x8x1x32xf32, #tpu.memory_space<vmem>>, vector<1x1x1x32xf32>
    %359 = vector.shape_cast %358 : vector<1x1x1x32xf32> to vector<1x32xf32>
    %c0_235 = arith.constant 0 : index
    %c6_236 = arith.constant 6 : index
    %c0_237 = arith.constant 0 : index
    %c0_238 = arith.constant 0 : index
    %360 = vector.load %arg7[%c0_235, %c6_236, %c0_237, %c0_238] : memref<1x8x1x32xf32, #tpu.memory_space<vmem>>, vector<1x1x1x32xf32>
    %361 = vector.shape_cast %360 : vector<1x1x1x32xf32> to vector<1x32xf32>
    %cst_239 = arith.constant dense<0.000000e+00> : vector<32xf32>
    %362 = vector.multi_reduction <add>, %357, %cst_239 [1] : vector<32x32xf32> to vector<32xf32>
    %363 = vector.shape_cast %362 : vector<32xf32> to vector<32x1xf32>
    %cst_240 = arith.constant 3.200000e+01 : f32
    %364 = vector.broadcast %cst_240 : f32 to vector<32x1xf32>
    %365 = arith.divf %363, %364 : vector<32x1xf32>
    %366 = vector.broadcast %365 : vector<32x1xf32> to vector<32x32xf32>
    %367 = arith.subf %357, %366 : vector<32x32xf32>
    %368 = arith.mulf %367, %367 : vector<32x32xf32>
    %cst_241 = arith.constant dense<0.000000e+00> : vector<32xf32>
    %369 = vector.multi_reduction <add>, %368, %cst_241 [1] : vector<32x32xf32> to vector<32xf32>
    %370 = vector.shape_cast %369 : vector<32xf32> to vector<32x1xf32>
    %cst_242 = arith.constant 3.200000e+01 : f32
    %371 = vector.broadcast %cst_242 : f32 to vector<32x1xf32>
    %372 = arith.divf %370, %371 : vector<32x1xf32>
    %cst_243 = arith.constant 9.99999974E-6 : f32
    %373 = vector.broadcast %cst_243 : f32 to vector<32x1xf32>
    %374 = arith.addf %372, %373 : vector<32x1xf32>
    %375 = math.rsqrt %374 : vector<32x1xf32>
    %376 = vector.broadcast %375 : vector<32x1xf32> to vector<32x32xf32>
    %377 = arith.mulf %367, %376 : vector<32x32xf32>
    %378 = vector.broadcast %359 : vector<1x32xf32> to vector<32x32xf32>
    %379 = arith.mulf %377, %378 : vector<32x32xf32>
    %380 = vector.broadcast %361 : vector<1x32xf32> to vector<32x32xf32>
    %381 = arith.addf %379, %380 : vector<32x32xf32>
    %c0_244 = arith.constant 0 : index
    %c0_245 = arith.constant 0 : index
    %c0_246 = arith.constant 0 : index
    %382 = vector.load %arg14[%c0_244, %c0_245, %c0_246] : memref<1x32x32xf32, #tpu.memory_space<vmem>>, vector<1x32x32xf32>
    %383 = vector.shape_cast %382 : vector<1x32x32xf32> to vector<32x32xf32>
    %cst_247 = arith.constant dense<0.000000e+00> : vector<32x32xf32>
    %384 = tpu.matmul %381, %383, %cst_247 {dimension_numbers = #tpu.dot_dimension_numbers<[1], [0], [0], [1], [0, 0, 1, 1], [], []>} : vector<32x32xf32>, vector<32x32xf32>, vector<32x32xf32> -> vector<32x32xf32>
    %c0_248 = arith.constant 0 : index
    %c0_249 = arith.constant 0 : index
    %c0_250 = arith.constant 0 : index
    %385 = vector.load %arg15[%c0_248, %c0_249, %c0_250] : memref<1x1x32xf32, #tpu.memory_space<vmem>>, vector<1x1x32xf32>
    %386 = vector.shape_cast %385 : vector<1x1x32xf32> to vector<1x32xf32>
    %387 = vector.broadcast %386 : vector<1x32xf32> to vector<32x32xf32>
    %388 = arith.addf %384, %387 : vector<32x32xf32>
    %cst_251 = arith.constant 5.000000e-01 : f32
    %389 = vector.broadcast %cst_251 : f32 to vector<32x32xf32>
    %390 = arith.mulf %389, %388 : vector<32x32xf32>
    %cst_252 = arith.constant 4.471500e-02 : f32
    %391 = vector.broadcast %cst_252 : f32 to vector<32x32xf32>
    %392 = arith.mulf %391, %388 : vector<32x32xf32>
    %393 = arith.mulf %392, %388 : vector<32x32xf32>
    %394 = arith.mulf %393, %388 : vector<32x32xf32>
    %395 = arith.addf %388, %394 : vector<32x32xf32>
    %cst_253 = arith.constant 0.797884583 : f32
    %396 = vector.broadcast %cst_253 : f32 to vector<32x32xf32>
    %397 = arith.mulf %396, %395 : vector<32x32xf32>
    %398 = math.tanh %397 : vector<32x32xf32>
    %cst_254 = arith.constant 1.000000e+00 : f32
    %399 = vector.broadcast %cst_254 : f32 to vector<32x32xf32>
    %400 = arith.addf %399, %398 : vector<32x32xf32>
    %401 = arith.mulf %390, %400 : vector<32x32xf32>
    %c0_255 = arith.constant 0 : index
    %c0_256 = arith.constant 0 : index
    %c0_257 = arith.constant 0 : index
    %402 = vector.load %arg16[%c0_255, %c0_256, %c0_257] : memref<1x32x32xf32, #tpu.memory_space<vmem>>, vector<1x32x32xf32>
    %403 = vector.shape_cast %402 : vector<1x32x32xf32> to vector<32x32xf32>
    %cst_258 = arith.constant dense<0.000000e+00> : vector<32x32xf32>
    %404 = tpu.matmul %401, %403, %cst_258 {dimension_numbers = #tpu.dot_dimension_numbers<[1], [0], [0], [1], [0, 0, 1, 1], [], []>} : vector<32x32xf32>, vector<32x32xf32>, vector<32x32xf32> -> vector<32x32xf32>
    %c0_259 = arith.constant 0 : index
    %c0_260 = arith.constant 0 : index
    %c0_261 = arith.constant 0 : index
    %405 = vector.load %arg17[%c0_259, %c0_260, %c0_261] : memref<1x1x32xf32, #tpu.memory_space<vmem>>, vector<1x1x32xf32>
    %406 = vector.shape_cast %405 : vector<1x1x32xf32> to vector<1x32xf32>
    %407 = vector.broadcast %406 : vector<1x32xf32> to vector<32x32xf32>
    %408 = arith.addf %404, %407 : vector<32x32xf32>
    %c0_262 = arith.constant 0 : index
    %c7_263 = arith.constant 7 : index
    %c0_264 = arith.constant 0 : index
    %c0_265 = arith.constant 0 : index
    %409 = vector.load %arg6[%c0_262, %c7_263, %c0_264, %c0_265] : memref<1x8x1x32xf32, #tpu.memory_space<vmem>>, vector<1x1x1x32xf32>
    %410 = vector.shape_cast %409 : vector<1x1x1x32xf32> to vector<1x32xf32>
    %c0_266 = arith.constant 0 : index
    %c7_267 = arith.constant 7 : index
    %c0_268 = arith.constant 0 : index
    %c0_269 = arith.constant 0 : index
    %411 = vector.load %arg7[%c0_266, %c7_267, %c0_268, %c0_269] : memref<1x8x1x32xf32, #tpu.memory_space<vmem>>, vector<1x1x1x32xf32>
    %412 = vector.shape_cast %411 : vector<1x1x1x32xf32> to vector<1x32xf32>
    %cst_270 = arith.constant dense<0.000000e+00> : vector<32xf32>
    %413 = vector.multi_reduction <add>, %408, %cst_270 [1] : vector<32x32xf32> to vector<32xf32>
    %414 = vector.shape_cast %413 : vector<32xf32> to vector<32x1xf32>
    %cst_271 = arith.constant 3.200000e+01 : f32
    %415 = vector.broadcast %cst_271 : f32 to vector<32x1xf32>
    %416 = arith.divf %414, %415 : vector<32x1xf32>
    %417 = vector.broadcast %416 : vector<32x1xf32> to vector<32x32xf32>
    %418 = arith.subf %408, %417 : vector<32x32xf32>
    %419 = arith.mulf %418, %418 : vector<32x32xf32>
    %cst_272 = arith.constant dense<0.000000e+00> : vector<32xf32>
    %420 = vector.multi_reduction <add>, %419, %cst_272 [1] : vector<32x32xf32> to vector<32xf32>
    %421 = vector.shape_cast %420 : vector<32xf32> to vector<32x1xf32>
    %cst_273 = arith.constant 3.200000e+01 : f32
    %422 = vector.broadcast %cst_273 : f32 to vector<32x1xf32>
    %423 = arith.divf %421, %422 : vector<32x1xf32>
    %cst_274 = arith.constant 9.99999974E-6 : f32
    %424 = vector.broadcast %cst_274 : f32 to vector<32x1xf32>
    %425 = arith.addf %423, %424 : vector<32x1xf32>
    %426 = math.rsqrt %425 : vector<32x1xf32>
    %427 = vector.broadcast %426 : vector<32x1xf32> to vector<32x32xf32>
    %428 = arith.mulf %418, %427 : vector<32x32xf32>
    %429 = vector.broadcast %410 : vector<1x32xf32> to vector<32x32xf32>
    %430 = arith.mulf %428, %429 : vector<32x32xf32>
    %431 = vector.broadcast %412 : vector<1x32xf32> to vector<32x32xf32>
    %432 = arith.addf %430, %431 : vector<32x32xf32>
    %cst_275 = arith.constant 5.000000e-01 : f32
    %433 = vector.broadcast %cst_275 : f32 to vector<32x32xf32>
    %434 = arith.mulf %432, %433 : vector<32x32xf32>
    %435 = arith.addf %357, %434 : vector<32x32xf32>
    %c0_276 = arith.constant 0 : index
    %c0_277 = arith.constant 0 : index
    %436 = vector.load %arg18[%c0_276, %c0_277] : memref<32x32xf32, #tpu.memory_space<vmem>>, vector<32x32xf32>
    tpu.vector_store %arg18[%c0_276, %c0_277], %435 {strides = array<i32>} : memref<32x32xf32, #tpu.memory_space<vmem>>, vector<32x32xf32>,
    return
  }
  func.func @transform_0(%arg0: i32) -> (i32, i32) {
    %c0_i32 = arith.constant 0 : i32
    %c0_i32_0 = arith.constant 0 : i32
    %c0_i32_1 = arith.constant 0 : i32
    return %c0_i32, %c0_i32_0 : i32, i32
  }
  func.func @transform_1(%arg0: i32) -> (i32, i32) {
    %c0_i32 = arith.constant 0 : i32
    %c0_i32_0 = arith.constant 0 : i32
    %c0_i32_1 = arith.constant 0 : i32
    return %c0_i32, %c0_i32_0 : i32, i32
  }
  func.func @transform_2(%arg0: i32) -> (i32, i32) {
    %c0_i32 = arith.constant 0 : i32
    %c0_i32_0 = arith.constant 0 : i32
    %c0_i32_1 = arith.constant 0 : i32
    return %c0_i32, %c0_i32_0 : i32, i32
  }
  func.func @transform_3(%arg0: i32) -> (i32, i32, i32) {
    %c0_i32 = arith.constant 0 : i32
    %c0_i32_0 = arith.constant 0 : i32
    %c0_i32_1 = arith.constant 0 : i32
    %c0_i32_2 = arith.constant 0 : i32
    return %c0_i32, %c0_i32_0, %c0_i32_1 : i32, i32, i32
  }
  func.func @transform_4(%arg0: i32) -> (i32, i32, i32) {
    %c0_i32 = arith.constant 0 : i32
    %c0_i32_0 = arith.constant 0 : i32
    %c0_i32_1 = arith.constant 0 : i32
    %c0_i32_2 = arith.constant 0 : i32
    return %c0_i32, %c0_i32_0, %c0_i32_1 : i32, i32, i32
  }
  func.func @transform_5(%arg0: i32) -> (i32, i32, i32, i32) {
    %c0_i32 = arith.constant 0 : i32
    %c0_i32_0 = arith.constant 0 : i32
    %c0_i32_1 = arith.constant 0 : i32
    %c0_i32_2 = arith.constant 0 : i32
    return %arg0, %c0_i32, %c0_i32_0, %c0_i32_1 : i32, i32, i32, i32
  }
  func.func @transform_6(%arg0: i32) -> (i32, i32, i32, i32) {
    %c0_i32 = arith.constant 0 : i32
    %c0_i32_0 = arith.constant 0 : i32
    %c0_i32_1 = arith.constant 0 : i32
    %c0_i32_2 = arith.constant 0 : i32
    return %arg0, %c0_i32, %c0_i32_0, %c0_i32_1 : i32, i32, i32, i32
  }
  func.func @transform_7(%arg0: i32) -> (i32, i32, i32, i32) {
    %c0_i32 = arith.constant 0 : i32
    %c0_i32_0 = arith.constant 0 : i32
    %c0_i32_1 = arith.constant 0 : i32
    %c0_i32_2 = arith.constant 0 : i32
    return %arg0, %c0_i32, %c0_i32_0, %c0_i32_1 : i32, i32, i32, i32
  }
  func.func @transform_8(%arg0: i32) -> (i32, i32, i32, i32) {
    %c0_i32 = arith.constant 0 : i32
    %c0_i32_0 = arith.constant 0 : i32
    %c0_i32_1 = arith.constant 0 : i32
    %c0_i32_2 = arith.constant 0 : i32
    return %arg0, %c0_i32, %c0_i32_0, %c0_i32_1 : i32, i32, i32, i32
  }
  func.func @transform_9(%arg0: i32) -> (i32, i32, i32) {
    %c0_i32 = arith.constant 0 : i32
    %c0_i32_0 = arith.constant 0 : i32
    %c0_i32_1 = arith.constant 0 : i32
    return %arg0, %c0_i32, %c0_i32_0 : i32, i32, i32
  }
  func.func @transform_10(%arg0: i32) -> (i32, i32, i32) {
    %c0_i32 = arith.constant 0 : i32
    %c0_i32_0 = arith.constant 0 : i32
    %c0_i32_1 = arith.constant 0 : i32
    return %arg0, %c0_i32, %c0_i32_0 : i32, i32, i32
  }
  func.func @transform_11(%arg0: i32) -> (i32, i32, i32) {
    %c0_i32 = arith.constant 0 : i32
    %c0_i32_0 = arith.constant 0 : i32
    %c0_i32_1 = arith.constant 0 : i32
    return %arg0, %c0_i32, %c0_i32_0 : i32, i32, i32
  }
  func.func @transform_12(%arg0: i32) -> (i32, i32, i32) {
    %c0_i32 = arith.constant 0 : i32
    %c0_i32_0 = arith.constant 0 : i32
    %c0_i32_1 = arith.constant 0 : i32
    return %arg0, %c0_i32, %c0_i32_0 : i32, i32, i32
  }
  func.func @transform_13(%arg0: i32) -> (i32, i32, i32) {
    %c0_i32 = arith.constant 0 : i32
    %c0_i32_0 = arith.constant 0 : i32
    %c0_i32_1 = arith.constant 0 : i32
    return %arg0, %c0_i32, %c0_i32_0 : i32, i32, i32
  }
  func.func @transform_14(%arg0: i32) -> (i32, i32, i32) {
    %c0_i32 = arith.constant 0 : i32
    %c0_i32_0 = arith.constant 0 : i32
    %c0_i32_1 = arith.constant 0 : i32
    return %arg0, %c0_i32, %c0_i32_0 : i32, i32, i32
  }
  func.func @transform_15(%arg0: i32) -> (i32, i32, i32) {
    %c0_i32 = arith.constant 0 : i32
    %c0_i32_0 = arith.constant 0 : i32
    %c0_i32_1 = arith.constant 0 : i32
    return %arg0, %c0_i32, %c0_i32_0 : i32, i32, i32
  }
  func.func @transform_16(%arg0: i32) -> (i32, i32, i32) {
    %c0_i32 = arith.constant 0 : i32
    %c0_i32_0 = arith.constant 0 : i32
    %c0_i32_1 = arith.constant 0 : i32
    return %arg0, %c0_i32, %c0_i32_0 : i32, i32, i32
  }
  func.func @transform_17(%arg0: i32) -> (i32, i32) {
    %c0_i32 = arith.constant 0 : i32
    %c0_i32_0 = arith.constant 0 : i32
    %c0_i32_1 = arith.constant 0 : i32
    return %c0_i32, %c0_i32_0 : i32, i32
  }
}

</mosaic_0001>

<llo_original>
// kernel: tpu_custom_call.1
$region0: #{tpu_custom_call.1}
  #allocation0 [shape = 'u32[]', space=smem, size = 0x4, offset = 0x4, fixed_abs, tag = 'smem constant byte address 0x4 - core index']
  #allocation1 [shape = 'u32[144,128]{1,0:T(1,128)}', space=vmem, size = 0x12000, scoped, tag = 'internal scratch']
  #allocation2 [shape = 'f32[2,16,32]{2,1,0:T(8,128)}', space=vmem, size = 0x4000, scoped, tag = 'scratch operand']
  #allocation3 [shape = 'f32[2,20,32]{2,1,0:T(8,128)}', space=vmem, size = 0x6000, scoped, tag = 'scratch operand']
  %s0 = inlined_call_operand.vmem [shape: f32[32,32], index: 0, kind: input, shape index: {}]
  %s1 = inlined_call_operand.hbm [shape: f32[32,32], index: 1, kind: input, shape index: {}]
  %s2 = inlined_call_operand.vmem [shape: f32[32,1], index: 2, kind: input, shape index: {}]
  %s3 = inlined_call_operand.vmem [shape: f32[2,1,16], index: 3, kind: input, shape index: {}]
  %s4 = inlined_call_operand.vmem [shape: f32[2,1,16], index: 4, kind: input, shape index: {}]
  %s5 = inlined_call_operand.hbm [shape: f32[2,8,1,32], index: 5, kind: input, shape index: {}]
  %s6 = inlined_call_operand.hbm [shape: f32[2,8,1,32], index: 6, kind: input, shape index: {}]
  %s7 = inlined_call_operand.hbm [shape: f32[2,10,32,32], index: 7, kind: input, shape index: {}]
  %s8 = inlined_call_operand.vmem [shape: f32[2,2,1,32], index: 8, kind: input, shape index: {}]
  %s9 = inlined_call_operand.hbm [shape: f32[2,32,96], index: 9, kind: input, shape index: {}]
  %s10 = inlined_call_operand.vmem [shape: f32[2,1,96], index: 10, kind: input, shape index: {}]
  %s11 = inlined_call_operand.hbm [shape: f32[2,32,32], index: 11, kind: input, shape index: {}]
  %s12 = inlined_call_operand.vmem [shape: f32[2,1,32], index: 12, kind: input, shape index: {}]
  %s13 = inlined_call_operand.hbm [shape: f32[2,32,32], index: 13, kind: input, shape index: {}]
  %s14 = inlined_call_operand.vmem [shape: f32[2,1,32], index: 14, kind: input, shape index: {}]
  %s15 = inlined_call_operand.hbm [shape: f32[2,32,32], index: 15, kind: input, shape index: {}]
  %s16 = inlined_call_operand.vmem [shape: f32[2,1,32], index: 16, kind: input, shape index: {}]
  %s17 = inlined_call_operand.hbm [shape: f32[32,32], index: 17, kind: output, shape index: {}]
  %s18 = sld [smem:[#allocation0]]
  $region137: #{tpu_custom_call.1} parent=0
    _
  %s20 = ssub.s32 1, %s18
  %s21 = scalar_select 0, %s20, %s18
  $region1: #{tpu_custom_call.1} parent=0
    #allocation4 [shape = 'u8[16384]{0}', space=vmem, size = 0x4000, scoped, tag = 'input window, operand 1, single buffered']
    #allocation5 [shape = 's32[2]{0}', space=sflag, size = 0x8, scoped, tag = 'scoped memory for tpu_custom_call.1']
    #allocation6 [shape = 's32[2]{0}', space=sflag, size = 0x8, scoped, tag = 'scoped memory for tpu_custom_call.1']
    #allocation7 [shape = 'u8[8192]{0}', space=vmem, size = 0x2000, scoped, tag = 'input window, operand 5']
    #allocation8 [shape = 's32[2]{0}', space=sflag, size = 0x8, scoped, tag = 'scoped memory for tpu_custom_call.1']
    #allocation9 [shape = 'u8[8192]{0}', space=vmem, size = 0x2000, scoped, tag = 'input window, operand 6']
    #allocation10 [shape = 'u8[327680]{0}', space=vmem, size = 0x50000, scoped, tag = 'input window, operand 7']
    #allocation11 [shape = 's32[2]{0}', space=sflag, size = 0x8, scoped, tag = 'scoped memory for tpu_custom_call.1']
    #allocation12 [shape = 'u8[32768]{0}', space=vmem, size = 0x8000, scoped, tag = 'input window, operand 9']
    #allocation13 [shape = 'u8[32768]{0}', space=vmem, size = 0x8000, scoped, tag = 'input window, operand 11']
    #allocation14 [shape = 's32[2]{0}', space=sflag, size = 0x8, scoped, tag = 'scoped memory for tpu_custom_call.1']
    #allocation15 [shape = 'u8[32768]{0}', space=vmem, size = 0x8000, scoped, tag = 'input window, operand 13']
    #allocation16 [shape = 'u8[32768]{0}', space=vmem, size = 0x8000, scoped, tag = 'input window, operand 15']
    #allocation17 [shape = 's32[2]{0}', space=sflag, size = 0x8, scoped, tag = 'scoped memory for tpu_custom_call.1']
    #allocation18 [shape = 'u8[16384]{0}', space=vmem, size = 0x4000, scoped, tag = 'output window, operand 0, single buffered']
    %22 = vsyncpa [#allocation5], 0
    %23 = vsyncpa [#allocation8], 0
    %s24 = scalar_lea.sflag [#allocation8], 1
    %25 = vsyncpa %s24, 0
    %26 = vsyncpa [#allocation11], 0
    %s27 = scalar_lea.sflag [#allocation11], 1
    %28 = vsyncpa %s27, 0
    %29 = vsyncpa [#allocation14], 0
    %s30 = scalar_lea.sflag [#allocation14], 1
    %31 = vsyncpa %s30, 0
    %32 = vsyncpa [#allocation17], 0
    %s33 = scalar_lea.sflag [#allocation17], 1
    %34 = vsyncpa %s33, 0
    %35 = vsyncpa [#allocation6], 0
    loop: start=0, step=1, limit=4
    $region2: #{tpu_custom_call.1} parent=1 // loop_pre_header
      _
    $region3: #{tpu_custom_call.1} parent=1 // loop_header
      %s37 = sphi 0, %s41
      %p38 = scmp.ge.s32.totalorder %s37, 4
      %s45 = sphi 0, %s45
      %s47 = sphi 0, %s45
      %s48 = sphi 0, %s47
      %s62 = sphi 0, %s48
      %s66 = sphi 0, %s66
      %s68 = sphi 0, %s66
      %s69 = sphi 0, %s68
      %s83 = sphi 0, %s69
      %s87 = sphi 0, %s87
      %s89 = sphi 0, %s87
      %s90 = sphi 0, %s89
      %s104 = sphi 0, %s90
      %s108 = sphi 0, %s108
      %s110 = sphi 0, %s108
      %s111 = sphi 0, %s110
      %s125 = sphi 0, %s111
      %s129 = sphi 0, %s129
      %s131 = sphi 0, %s129
      %s132 = sphi 0, %s131
      %s146 = sphi 0, %s132
      %s152 = sphi 0, %s154
      %s155 = sphi 0, %s152
      %s156 = sphi 0, %s155
      %s172 = sphi 0, %s156
      %s178 = sphi 0, %s180
      %s181 = sphi 0, %s178
      %s182 = sphi 0, %s181
      %s198 = sphi 0, %s182
      %s204 = sphi 0, %s206
      %s207 = sphi 0, %s204
      %s208 = sphi 0, %s207
      %s224 = sphi 0, %s208
      %s230 = sphi 0, %s232
      %s233 = sphi 0, %s230
      %s234 = sphi 0, %s233
      %s250 = sphi 0, %s234
      %s256 = sphi 0, %s258
      %s259 = sphi 0, %s256
      %s260 = sphi 0, %s259
      %s276 = sphi 0, %s260
      %s282 = sphi 0, %s284
      %s285 = sphi 0, %s282
      %s286 = sphi 0, %s285
      %s302 = sphi 0, %s286
      %s308 = sphi 0, %s310
      %s311 = sphi 0, %s308
      %s312 = sphi 0, %s311
      %s328 = sphi 0, %s312
      %s334 = sphi 0, %s336
      %s337 = sphi 0, %s334
      %s338 = sphi 0, %s337
      %s354 = sphi 0, %s338
      %s360 = sphi 0, %s362
      %s363 = sphi 0, %s360
      %s364 = sphi 0, %s363
      %s380 = sphi 0, %s364
      %s386 = sphi 0, %s388
      %s389 = sphi 0, %s386
      %s390 = sphi 0, %s389
      %s406 = sphi 0, %s390
      %s412 = sphi 0, %s414
      %s415 = sphi 0, %s412
      %s416 = sphi 0, %s415
      %s432 = sphi 0, %s416
      %s438 = sphi 0, %s440
      %s441 = sphi 0, %s438
      %s442 = sphi 0, %s441
      %s458 = sphi 0, %s442
      %s462 = sphi 0, %s462
      %s464 = sphi 0, %s462
      %s465 = sphi 0, %s464
      %s479 = sphi 0, %s465
    $region4: #{tpu_custom_call.1} parent=1 // loop_header_branch
      %40 = sbr.rel (%p38) target = $region8
    $region5: #{tpu_custom_call.1} parent=1 // loop_body
      %s42 = ssub.s32 %s37, 1
      %s43 = ssub.s32 %s37, 2
      %s44 = sadd.s32 %s37, 1
      %s46 = sadd.s32 %s45, 1
      %p49 = scmp.eq.s32.totalorder %s37, 1
      %p50 = scmp.ne.s32.totalorder %s45, %s47
      %p51 = scmp.eq.s32.totalorder %s37, 0
      %p52 = por %p50, %p51
      %p53 = scmp.ne.s32.totalorder %s45, %s47
      %p54 = scmp.eq.s32.totalorder %s42, 1
      %p55 = por %p53, %p54
      %p56 = scmp.ne.s32.totalorder %s47, %s48
      %p57 = scmp.eq.s32.totalorder %s42, 0
      %p58 = por %p56, %p57
      %p59 = scmp.ne.s32.totalorder %s47, %s48
      %p60 = scmp.eq.s32.totalorder %s43, 1
      %p61 = por %p59, %p60
      %p63 = scmp.ne.s32.totalorder %s48, %s62
      %p64 = scmp.eq.s32.totalorder %s43, 0
      %p65 = por %p63, %p64
      %s67 = sadd.s32 %s66, 1
      %p70 = scmp.eq.s32.totalorder %s37, 1
      %p71 = scmp.ne.s32.totalorder %s66, %s68
      %p72 = scmp.eq.s32.totalorder %s37, 0
      %p73 = por %p71, %p72
      %p74 = scmp.ne.s32.totalorder %s66, %s68
      %p75 = scmp.eq.s32.totalorder %s42, 1
      %p76 = por %p74, %p75
      %p77 = scmp.ne.s32.totalorder %s68, %s69
      %p78 = scmp.eq.s32.totalorder %s42, 0
      %p79 = por %p77, %p78
      %p80 = scmp.ne.s32.totalorder %s68, %s69
      %p81 = scmp.eq.s32.totalorder %s43, 1
      %p82 = por %p80, %p81
      %p84 = scmp.ne.s32.totalorder %s69, %s83
      %p85 = scmp.eq.s32.totalorder %s43, 0
      %p86 = por %p84, %p85
      %s88 = sadd.s32 %s87, 1
      %p91 = scmp.eq.s32.totalorder %s37, 1
      %p92 = scmp.ne.s32.totalorder %s87, %s89
      %p93 = scmp.eq.s32.totalorder %s37, 0
      %p94 = por %p92, %p93
      %p95 = scmp.ne.s32.totalorder %s87, %s89
      %p96 = scmp.eq.s32.totalorder %s42, 1
      %p97 = por %p95, %p96
      %p98 = scmp.ne.s32.totalorder %s89, %s90
      %p99 = scmp.eq.s32.totalorder %s42, 0
      %p100 = por %p98, %p99
      %p101 = scmp.ne.s32.totalorder %s89, %s90
      %p102 = scmp.eq.s32.totalorder %s43, 1
      %p103 = por %p101, %p102
      %p105 = scmp.ne.s32.totalorder %s90, %s104
      %p106 = scmp.eq.s32.totalorder %s43, 0
      %p107 = por %p105, %p106
      %s109 = sadd.s32 %s108, 1
      %p112 = scmp.eq.s32.totalorder %s37, 1
      %p113 = scmp.ne.s32.totalorder %s108, %s110
      %p114 = scmp.eq.s32.totalorder %s37, 0
      %p115 = por %p113, %p114
      %p116 = scmp.ne.s32.totalorder %s108, %s110
      %p117 = scmp.eq.s32.totalorder %s42, 1
      %p118 = por %p116, %p117
      %p119 = scmp.ne.s32.totalorder %s110, %s111
      %p120 = scmp.eq.s32.totalorder %s42, 0
      %p121 = por %p119, %p120
      %p122 = scmp.ne.s32.totalorder %s110, %s111
      %p123 = scmp.eq.s32.totalorder %s43, 1
      %p124 = por %p122, %p123
      %p126 = scmp.ne.s32.totalorder %s111, %s125
      %p127 = scmp.eq.s32.totalorder %s43, 0
      %p128 = por %p126, %p127
      %s130 = sadd.s32 %s129, 1
      %p133 = scmp.eq.s32.totalorder %s37, 1
      %p134 = scmp.ne.s32.totalorder %s129, %s131
      %p135 = scmp.eq.s32.totalorder %s37, 0
      %p136 = por %p134, %p135
      %p137 = scmp.ne.s32.totalorder %s129, %s131
      %p138 = scmp.eq.s32.totalorder %s42, 1
      %p139 = por %p137, %p138
      %p140 = scmp.ne.s32.totalorder %s131, %s132
      %p141 = scmp.eq.s32.totalorder %s42, 0
      %p142 = por %p140, %p141
      %p143 = scmp.ne.s32.totalorder %s131, %s132
      %p144 = scmp.eq.s32.totalorder %s43, 1
      %p145 = por %p143, %p144
      %p147 = scmp.ne.s32.totalorder %s132, %s146
      %p148 = scmp.eq.s32.totalorder %s43, 0
      %p149 = por %p147, %p148
      %s150 = ssub.s32 %s37, %s44
      %p151 = scmp.eq.s32.totalorder %s150, 0
      %s153 = sadd.s32 %s152, 1
      %s154 = scalar_select %p151, %s152, %s153
      %p157 = pneg %p151
      %p158 = scmp.eq.s32.totalorder %s37, 1
      %p159 = por %p157, %p158
      %p160 = scmp.ne.s32.totalorder %s152, %s155
      %p161 = scmp.eq.s32.totalorder %s37, 0
      %p162 = por %p160, %p161
      %p163 = scmp.ne.s32.totalorder %s152, %s155
      %p164 = scmp.eq.s32.totalorder %s42, 1
      %p165 = por %p163, %p164
      %p166 = scmp.ne.s32.totalorder %s155, %s156
      %p167 = scmp.eq.s32.totalorder %s42, 0
      %p168 = por %p166, %p167
      %p169 = scmp.ne.s32.totalorder %s155, %s156
      %p170 = scmp.eq.s32.totalorder %s43, 1
      %p171 = por %p169, %p170
      %p173 = scmp.ne.s32.totalorder %s156, %s172
      %p174 = scmp.eq.s32.totalorder %s43, 0
      %p175 = por %p173, %p174
      %s176 = ssub.s32 %s37, %s44
      %p177 = scmp.eq.s32.totalorder %s176, 0
      %s179 = sadd.s32 %s178, 1
      %s180 = scalar_select %p177, %s178, %s179
      %p183 = pneg %p177
      %p184 = scmp.eq.s32.totalorder %s37, 1
      %p185 = por %p183, %p184
      %p186 = scmp.ne.s32.totalorder %s178, %s181
      %p187 = scmp.eq.s32.totalorder %s37, 0
      %p188 = por %p186, %p187
      %p189 = scmp.ne.s32.totalorder %s178, %s181
      %p190 = scmp.eq.s32.totalorder %s42, 1
      %p191 = por %p189, %p190
      %p192 = scmp.ne.s32.totalorder %s181, %s182
      %p193 = scmp.eq.s32.totalorder %s42, 0
      %p194 = por %p192, %p193
      %p195 = scmp.ne.s32.totalorder %s181, %s182
      %p196 = scmp.eq.s32.totalorder %s43, 1
      %p197 = por %p195, %p196
      %p199 = scmp.ne.s32.totalorder %s182, %s198
      %p200 = scmp.eq.s32.totalorder %s43, 0
      %p201 = por %p199, %p200
      %s202 = ssub.s32 %s37, %s44
      %p203 = scmp.eq.s32.totalorder %s202, 0
      %s205 = sadd.s32 %s204, 1
      %s206 = scalar_select %p203, %s204, %s205
      %p209 = pneg %p203
      %p210 = scmp.eq.s32.totalorder %s37, 1
      %p211 = por %p209, %p210
      %p212 = scmp.ne.s32.totalorder %s204, %s207
      %p213 = scmp.eq.s32.totalorder %s37, 0
      %p214 = por %p212, %p213
      %p215 = scmp.ne.s32.totalorder %s204, %s207
      %p216 = scmp.eq.s32.totalorder %s42, 1
      %p217 = por %p215, %p216
      %p218 = scmp.ne.s32.totalorder %s207, %s208
      %p219 = scmp.eq.s32.totalorder %s42, 0
      %p220 = por %p218, %p219
      %p221 = scmp.ne.s32.totalorder %s207, %s208
      %p222 = scmp.eq.s32.totalorder %s43, 1
      %p223 = por %p221, %p222
      %p225 = scmp.ne.s32.totalorder %s208, %s224
      %p226 = scmp.eq.s32.totalorder %s43, 0
      %p227 = por %p225, %p226
      %s228 = ssub.s32 %s37, %s44
      %p229 = scmp.eq.s32.totalorder %s228, 0
      %s231 = sadd.s32 %s230, 1
      %s232 = scalar_select %p229, %s230, %s231
      %p235 = pneg %p229
      %p236 = scmp.eq.s32.totalorder %s37, 1
      %p237 = por %p235, %p236
      %p238 = scmp.ne.s32.totalorder %s230, %s233
      %p239 = scmp.eq.s32.totalorder %s37, 0
      %p240 = por %p238, %p239
      %p241 = scmp.ne.s32.totalorder %s230, %s233
      %p242 = scmp.eq.s32.totalorder %s42, 1
      %p243 = por %p241, %p242
      %p244 = scmp.ne.s32.totalorder %s233, %s234
      %p245 = scmp.eq.s32.totalorder %s42, 0
      %p246 = por %p244, %p245
      %p247 = scmp.ne.s32.totalorder %s233, %s234
      %p248 = scmp.eq.s32.totalorder %s43, 1
      %p249 = por %p247, %p248
      %p251 = scmp.ne.s32.totalorder %s234, %s250
      %p252 = scmp.eq.s32.totalorder %s43, 0
      %p253 = por %p251, %p252
      %s254 = ssub.s32 %s37, %s44
      %p255 = scmp.eq.s32.totalorder %s254, 0
      %s257 = sadd.s32 %s256, 1
      %s258 = scalar_select %p255, %s256, %s257
      %p261 = pneg %p255
      %p262 = scmp.eq.s32.totalorder %s37, 1
      %p263 = por %p261, %p262
      %p264 = scmp.ne.s32.totalorder %s256, %s259
      %p265 = scmp.eq.s32.totalorder %s37, 0
      %p266 = por %p264, %p265
      %p267 = scmp.ne.s32.totalorder %s256, %s259
      %p268 = scmp.eq.s32.totalorder %s42, 1
      %p269 = por %p267, %p268
      %p270 = scmp.ne.s32.totalorder %s259, %s260
      %p271 = scmp.eq.s32.totalorder %s42, 0
      %p272 = por %p270, %p271
      %p273 = scmp.ne.s32.totalorder %s259, %s260
      %p274 = scmp.eq.s32.totalorder %s43, 1
      %p275 = por %p273, %p274
      %p277 = scmp.ne.s32.totalorder %s260, %s276
      %p278 = scmp.eq.s32.totalorder %s43, 0
      %p279 = por %p277, %p278
      %s280 = ssub.s32 %s37, %s44
      %p281 = scmp.eq.s32.totalorder %s280, 0
      %s283 = sadd.s32 %s282, 1
      %s284 = scalar_select %p281, %s282, %s283
      %p287 = pneg %p281
      %p288 = scmp.eq.s32.totalorder %s37, 1
      %p289 = por %p287, %p288
      %p290 = scmp.ne.s32.totalorder %s282, %s285
      %p291 = scmp.eq.s32.totalorder %s37, 0
      %p292 = por %p290, %p291
      %p293 = scmp.ne.s32.totalorder %s282, %s285
      %p294 = scmp.eq.s32.totalorder %s42, 1
      %p295 = por %p293, %p294
      %p296 = scmp.ne.s32.totalorder %s285, %s286
      %p297 = scmp.eq.s32.totalorder %s42, 0
      %p298 = por %p296, %p297
      %p299 = scmp.ne.s32.totalorder %s285, %s286
      %p300 = scmp.eq.s32.totalorder %s43, 1
      %p301 = por %p299, %p300
      %p303 = scmp.ne.s32.totalorder %s286, %s302
      %p304 = scmp.eq.s32.totalorder %s43, 0
      %p305 = por %p303, %p304
      %s306 = ssub.s32 %s37, %s44
      %p307 = scmp.eq.s32.totalorder %s306, 0
      %s309 = sadd.s32 %s308, 1
      %s310 = scalar_select %p307, %s308, %s309
      %p313 = pneg %p307
      %p314 = scmp.eq.s32.totalorder %s37, 1
      %p315 = por %p313, %p314
      %p316 = scmp.ne.s32.totalorder %s308, %s311
      %p317 = scmp.eq.s32.totalorder %s37, 0
      %p318 = por %p316, %p317
      %p319 = scmp.ne.s32.totalorder %s308, %s311
      %p320 = scmp.eq.s32.totalorder %s42, 1
      %p321 = por %p319, %p320
      %p322 = scmp.ne.s32.totalorder %s311, %s312
      %p323 = scmp.eq.s32.totalorder %s42, 0
      %p324 = por %p322, %p323
      %p325 = scmp.ne.s32.totalorder %s311, %s312
      %p326 = scmp.eq.s32.totalorder %s43, 1
      %p327 = por %p325, %p326
      %p329 = scmp.ne.s32.totalorder %s312, %s328
      %p330 = scmp.eq.s32.totalorder %s43, 0
      %p331 = por %p329, %p330
      %s332 = ssub.s32 %s37, %s44
      %p333 = scmp.eq.s32.totalorder %s332, 0
      %s335 = sadd.s32 %s334, 1
      %s336 = scalar_select %p333, %s334, %s335
      %p339 = pneg %p333
      %p340 = scmp.eq.s32.totalorder %s37, 1
      %p341 = por %p339, %p340
      %p342 = scmp.ne.s32.totalorder %s334, %s337
      %p343 = scmp.eq.s32.totalorder %s37, 0
      %p344 = por %p342, %p343
      %p345 = scmp.ne.s32.totalorder %s334, %s337
      %p346 = scmp.eq.s32.totalorder %s42, 1
      %p347 = por %p345, %p346
      %p348 = scmp.ne.s32.totalorder %s337, %s338
      %p349 = scmp.eq.s32.totalorder %s42, 0
      %p350 = por %p348, %p349
      %p351 = scmp.ne.s32.totalorder %s337, %s338
      %p352 = scmp.eq.s32.totalorder %s43, 1
      %p353 = por %p351, %p352
      %p355 = scmp.ne.s32.totalorder %s338, %s354
      %p356 = scmp.eq.s32.totalorder %s43, 0
      %p357 = por %p355, %p356
      %s358 = ssub.s32 %s37, %s44
      %p359 = scmp.eq.s32.totalorder %s358, 0
      %s361 = sadd.s32 %s360, 1
      %s362 = scalar_select %p359, %s360, %s361
      %p365 = pneg %p359
      %p366 = scmp.eq.s32.totalorder %s37, 1
      %p367 = por %p365, %p366
      %p368 = scmp.ne.s32.totalorder %s360, %s363
      %p369 = scmp.eq.s32.totalorder %s37, 0
      %p370 = por %p368, %p369
      %p371 = scmp.ne.s32.totalorder %s360, %s363
      %p372 = scmp.eq.s32.totalorder %s42, 1
      %p373 = por %p371, %p372
      %p374 = scmp.ne.s32.totalorder %s363, %s364
      %p375 = scmp.eq.s32.totalorder %s42, 0
      %p376 = por %p374, %p375
      %p377 = scmp.ne.s32.totalorder %s363, %s364
      %p378 = scmp.eq.s32.totalorder %s43, 1
      %p379 = por %p377, %p378
      %p381 = scmp.ne.s32.totalorder %s364, %s380
      %p382 = scmp.eq.s32.totalorder %s43, 0
      %p383 = por %p381, %p382
      %s384 = ssub.s32 %s37, %s44
      %p385 = scmp.eq.s32.totalorder %s384, 0
      %s387 = sadd.s32 %s386, 1
      %s388 = scalar_select %p385, %s386, %s387
      %p391 = pneg %p385
      %p392 = scmp.eq.s32.totalorder %s37, 1
      %p393 = por %p391, %p392
      %p394 = scmp.ne.s32.totalorder %s386, %s389
      %p395 = scmp.eq.s32.totalorder %s37, 0
      %p396 = por %p394, %p395
      %p397 = scmp.ne.s32.totalorder %s386, %s389
      %p398 = scmp.eq.s32.totalorder %s42, 1
      %p399 = por %p397, %p398
      %p400 = scmp.ne.s32.totalorder %s389, %s390
      %p401 = scmp.eq.s32.totalorder %s42, 0
      %p402 = por %p400, %p401
      %p403 = scmp.ne.s32.totalorder %s389, %s390
      %p404 = scmp.eq.s32.totalorder %s43, 1
      %p405 = por %p403, %p404
      %p407 = scmp.ne.s32.totalorder %s390, %s406
      %p408 = scmp.eq.s32.totalorder %s43, 0
      %p409 = por %p407, %p408
      %s410 = ssub.s32 %s37, %s44
      %p411 = scmp.eq.s32.totalorder %s410, 0
      %s413 = sadd.s32 %s412, 1
      %s414 = scalar_select %p411, %s412, %s413
      %p417 = pneg %p411
      %p418 = scmp.eq.s32.totalorder %s37, 1
      %p419 = por %p417, %p418
      %p420 = scmp.ne.s32.totalorder %s412, %s415
      %p421 = scmp.eq.s32.totalorder %s37, 0
      %p422 = por %p420, %p421
      %p423 = scmp.ne.s32.totalorder %s412, %s415
      %p424 = scmp.eq.s32.totalorder %s42, 1
      %p425 = por %p423, %p424
      %p426 = scmp.ne.s32.totalorder %s415, %s416
      %p427 = scmp.eq.s32.totalorder %s42, 0
      %p428 = por %p426, %p427
      %p429 = scmp.ne.s32.totalorder %s415, %s416
      %p430 = scmp.eq.s32.totalorder %s43, 1
      %p431 = por %p429, %p430
      %p433 = scmp.ne.s32.totalorder %s416, %s432
      %p434 = scmp.eq.s32.totalorder %s43, 0
      %p435 = por %p433, %p434
      %s436 = ssub.s32 %s37, %s44
      %p437 = scmp.eq.s32.totalorder %s436, 0
      %s439 = sadd.s32 %s438, 1
      %s440 = scalar_select %p437, %s438, %s439
      %p443 = pneg %p437
      %p444 = scmp.eq.s32.totalorder %s37, 1
      %p445 = por %p443, %p444
      %p446 = scmp.ne.s32.totalorder %s438, %s441
      %p447 = scmp.eq.s32.totalorder %s37, 0
      %p448 = por %p446, %p447
      %p449 = scmp.ne.s32.totalorder %s438, %s441
      %p450 = scmp.eq.s32.totalorder %s42, 1
      %p451 = por %p449, %p450
      %p452 = scmp.ne.s32.totalorder %s441, %s442
      %p453 = scmp.eq.s32.totalorder %s42, 0
      %p454 = por %p452, %p453
      %p455 = scmp.ne.s32.totalorder %s441, %s442
      %p456 = scmp.eq.s32.totalorder %s43, 1
      %p457 = por %p455, %p456
      %p459 = scmp.ne.s32.totalorder %s442, %s458
      %p460 = scmp.eq.s32.totalorder %s43, 0
      %p461 = por %p459, %p460
      %s463 = sadd.s32 %s462, 1
      %p466 = scmp.eq.s32.totalorder %s37, 1
      %p467 = scmp.ne.s32.totalorder %s462, %s464
      %p468 = scmp.eq.s32.totalorder %s37, 0
      %p469 = por %p467, %p468
      %p470 = scmp.ne.s32.totalorder %s462, %s464
      %p471 = scmp.eq.s32.totalorder %s42, 1
      %p472 = por %p470, %p471
      %p473 = scmp.ne.s32.totalorder %s464, %s465
      %p474 = scmp.eq.s32.totalorder %s42, 0
      %p475 = por %p473, %p474
      %p476 = scmp.ne.s32.totalorder %s464, %s465
      %p477 = scmp.eq.s32.totalorder %s43, 1
      %p478 = por %p476, %p477
      %p480 = scmp.ne.s32.totalorder %s465, %s479
      %p481 = scmp.eq.s32.totalorder %s43, 0
      %p482 = por %p480, %p481
      %p483 = scmp.le.s32.totalorder 1, %s37
      %p484 = scmp.lt.s32.totalorder %s37, 3
      %p485 = pnand %p483, %p484
      %p486 = pneg %p485
      // Predicated region
      $region9: #{tpu_custom_call.1} parent=5 // pred_check
        _
      $region10: #{tpu_custom_call.1} parent=5 // pred_check_branch
        %488 = sbr.rel (%p485) target = $region12
      $region11: #{tpu_custom_call.1} parent=5 // pred_region
        %s489 = ssub.s32 %s37, 1
        // Predicated region
        $region13: #{tpu_custom_call.1} parent=11 // pred_check
          %p490 = pneg %p58
        $region14: #{tpu_custom_call.1} parent=11 // pred_check_branch
          %492 = sbr.rel (%p490) target = $region16
        $region15: #{tpu_custom_call.1} parent=11 // pred_region
          _
        $region16: #{tpu_custom_call.1} parent=11 // pred_fallthru
          _
        // Predicated region
        $region17: #{tpu_custom_call.1} parent=11 // pred_check
          %p493 = pneg %p79
        $region18: #{tpu_custom_call.1} parent=11 // pred_check_branch
          %495 = sbr.rel (%p493) target = $region20
        $region19: #{tpu_custom_call.1} parent=11 // pred_region
          %s497 = ssub.s32 512, 512
          %498 = vsyncadd [#allocation5], %s497
          %s499 = sshll.u32 [#allocation4], 4
          %s500 = int_to_ptr.vmem [resolvable:$true] %s499
          %505 = dma.hbm_to_vmem [thread:$0]  %s1, 512, %s500, [#allocation5], 128, 128, 8
        $region20: #{tpu_custom_call.1} parent=11 // pred_fallthru
          _
        // Predicated region
        $region21: #{tpu_custom_call.1} parent=11 // pred_check
          %p506 = pneg %p100
        $region22: #{tpu_custom_call.1} parent=11 // pred_check_branch
          %508 = sbr.rel (%p506) target = $region24
        $region23: #{tpu_custom_call.1} parent=11 // pred_region
          _
        $region24: #{tpu_custom_call.1} parent=11 // pred_fallthru
          _
        // Predicated region
        $region25: #{tpu_custom_call.1} parent=11 // pred_check
          %p509 = pneg %p121
        $region26: #{tpu_custom_call.1} parent=11 // pred_check_branch
          %511 = sbr.rel (%p509) target = $region28
        $region27: #{tpu_custom_call.1} parent=11 // pred_region
          _
        $region28: #{tpu_custom_call.1} parent=11 // pred_fallthru
          _
        // Predicated region
        $region29: #{tpu_custom_call.1} parent=11 // pred_check
          %p512 = pneg %p142
        $region30: #{tpu_custom_call.1} parent=11 // pred_check_branch
          %514 = sbr.rel (%p512) target = $region32
        $region31: #{tpu_custom_call.1} parent=11 // pred_region
          _
        $region32: #{tpu_custom_call.1} parent=11 // pred_fallthru
          _
      $region12: #{tpu_custom_call.1} parent=5 // pred_fallthru
        _
      %p515 = scmp.lt.s32.totalorder %s37, 2
      // Predicated region
      $region33: #{tpu_custom_call.1} parent=5 // pred_check
        %p516 = pneg %p515
      $region34: #{tpu_custom_call.1} parent=5 // pred_check_branch
        %518 = sbr.rel (%p516) target = $region36
      $region35: #{tpu_custom_call.1} parent=5 // pred_region
        // Predicated region
        $region37: #{tpu_custom_call.1} parent=35 // pred_check
          %p519 = pneg %p162
        $region38: #{tpu_custom_call.1} parent=35 // pred_check_branch
          %521 = sbr.rel (%p519) target = $region40
        $region39: #{tpu_custom_call.1} parent=35 // pred_region
          %s522 = sand.u32 %s37, 1
          %s523 = scalar_lea.sflag [#allocation8], %s522
          %s524 = sand.u32 %s152, 1
          %s525 = smul.addr %s524, 8
          %s526 = scalar_lea.vmem [#allocation7], %s525
          %s528 = ssub.s32 128, 128
          %529 = vsyncadd %s523, %s528
          %s530 = smul.addr %s37, 8
          %s531 = smul.addr %s530, 16
          %s532 = scalar_lea.hbm %s5, %s531
          %s533 = sshll.u32 %s526, 4
          %s534 = int_to_ptr.vmem [resolvable:$true] %s533
          %539 = dma.hbm_to_vmem [thread:$0]  %s532, 128, %s534, %s523, 16, 16, 1
        $region40: #{tpu_custom_call.1} parent=35 // pred_fallthru
          _
        // Predicated region
        $region41: #{tpu_custom_call.1} parent=35 // pred_check
          %p540 = pneg %p188
        $region42: #{tpu_custom_call.1} parent=35 // pred_check_branch
          %542 = sbr.rel (%p540) target = $region44
        $region43: #{tpu_custom_call.1} parent=35 // pred_region
          %s543 = sand.u32 %s37, 1
          %s544 = scalar_lea.sflag [#allocation8], %s543
          %s545 = sand.u32 %s178, 1
          %s546 = smul.addr %s545, 8
          %s547 = scalar_lea.vmem [#allocation9], %s546
          %s549 = ssub.s32 128, 128
          %550 = vsyncadd %s544, %s549
          %s551 = smul.addr %s37, 8
          %s552 = smul.addr %s551, 16
          %s553 = scalar_lea.hbm %s6, %s552
          %s554 = sshll.u32 %s547, 4
          %s555 = int_to_ptr.vmem [resolvable:$true] %s554
          %560 = dma.hbm_to_vmem [thread:$0]  %s553, 128, %s555, %s544, 16, 16, 1
        $region44: #{tpu_custom_call.1} parent=35 // pred_fallthru
          _
        // Predicated region
        $region45: #{tpu_custom_call.1} parent=35 // pred_check
          %p561 = pneg %p214
        $region46: #{tpu_custom_call.1} parent=35 // pred_check_branch
          %563 = sbr.rel (%p561) target = $region48
        $region47: #{tpu_custom_call.1} parent=35 // pred_region
          %s564 = sand.u32 %s37, 1
          %s565 = scalar_lea.sflag [#allocation11], %s564
          %s566 = sand.u32 %s204, 1
          %s567 = smul.addr %s566, 320
          %s568 = scalar_lea.vmem [#allocation10], %s567
          %s570 = ssub.s32 5120, 5120
          %571 = vsyncadd %s565, %s570
          %s572 = smul.addr %s37, 40
          %s573 = smul.addr %s572, 128
          %s574 = scalar_lea.hbm %s7, %s573
          %s575 = sshll.u32 %s568, 4
          %s576 = int_to_ptr.vmem [resolvable:$true] %s575
          %581 = dma.hbm_to_vmem [thread:$0]  %s574, 5120, %s576, %s565, 128, 128, 8
        $region48: #{tpu_custom_call.1} parent=35 // pred_fallthru
          _
        // Predicated region
        $region49: #{tpu_custom_call.1} parent=35 // pred_check
          %p582 = pneg %p240
        $region50: #{tpu_custom_call.1} parent=35 // pred_check_branch
          %584 = sbr.rel (%p582) target = $region52
        $region51: #{tpu_custom_call.1} parent=35 // pred_region
          %p585 = scmp.lt.s32.totalorder %s37, 1
          %s586 = scalar_select %p585, %s37, 1
          %s587 = smul.addr %s586, 2
          %s588 = scalar_lea.vmem %s8, %s587
        $region52: #{tpu_custom_call.1} parent=35 // pred_fallthru
          _
        // Predicated region
        $region53: #{tpu_custom_call.1} parent=35 // pred_check
          %p589 = pneg %p266
        $region54: #{tpu_custom_call.1} parent=35 // pred_check_branch
          %591 = sbr.rel (%p589) target = $region56
        $region55: #{tpu_custom_call.1} parent=35 // pred_region
          %s592 = sand.u32 %s37, 1
          %s593 = scalar_lea.sflag [#allocation11], %s592
          %s594 = sand.u32 %s256, 1
          %s595 = smul.addr %s594, 32
          %s596 = scalar_lea.vmem [#allocation12], %s595
          %s598 = ssub.s32 512, 512
          %599 = vsyncadd %s593, %s598
          %s600 = smul.addr %s37, 4
          %s601 = smul.addr %s600, 128
          %s602 = scalar_lea.hbm %s9, %s601
          %s603 = sshll.u32 %s596, 4
          %s604 = int_to_ptr.vmem [resolvable:$true] %s603
          %609 = dma.hbm_to_vmem [thread:$0]  %s602, 512, %s604, %s593, 128, 128, 8
        $region56: #{tpu_custom_call.1} parent=35 // pred_fallthru
          _
        // Predicated region
        $region57: #{tpu_custom_call.1} parent=35 // pred_check
          %p610 = pneg %p292
        $region58: #{tpu_custom_call.1} parent=35 // pred_check_branch
          %612 = sbr.rel (%p610) target = $region60
        $region59: #{tpu_custom_call.1} parent=35 // pred_region
          %p613 = scmp.lt.s32.totalorder %s37, 1
          %s614 = scalar_select %p613, %s37, 1
          %s615 = scalar_lea.vmem %s10, %s614
        $region60: #{tpu_custom_call.1} parent=35 // pred_fallthru
          _
        // Predicated region
        $region61: #{tpu_custom_call.1} parent=35 // pred_check
          %p616 = pneg %p318
        $region62: #{tpu_custom_call.1} parent=35 // pred_check_branch
          %618 = sbr.rel (%p616) target = $region64
        $region63: #{tpu_custom_call.1} parent=35 // pred_region
          %s619 = sand.u32 %s37, 1
          %s620 = scalar_lea.sflag [#allocation14], %s619
          %s621 = sand.u32 %s308, 1
          %s622 = smul.addr %s621, 32
          %s623 = scalar_lea.vmem [#allocation13], %s622
          %s625 = ssub.s32 512, 512
          %626 = vsyncadd %s620, %s625
          %s627 = smul.addr %s37, 4
          %s628 = smul.addr %s627, 128
          %s629 = scalar_lea.hbm %s11, %s628
          %s630 = sshll.u32 %s623, 4
          %s631 = int_to_ptr.vmem [resolvable:$true] %s630
          %636 = dma.hbm_to_vmem [thread:$0]  %s629, 512, %s631, %s620, 128, 128, 8
        $region64: #{tpu_custom_call.1} parent=35 // pred_fallthru
          _
        // Predicated region
        $region65: #{tpu_custom_call.1} parent=35 // pred_check
          %p637 = pneg %p344
        $region66: #{tpu_custom_call.1} parent=35 // pred_check_branch
          %639 = sbr.rel (%p637) target = $region68
        $region67: #{tpu_custom_call.1} parent=35 // pred_region
          %p640 = scmp.lt.s32.totalorder %s37, 1
          %s641 = scalar_select %p640, %s37, 1
          %s642 = scalar_lea.vmem %s12, %s641
        $region68: #{tpu_custom_call.1} parent=35 // pred_fallthru
          _
        // Predicated region
        $region69: #{tpu_custom_call.1} parent=35 // pred_check
          %p643 = pneg %p370
        $region70: #{tpu_custom_call.1} parent=35 // pred_check_branch
          %645 = sbr.rel (%p643) target = $region72
        $region71: #{tpu_custom_call.1} parent=35 // pred_region
          %s646 = sand.u32 %s37, 1
          %s647 = scalar_lea.sflag [#allocation14], %s646
          %s648 = sand.u32 %s360, 1
          %s649 = smul.addr %s648, 32
          %s650 = scalar_lea.vmem [#allocation15], %s649
          %s652 = ssub.s32 512, 512
          %653 = vsyncadd %s647, %s652
          %s654 = smul.addr %s37, 4
          %s655 = smul.addr %s654, 128
          %s656 = scalar_lea.hbm %s13, %s655
          %s657 = sshll.u32 %s650, 4
          %s658 = int_to_ptr.vmem [resolvable:$true] %s657
          %663 = dma.hbm_to_vmem [thread:$0]  %s656, 512, %s658, %s647, 128, 128, 8
        $region72: #{tpu_custom_call.1} parent=35 // pred_fallthru
          _
        // Predicated region
        $region73: #{tpu_custom_call.1} parent=35 // pred_check
          %p664 = pneg %p396
        $region74: #{tpu_custom_call.1} parent=35 // pred_check_branch
          %666 = sbr.rel (%p664) target = $region76
        $region75: #{tpu_custom_call.1} parent=35 // pred_region
          %p667 = scmp.lt.s32.totalorder %s37, 1
          %s668 = scalar_select %p667, %s37, 1
          %s669 = scalar_lea.vmem %s14, %s668
        $region76: #{tpu_custom_call.1} parent=35 // pred_fallthru
          _
        // Predicated region
        $region77: #{tpu_custom_call.1} parent=35 // pred_check
          %p670 = pneg %p422
        $region78: #{tpu_custom_call.1} parent=35 // pred_check_branch
          %672 = sbr.rel (%p670) target = $region80
        $region79: #{tpu_custom_call.1} parent=35 // pred_region
          %s673 = sand.u32 %s412, 1
          %s674 = scalar_lea.sflag [#allocation17], %s673
          %s675 = sand.u32 %s412, 1
          %s676 = smul.addr %s675, 32
          %s677 = scalar_lea.vmem [#allocation16], %s676
          %s679 = ssub.s32 512, 512
          %680 = vsyncadd %s674, %s679
          %s681 = smul.addr %s37, 4
          %s682 = smul.addr %s681, 128
          %s683 = scalar_lea.hbm %s15, %s682
          %s684 = sshll.u32 %s677, 4
          %s685 = int_to_ptr.vmem [resolvable:$true] %s684
          %690 = dma.hbm_to_vmem [thread:$0]  %s683, 512, %s685, %s674, 128, 128, 8
        $region80: #{tpu_custom_call.1} parent=35 // pred_fallthru
          _
        // Predicated region
        $region81: #{tpu_custom_call.1} parent=35 // pred_check
          %p691 = pneg %p448
        $region82: #{tpu_custom_call.1} parent=35 // pred_check_branch
          %693 = sbr.rel (%p691) target = $region84
        $region83: #{tpu_custom_call.1} parent=35 // pred_region
          %p694 = scmp.lt.s32.totalorder %s37, 1
          %s695 = scalar_select %p694, %s37, 1
          %s696 = scalar_lea.vmem %s16, %s695
        $region84: #{tpu_custom_call.1} parent=35 // pred_fallthru
          _
      $region36: #{tpu_custom_call.1} parent=5 // pred_fallthru
        _
      %p697 = scmp.le.s32.totalorder 1, %s37
      %p698 = scmp.lt.s32.totalorder %s37, 3
      %p699 = pnand %p697, %p698
      %p700 = pneg %p699
      // Predicated region
      $region85: #{tpu_custom_call.1} parent=5 // pred_check
        _
      $region86: #{tpu_custom_call.1} parent=5 // pred_check_branch
        %702 = sbr.rel (%p699) target = $region88
      $region87: #{tpu_custom_call.1} parent=5 // pred_region
        %s703 = ssub.s32 %s37, 1
        // Predicated region
        $region89: #{tpu_custom_call.1} parent=87 // pred_check
          %p704 = pneg %p79
        $region90: #{tpu_custom_call.1} parent=87 // pred_check_branch
          %706 = sbr.rel (%p704) target = $region92
        $region91: #{tpu_custom_call.1} parent=87 // pred_region
          %707 = dma.done [#allocation5], 512
        $region92: #{tpu_custom_call.1} parent=87 // pred_fallthru
          _
        %s708 = sand.u32 %s42, 1
        %s709 = scalar_lea.sflag [#allocation8], %s708
        %s710 = sand.u32 %s155, 1
        %s711 = smul.addr %s710, 8
        %s712 = scalar_lea.vmem [#allocation7], %s711
        // Predicated region
        $region93: #{tpu_custom_call.1} parent=87 // pred_check
          %p713 = pneg %p168
        $region94: #{tpu_custom_call.1} parent=87 // pred_check_branch
          %715 = sbr.rel (%p713) target = $region96
        $region95: #{tpu_custom_call.1} parent=87 // pred_region
          %716 = dma.done %s709, 128
        $region96: #{tpu_custom_call.1} parent=87 // pred_fallthru
          _
        %s717 = sand.u32 %s42, 1
        %s718 = scalar_lea.sflag [#allocation8], %s717
        %s719 = sand.u32 %s181, 1
        %s720 = smul.addr %s719, 8
        %s721 = scalar_lea.vmem [#allocation9], %s720
        // Predicated region
        $region97: #{tpu_custom_call.1} parent=87 // pred_check
          %p722 = pneg %p194
        $region98: #{tpu_custom_call.1} parent=87 // pred_check_branch
          %724 = sbr.rel (%p722) target = $region100
        $region99: #{tpu_custom_call.1} parent=87 // pred_region
          %725 = dma.done %s718, 128
        $region100: #{tpu_custom_call.1} parent=87 // pred_fallthru
          _
        %s726 = sand.u32 %s42, 1
        %s727 = scalar_lea.sflag [#allocation11], %s726
        %s728 = sand.u32 %s207, 1
        %s729 = smul.addr %s728, 320
        %s730 = scalar_lea.vmem [#allocation10], %s729
        // Predicated region
        $region101: #{tpu_custom_call.1} parent=87 // pred_check
          %p731 = pneg %p220
        $region102: #{tpu_custom_call.1} parent=87 // pred_check_branch
          %733 = sbr.rel (%p731) target = $region104
        $region103: #{tpu_custom_call.1} parent=87 // pred_region
          %734 = dma.done %s727, 5120
        $region104: #{tpu_custom_call.1} parent=87 // pred_fallthru
          _
        %s735 = sand.u32 %s42, 1
        %s736 = scalar_lea.sflag [#allocation11], %s735
        %s737 = sand.u32 %s259, 1
        %s738 = smul.addr %s737, 32
        %s739 = scalar_lea.vmem [#allocation12], %s738
        // Predicated region
        $region105: #{tpu_custom_call.1} parent=87 // pred_check
          %p740 = pneg %p272
        $region106: #{tpu_custom_call.1} parent=87 // pred_check_branch
          %742 = sbr.rel (%p740) target = $region108
        $region107: #{tpu_custom_call.1} parent=87 // pred_region
          %743 = dma.done %s736, 512
        $region108: #{tpu_custom_call.1} parent=87 // pred_fallthru
          _
        %s744 = sand.u32 %s42, 1
        %s745 = scalar_lea.sflag [#allocation14], %s744
        %s746 = sand.u32 %s311, 1
        %s747 = smul.addr %s746, 32
        %s748 = scalar_lea.vmem [#allocation13], %s747
        // Predicated region
        $region109: #{tpu_custom_call.1} parent=87 // pred_check
          %p749 = pneg %p324
        $region110: #{tpu_custom_call.1} parent=87 // pred_check_branch
          %751 = sbr.rel (%p749) target = $region112
        $region111: #{tpu_custom_call.1} parent=87 // pred_region
          %752 = dma.done %s745, 512
        $region112: #{tpu_custom_call.1} parent=87 // pred_fallthru
          _
        %s753 = sand.u32 %s42, 1
        %s754 = scalar_lea.sflag [#allocation14], %s753
        %s755 = sand.u32 %s363, 1
        %s756 = smul.addr %s755, 32
        %s757 = scalar_lea.vmem [#allocation15], %s756
        // Predicated region
        $region113: #{tpu_custom_call.1} parent=87 // pred_check
          %p758 = pneg %p376
        $region114: #{tpu_custom_call.1} parent=87 // pred_check_branch
          %760 = sbr.rel (%p758) target = $region116
        $region115: #{tpu_custom_call.1} parent=87 // pred_region
          %761 = dma.done %s754, 512
        $region116: #{tpu_custom_call.1} parent=87 // pred_fallthru
          _
        %s762 = sand.u32 %s415, 1
        %s763 = scalar_lea.sflag [#allocation17], %s762
        %s764 = sand.u32 %s415, 1
        %s765 = smul.addr %s764, 32
        %s766 = scalar_lea.vmem [#allocation16], %s765
        // Predicated region
        $region117: #{tpu_custom_call.1} parent=87 // pred_check
          %p767 = pneg %p428
        $region118: #{tpu_custom_call.1} parent=87 // pred_check_branch
          %769 = sbr.rel (%p767) target = $region120
        $region119: #{tpu_custom_call.1} parent=87 // pred_region
          %770 = dma.done %s763, 512
        $region120: #{tpu_custom_call.1} parent=87 // pred_fallthru
          _
        %p771 = pneg %p58
        %p772 = pneg %p55
        %p773 = pneg %p79
        %p774 = pneg %p76
        %p775 = pneg %p100
        %p776 = pneg %p97
        %p777 = pneg %p121
        %p778 = pneg %p118
        %p779 = pneg %p142
        %p780 = pneg %p139
        %s781 = sand.u32 %s42, 1
        %s782 = scalar_lea.sflag [#allocation8], %s781
        %s783 = sand.u32 %s155, 1
        %s784 = smul.addr %s783, 8
        %s785 = scalar_lea.vmem [#allocation7], %s784
        %p786 = pneg %p168
        %p787 = pneg %p165
        %s788 = sand.u32 %s42, 1
        %s789 = scalar_lea.sflag [#allocation8], %s788
        %s790 = sand.u32 %s181, 1
        %s791 = smul.addr %s790, 8
        %s792 = scalar_lea.vmem [#allocation9], %s791
        %p793 = pneg %p194
        %p794 = pneg %p191
        %s795 = sand.u32 %s42, 1
        %s796 = scalar_lea.sflag [#allocation11], %s795
        %s797 = sand.u32 %s207, 1
        %s798 = smul.addr %s797, 320
        %s799 = scalar_lea.vmem [#allocation10], %s798
        %p800 = pneg %p220
        %p801 = pneg %p217
        %p802 = scmp.lt.s32.totalorder %s42, 1
        %s803 = scalar_select %p802, %s42, 1
        %s804 = smul.addr %s803, 2
        %s805 = scalar_lea.vmem %s8, %s804
        %p806 = pneg %p246
        %p807 = pneg %p243
        %s808 = sand.u32 %s42, 1
        %s809 = scalar_lea.sflag [#allocation11], %s808
        %s810 = sand.u32 %s259, 1
        %s811 = smul.addr %s810, 32
        %s812 = scalar_lea.vmem [#allocation12], %s811
        %p813 = pneg %p272
        %p814 = pneg %p269
        %p815 = scmp.lt.s32.totalorder %s42, 1
        %s816 = scalar_select %p815, %s42, 1
        %s817 = scalar_lea.vmem %s10, %s816
        %p818 = pneg %p298
        %p819 = pneg %p295
        %s820 = sand.u32 %s42, 1
        %s821 = scalar_lea.sflag [#allocation14], %s820
        %s822 = sand.u32 %s311, 1
        %s823 = smul.addr %s822, 32
        %s824 = scalar_lea.vmem [#allocation13], %s823
        %p825 = pneg %p324
        %p826 = pneg %p321
        %p827 = scmp.lt.s32.totalorder %s42, 1
        %s828 = scalar_select %p827, %s42, 1
        %s829 = scalar_lea.vmem %s12, %s828
        %p830 = pneg %p350
        %p831 = pneg %p347
        %s832 = sand.u32 %s42, 1
        %s833 = scalar_lea.sflag [#allocation14], %s832
        %s834 = sand.u32 %s363, 1
        %s835 = smul.addr %s834, 32
        %s836 = scalar_lea.vmem [#allocation15], %s835
        %p837 = pneg %p376
        %p838 = pneg %p373
        %p839 = scmp.lt.s32.totalorder %s42, 1
        %s840 = scalar_select %p839, %s42, 1
        %s841 = scalar_lea.vmem %s14, %s840
        %p842 = pneg %p402
        %p843 = pneg %p399
        %s844 = sand.u32 %s415, 1
        %s845 = scalar_lea.sflag [#allocation17], %s844
        %s846 = sand.u32 %s415, 1
        %s847 = smul.addr %s846, 32
        %s848 = scalar_lea.vmem [#allocation16], %s847
        %p849 = pneg %p428
        %p850 = pneg %p425
        %p851 = scmp.lt.s32.totalorder %s42, 1
        %s852 = scalar_select %p851, %s42, 1
        %s853 = scalar_lea.vmem %s16, %s852
        %p854 = pneg %p454
        %p855 = pneg %p451
        %p856 = pneg %p475
        %p857 = pneg %p472
        %p858 = scmp.lt.s32.totalorder %s42, 1
        %s859 = scalar_select %p858, %s42, 1
        %s860 = smul.addr %s859, 2
        %s861 = scalar_lea.vmem %s8, %s860
        %p862 = scmp.lt.s32.totalorder %s42, 1
        %s863 = scalar_select %p862, %s42, 1
        %s864 = scalar_lea.vmem %s10, %s863
        %p865 = scmp.lt.s32.totalorder %s42, 1
        %s866 = scalar_select %p865, %s42, 1
        %s867 = scalar_lea.vmem %s12, %s866
        %p868 = scmp.lt.s32.totalorder %s42, 1
        %s869 = scalar_select %p868, %s42, 1
        %s870 = scalar_lea.vmem %s14, %s869
        %p871 = scmp.lt.s32.totalorder %s42, 1
        %s872 = scalar_select %p871, %s42, 1
        %s873 = scalar_lea.vmem %s16, %s872
        %p874 = scmp.eq.s32.totalorder %s42, 0
        // Predicated region
        $region121: #{tpu_custom_call.1} parent=87 // pred_check
          %p875 = pneg %p874
        $region122: #{tpu_custom_call.1} parent=87 // pred_check_branch
          %877 = sbr.rel (%p875) target = $region124
        $region123: #{tpu_custom_call.1} parent=87 // pred_region
          %v878 = vld [vmem:[%s0] sm:$0xff]
          %v879 = vld [vmem:[%s0 + $0x8] sm:$0xff]
          %v880 = vld [vmem:[%s0 + $0x10] sm:$0xff]
          %v881 = vld [vmem:[%s0 + $0x18] sm:$0xff]
          %vm882 = vcmask 261120
          %883 = vst.msk [vmem:[#allocation18] sm:$0xff] %vm882, %v878
          %884 = vst.msk [vmem:[#allocation18 + $0x8] sm:$0xff] %vm882, %v879
          %885 = vst.msk [vmem:[#allocation18 + $0x10] sm:$0xff] %vm882, %v880
          %886 = vst.msk [vmem:[#allocation18 + $0x18] sm:$0xff] %vm882, %v881
        $region124: #{tpu_custom_call.1} parent=87 // pred_fallthru
          _
        %v887 = vld [vmem:[#allocation18] sm:$0xff]
        %v888 = vld [vmem:[#allocation18 + $0x8] sm:$0xff]
        %v889 = vld [vmem:[#allocation18 + $0x10] sm:$0xff]
        %v890 = vld [vmem:[#allocation18 + $0x18] sm:$0xff]
        %v891 = vld [vmem:[#allocation4] sm:$0xff]
        %v892 = vld [vmem:[#allocation4 + $0x8] sm:$0xff]
        %v893 = vld [vmem:[#allocation4 + $0x10] sm:$0xff]
        %v894 = vld [vmem:[#allocation4 + $0x18] sm:$0xff]
        %v895 = vadd.f32 %v887, %v891
        %v896 = vadd.f32 %v888, %v892
        %v897 = vadd.f32 %v889, %v893
        %v898 = vadd.f32 %v890, %v894
        %v899 = vld [vmem:[%s2] sm:$0xff]
        %v900 = vld [vmem:[%s2 + $0x8] sm:$0xff]
        %v901 = vld [vmem:[%s2 + $0x10] sm:$0xff]
        %v902 = vld [vmem:[%s2 + $0x18] sm:$0xff]
        %vm903 = vcmask 261120
        %904 = vst.msk [vmem:[#allocation3] sm:$0xff] %vm903, 0.0
        %905 = vst.msk [vmem:[#allocation3 + $0x8] sm:$0xff] %vm903, 0.0
        %vm906 = vcmask 257024
        %907 = vst.msk [vmem:[#allocation3 + $0x10] sm:$0xf] %vm906, 0.0
        %908 = vst.msk [vmem:[#allocation3 + $0x18] sm:$0xff] %vm903, 0.0
        %909 = vst.msk [vmem:[#allocation3 + $0x20] sm:$0xff] %vm903, 0.0
        %910 = vst.msk [vmem:[#allocation3 + $0x28] sm:$0xf] %vm906, 0.0
        %v911 = vld [vmem:[%s712] sm:$0x1]
        %v912 = vld [vmem:[%s721] sm:$0x1]
        %v913 = vsel %vm903, %v895, 0.0
        %914 = vadd.xlane.f32.xlu0 %v913
        %v915 = vpop.xlane.xlu0 %914
        %v916 = vsel %vm903, %v896, 0.0
        %917 = vadd.xlane.f32.xlu0 %v916
        %v918 = vpop.xlane.xlu0 %917
        %v919 = vsel %vm903, %v897, 0.0
        %920 = vadd.xlane.f32.xlu0 %v919
        %v921 = vpop.xlane.xlu0 %920
        %v922 = vsel %vm903, %v898, 0.0
        %923 = vadd.xlane.f32.xlu0 %v922
        %v924 = vpop.xlane.xlu0 %923
        %v925 = vrcp.pop 32.0
        %v926 = vmul.f32 %v915, %v925
        %v927 = vmul.f32 %v918, %v925
        %v928 = vmul.f32 %v921, %v925
        %v929 = vmul.f32 %v924, %v925
        %v930 = vsub.f32 %v895, %v926
        %v931 = vsub.f32 %v896, %v927
        %v932 = vsub.f32 %v897, %v928
        %v933 = vsub.f32 %v898, %v929
        %v934 = vmul.f32 %v930, %v930
        %v935 = vmul.f32 %v931, %v931
        %v936 = vmul.f32 %v932, %v932
        %v937 = vmul.f32 %v933, %v933
        %v938 = vsel %vm903, %v934, 0.0
        %939 = vadd.xlane.f32.xlu0 %v938
        %v940 = vpop.xlane.xlu0 %939
        %v941 = vsel %vm903, %v935, 0.0
        %942 = vadd.xlane.f32.xlu0 %v941
        %v943 = vpop.xlane.xlu0 %942
        %v944 = vsel %vm903, %v936, 0.0
        %945 = vadd.xlane.f32.xlu0 %v944
        %v946 = vpop.xlane.xlu0 %945
        %v947 = vsel %vm903, %v937, 0.0
        %948 = vadd.xlane.f32.xlu0 %v947
        %v949 = vpop.xlane.xlu0 %948
        %v950 = vmul.f32 %v940, %v925
        %v951 = vmul.f32 %v943, %v925
        %v952 = vmul.f32 %v946, %v925
        %v953 = vmul.f32 %v949, %v925
        %v954 = vadd.f32 %v950, 1e-05
        %v955 = vadd.f32 %v951, 1e-05
        %v956 = vadd.f32 %v952, 1e-05
        %v957 = vadd.f32 %v953, 1e-05
        %v958 = vrsqrt.pop %v954
        %v959 = vrsqrt.pop %v955
        %v960 = vrsqrt.pop %v956
        %v961 = vrsqrt.pop %v957
        %v962 = vmul.f32 %v930, %v958
        %v963 = vmul.f32 %v931, %v959
        %v964 = vmul.f32 %v932, %v960
        %v965 = vmul.f32 %v933, %v961
        %v967 = vlaneseq
        %v968 = vshrl.u32 %v967, 7
        %v969 = vsub.s32 0, %v968
        %v970 = vrot.slane %v911, %v969
        %v972 = vmul.f32 %v962, %v970
        %v973 = vmul.f32 %v963, %v970
        %v974 = vmul.f32 %v964, %v970
        %v975 = vmul.f32 %v965, %v970
        %v977 = vlaneseq
        %v978 = vshrl.u32 %v977, 7
        %v979 = vsub.s32 0, %v978
        %v980 = vrot.slane %v912, %v979
        %v982 = vadd.f32 %v972, %v980
        %v983 = vadd.f32 %v973, %v980
        %v984 = vadd.f32 %v974, %v980
        %v985 = vadd.f32 %v975, %v980
        %987 = vset.pattern.permute.xlu0 0
        %988 = vperm.xlu0 %987, %v899
        %v989 = vpop.permute.xlu0 %988
        %992 = vset.pattern.permute.xlu0 0
        %993 = vperm.xlu0 %992, %v900
        %v994 = vpop.permute.xlu0 %993
        %997 = vset.pattern.permute.xlu0 0
        %998 = vperm.xlu0 %997, %v901
        %v999 = vpop.permute.xlu0 %998
        %1002 = vset.pattern.permute.xlu0 0
        %1003 = vperm.xlu0 %1002, %v902
        %v1004 = vpop.permute.xlu0 %1003
        %v1006 = vmul.f32 %v982, %v989
        %v1007 = vmul.f32 %v983, %v994
        %v1008 = vmul.f32 %v984, %v999
        %v1009 = vmul.f32 %v985, %v1004
        %1010 = vst.msk [vmem:[#allocation3 + $0x2] sm:$0xff] %vm903, %v1006
        %1011 = vst.msk [vmem:[#allocation3 + $0xa] sm:$0xff] %vm903, %v1007
        %1012 = vst.msk [vmem:[#allocation3 + $0x1a] sm:$0xff] %vm903, %v1008
        %1013 = vst.msk [vmem:[#allocation3 + $0x22] sm:$0xff] %vm903, %v1009
        %v1014 = vld [vmem:[#allocation3] sm:$0xff]
        %v1015 = vld [vmem:[#allocation3 + $0x8] sm:$0xff]
        %v1016 = vld [vmem:[#allocation3 + $0x18] sm:$0xff]
        %v1017 = vld [vmem:[#allocation3 + $0x20] sm:$0xff]
        %v1018 = vld [vmem:[%s730] sm:$0xff]
        %v1019 = vld [vmem:[%s730 + $0x8] sm:$0xff]
        %v1020 = vld [vmem:[%s730 + $0x10] sm:$0xff]
        %v1021 = vld [vmem:[%s730 + $0x18] sm:$0xff]
        %v1022 = vld [vmem:[#allocation3 + $0x1] sm:$0xff]
        %v1023 = vld [vmem:[#allocation3 + $0x9] sm:$0xff]
        %v1024 = vld [vmem:[#allocation3 + $0x19] sm:$0xff]
        %v1025 = vld [vmem:[#allocation3 + $0x21] sm:$0xff]
        %s1026 = scalar_lea.vmem %s730, 32 [#allocation10]
        %v1027 = vld [vmem:[%s1026] sm:$0xff]
        %v1028 = vld [vmem:[%s1026 + $0x8] sm:$0xff]
        %v1029 = vld [vmem:[%s1026 + $0x10] sm:$0xff]
        %v1030 = vld [vmem:[%s1026 + $0x18] sm:$0xff]
        %v1032 = vsel %vm903, %v1022, 0
        %v1035 = vsel %vm903, %v1023, 0
        %v1038 = vsel %vm903, %v1024, 0
        %v1041 = vsel %vm903, %v1025, 0
        %1043 = vmatprep.subr.mxu0 0.0
        %1044 = vmatpush1.msra.mxu0 0.0
        %1045 = vmatprep.subr.mxu0 0.0
        %1046 = vmatpush1.msra.mxu0 0.0
        %1047 = vmatprep.subr.mxu0 0.0
        %1048 = vmatpush1.msra.mxu0 0.0
        %1049 = vmatprep.subr.mxu0 0.0
        %1050 = vmatpush1.msra.mxu0 0.0
        %1051 = vmatprep.subr.mxu0 0.0
        %1052 = vmatpush1.msra.mxu0 0.0
        %1053 = vmatprep.subr.mxu0 0.0
        %1054 = vmatpush1.msra.mxu0 0.0
        %1055 = vmatprep.subr.mxu0 0.0
        %1056 = vmatpush1.msra.mxu0 0.0
        %1057 = vmatprep.subr.mxu0 0.0
        %1058 = vmatpush1.msra.mxu0 0.0
        %1059 = vmatprep.subr.mxu0 0.0
        %1060 = vmatpush1.msra.mxu0 0.0
        %1061 = vmatprep.subr.mxu0 0.0
        %1062 = vmatpush1.msra.mxu0 0.0
        %1063 = vmatprep.subr.mxu0 0.0
        %1064 = vmatpush1.msra.mxu0 0.0
        %1065 = vmatprep.subr.mxu0 0.0
        %1066 = vmatpush1.msra.mxu0 0.0
        %1067 = vmatprep.subr.mxu0 0.0
        %1068 = vmatpush1.msra.mxu0 %v1030
        %1069 = vmatprep.subr.mxu0 0.0
        %1070 = vmatpush1.msra.mxu0 %v1029
        %1071 = vmatprep.subr.mxu0 0.0
        %1072 = vmatpush1.msra.mxu0 %v1028
        %1073 = vmatprep.subr.mxu0 0.0
        %1074 = vmatpush1.msra.mxu0 %v1027
        %1075 = vmatprep.subr.mxu0 0.0
        %1076 = vmatpush2.msra.mxu0 0.0
        %1077 = vmatprep.subr.mxu0 0.0
        %1078 = vmatpush2.msra.mxu0 0.0
        %1079 = vmatprep.subr.mxu0 0.0
        %1080 = vmatpush2.msra.mxu0 0.0
        %1081 = vmatprep.subr.mxu0 0.0
        %1082 = vmatpush2.msra.mxu0 0.0
        %1083 = vmatprep.subr.mxu0 0.0
        %1084 = vmatpush2.msra.mxu0 0.0
        %1085 = vmatprep.subr.mxu0 0.0
        %1086 = vmatpush2.msra.mxu0 0.0
        %1087 = vmatprep.subr.mxu0 0.0
        %1088 = vmatpush2.msra.mxu0 0.0
        %1089 = vmatprep.subr.mxu0 0.0
        %1090 = vmatpush2.msra.mxu0 0.0
        %1091 = vmatprep.subr.mxu0 0.0
        %1092 = vmatpush2.msra.mxu0 0.0
        %1093 = vmatprep.subr.mxu0 0.0
        %1094 = vmatpush2.msra.mxu0 0.0
        %1095 = vmatprep.subr.mxu0 0.0
        %1096 = vmatpush2.msra.mxu0 0.0
        %1097 = vmatprep.subr.mxu0 0.0
        %1098 = vmatpush2.msra.mxu0 0.0
        %1099 = vmatprep.subr.mxu0 0.0
        %1100 = vmatpush2.msra.mxu0 0.0
        %1101 = vmatprep.subr.mxu0 0.0
        %1102 = vmatpush2.msra.mxu0 0.0
        %1103 = vmatprep.subr.mxu0 0.0
        %1104 = vmatpush2.msra.mxu0 0.0
        %1105 = vmatprep.subr.mxu0 0.0
        %1106 = vmatpush2.msra.mxu0 0.0
        %1107 = vmatprep.mubr.f32.mxu0 0.0
        %1108 = vmatmul.mubr.f32.gmra.mxu0 %v1032
        %v1109 = vpop.f32.mrf.mxu0
        %v1110 = vadd.f32 0.0, %v1109
        %v1111 = vpop.f32.mrf.mxu0
        %1112 = vmatprep.mubr.f32.mxu0 0.0
        %1113 = vmatmul.mubr.f32.gmra.mxu0 %v1035
        %v1114 = vpop.f32.mrf.mxu0
        %v1115 = vadd.f32 0.0, %v1114
        %v1116 = vpop.f32.mrf.mxu0
        %1117 = vmatprep.mubr.f32.mxu0 0.0
        %1118 = vmatmul.mubr.f32.gmra.mxu0 %v1038
        %v1119 = vpop.f32.mrf.mxu0
        %v1120 = vadd.f32 0.0, %v1119
        %v1121 = vpop.f32.mrf.mxu0
        %1122 = vmatprep.mubr.f32.mxu0 0.0
        %1123 = vmatmul.mubr.f32.gmra.mxu0 %v1041
        %v1124 = vpop.f32.mrf.mxu0
        %v1125 = vadd.f32 0.0, %v1124
        %v1126 = vpop.f32.mrf.mxu0
        %1127 = vdwg.mxu0
        %v1129 = vsel %vm903, %v1014, 0
        %v1132 = vsel %vm903, %v1015, 0
        %v1135 = vsel %vm903, %v1016, 0
        %v1138 = vsel %vm903, %v1017, 0
        %1140 = vmatprep.subr.mxu0 0.0
        %1141 = vmatpush1.msra.mxu0 0.0
        %1142 = vmatprep.subr.mxu0 0.0
        %1143 = vmatpush1.msra.mxu0 0.0
        %1144 = vmatprep.subr.mxu0 0.0
        %1145 = vmatpush1.msra.mxu0 0.0
        %1146 = vmatprep.subr.mxu0 0.0
        %1147 = vmatpush1.msra.mxu0 0.0
        %1148 = vmatprep.subr.mxu0 0.0
        %1149 = vmatpush1.msra.mxu0 0.0
        %1150 = vmatprep.subr.mxu0 0.0
        %1151 = vmatpush1.msra.mxu0 0.0
        %1152 = vmatprep.subr.mxu0 0.0
        %1153 = vmatpush1.msra.mxu0 0.0
        %1154 = vmatprep.subr.mxu0 0.0
        %1155 = vmatpush1.msra.mxu0 0.0
        %1156 = vmatprep.subr.mxu0 0.0
        %1157 = vmatpush1.msra.mxu0 0.0
        %1158 = vmatprep.subr.mxu0 0.0
        %1159 = vmatpush1.msra.mxu0 0.0
        %1160 = vmatprep.subr.mxu0 0.0
        %1161 = vmatpush1.msra.mxu0 0.0
        %1162 = vmatprep.subr.mxu0 0.0
        %1163 = vmatpush1.msra.mxu0 0.0
        %1164 = vmatprep.subr.mxu0 0.0
        %1165 = vmatpush1.msra.mxu0 %v1021
        %1166 = vmatprep.subr.mxu0 0.0
        %1167 = vmatpush1.msra.mxu0 %v1020
        %1168 = vmatprep.subr.mxu0 0.0
        %1169 = vmatpush1.msra.mxu0 %v1019
        %1170 = vmatprep.subr.mxu0 0.0
        %1171 = vmatpush1.msra.mxu0 %v1018
        %1172 = vmatprep.subr.mxu0 0.0
        %1173 = vmatpush2.msra.mxu0 0.0
        %1174 = vmatprep.subr.mxu0 0.0
        %1175 = vmatpush2.msra.mxu0 0.0
        %1176 = vmatprep.subr.mxu0 0.0
        %1177 = vmatpush2.msra.mxu0 0.0
        %1178 = vmatprep.subr.mxu0 0.0
        %1179 = vmatpush2.msra.mxu0 0.0
        %1180 = vmatprep.subr.mxu0 0.0
        %1181 = vmatpush2.msra.mxu0 0.0
        %1182 = vmatprep.subr.mxu0 0.0
        %1183 = vmatpush2.msra.mxu0 0.0
        %1184 = vmatprep.subr.mxu0 0.0
        %1185 = vmatpush2.msra.mxu0 0.0
        %1186 = vmatprep.subr.mxu0 0.0
        %1187 = vmatpush2.msra.mxu0 0.0
        %1188 = vmatprep.subr.mxu0 0.0
        %1189 = vmatpush2.msra.mxu0 0.0
        %1190 = vmatprep.subr.mxu0 0.0
        %1191 = vmatpush2.msra.mxu0 0.0
        %1192 = vmatprep.subr.mxu0 0.0
        %1193 = vmatpush2.msra.mxu0 0.0
        %1194 = vmatprep.subr.mxu0 0.0
        %1195 = vmatpush2.msra.mxu0 0.0
        %1196 = vmatprep.subr.mxu0 0.0
        %1197 = vmatpush2.msra.mxu0 0.0
        %1198 = vmatprep.subr.mxu0 0.0
        %1199 = vmatpush2.msra.mxu0 0.0
        %1200 = vmatprep.subr.mxu0 0.0
        %1201 = vmatpush2.msra.mxu0 0.0
        %1202 = vmatprep.subr.mxu0 0.0
        %1203 = vmatpush2.msra.mxu0 0.0
        %1204 = vmatprep.mubr.f32.mxu0 0.0
        %1205 = vmatmul.mubr.f32.gmra.mxu0 %v1129
        %v1206 = vpop.f32.mrf.mxu0
        %v1207 = vadd.f32 %v1110, %v1206
        %v1208 = vpop.f32.mrf.mxu0
        %1209 = vmatprep.mubr.f32.mxu0 0.0
        %1210 = vmatmul.mubr.f32.gmra.mxu0 %v1132
        %v1211 = vpop.f32.mrf.mxu0
        %v1212 = vadd.f32 %v1115, %v1211
        %v1213 = vpop.f32.mrf.mxu0
        %1214 = vmatprep.mubr.f32.mxu0 0.0
        %1215 = vmatmul.mubr.f32.gmra.mxu0 %v1135
        %v1216 = vpop.f32.mrf.mxu0
        %v1217 = vadd.f32 %v1120, %v1216
        %v1218 = vpop.f32.mrf.mxu0
        %1219 = vmatprep.mubr.f32.mxu0 0.0
        %1220 = vmatmul.mubr.f32.gmra.mxu0 %v1138
        %v1221 = vpop.f32.mrf.mxu0
        %v1222 = vadd.f32 %v1125, %v1221
        %v1223 = vpop.f32.mrf.mxu0
        %1224 = vdwg.mxu0
        %v1225 = vld [vmem:[#allocation3 + $0x2] sm:$0xff]
        %v1226 = vld [vmem:[#allocation3 + $0xa] sm:$0xff]
        %v1227 = vld [vmem:[#allocation3 + $0x1a] sm:$0xff]
        %v1228 = vld [vmem:[#allocation3 + $0x22] sm:$0xff]
        %s1229 = scalar_lea.vmem %s730, 64 [#allocation10]
        %v1230 = vld [vmem:[%s1229] sm:$0xff]
        %v1231 = vld [vmem:[%s1229 + $0x8] sm:$0xff]
        %v1232 = vld [vmem:[%s1229 + $0x10] sm:$0xff]
        %v1233 = vld [vmem:[%s1229 + $0x18] sm:$0xff]
        %v1235 = vsel %vm903, %v1225, 0
        %v1238 = vsel %vm903, %v1226, 0
        %v1241 = vsel %vm903, %v1227, 0
        %v1244 = vsel %vm903, %v1228, 0
        %1246 = vmatprep.subr.mxu0 0.0
        %1247 = vmatpush1.msra.mxu0 0.0
        %1248 = vmatprep.subr.mxu0 0.0
        %1249 = vmatpush1.msra.mxu0 0.0
        %1250 = vmatprep.subr.mxu0 0.0
        %1251 = vmatpush1.msra.mxu0 0.0
        %1252 = vmatprep.subr.mxu0 0.0
        %1253 = vmatpush1.msra.mxu0 0.0
        %1254 = vmatprep.subr.mxu0 0.0
        %1255 = vmatpush1.msra.mxu0 0.0
        %1256 = vmatprep.subr.mxu0 0.0
        %1257 = vmatpush1.msra.mxu0 0.0
        %1258 = vmatprep.subr.mxu0 0.0
        %1259 = vmatpush1.msra.mxu0 0.0
        %1260 = vmatprep.subr.mxu0 0.0
        %1261 = vmatpush1.msra.mxu0 0.0
        %1262 = vmatprep.subr.mxu0 0.0
        %1263 = vmatpush1.msra.mxu0 0.0
        %1264 = vmatprep.subr.mxu0 0.0
        %1265 = vmatpush1.msra.mxu0 0.0
        %1266 = vmatprep.subr.mxu0 0.0
        %1267 = vmatpush1.msra.mxu0 0.0
        %1268 = vmatprep.subr.mxu0 0.0
        %1269 = vmatpush1.msra.mxu0 0.0
        %1270 = vmatprep.subr.mxu0 0.0
        %1271 = vmatpush1.msra.mxu0 %v1233
        %1272 = vmatprep.subr.mxu0 0.0
        %1273 = vmatpush1.msra.mxu0 %v1232
        %1274 = vmatprep.subr.mxu0 0.0
        %1275 = vmatpush1.msra.mxu0 %v1231
        %1276 = vmatprep.subr.mxu0 0.0
        %1277 = vmatpush1.msra.mxu0 %v1230
        %1278 = vmatprep.subr.mxu0 0.0
        %1279 = vmatpush2.msra.mxu0 0.0
        %1280 = vmatprep.subr.mxu0 0.0
        %1281 = vmatpush2.msra.mxu0 0.0
        %1282 = vmatprep.subr.mxu0 0.0
        %1283 = vmatpush2.msra.mxu0 0.0
        %1284 = vmatprep.subr.mxu0 0.0
        %1285 = vmatpush2.msra.mxu0 0.0
        %1286 = vmatprep.subr.mxu0 0.0
        %1287 = vmatpush2.msra.mxu0 0.0
        %1288 = vmatprep.subr.mxu0 0.0
        %1289 = vmatpush2.msra.mxu0 0.0
        %1290 = vmatprep.subr.mxu0 0.0
        %1291 = vmatpush2.msra.mxu0 0.0
        %1292 = vmatprep.subr.mxu0 0.0
        %1293 = vmatpush2.msra.mxu0 0.0
        %1294 = vmatprep.subr.mxu0 0.0
        %1295 = vmatpush2.msra.mxu0 0.0
        %1296 = vmatprep.subr.mxu0 0.0
        %1297 = vmatpush2.msra.mxu0 0.0
        %1298 = vmatprep.subr.mxu0 0.0
        %1299 = vmatpush2.msra.mxu0 0.0
        %1300 = vmatprep.subr.mxu0 0.0
        %1301 = vmatpush2.msra.mxu0 0.0
        %1302 = vmatprep.subr.mxu0 0.0
        %1303 = vmatpush2.msra.mxu0 0.0
        %1304 = vmatprep.subr.mxu0 0.0
        %1305 = vmatpush2.msra.mxu0 0.0
        %1306 = vmatprep.subr.mxu0 0.0
        %1307 = vmatpush2.msra.mxu0 0.0
        %1308 = vmatprep.subr.mxu0 0.0
        %1309 = vmatpush2.msra.mxu0 0.0
        %1310 = vmatprep.mubr.f32.mxu0 0.0
        %1311 = vmatmul.mubr.f32.gmra.mxu0 %v1235
        %v1312 = vpop.f32.mrf.mxu0
        %v1313 = vadd.f32 0.0, %v1312
        %v1314 = vpop.f32.mrf.mxu0
        %1315 = vmatprep.mubr.f32.mxu0 0.0
        %1316 = vmatmul.mubr.f32.gmra.mxu0 %v1238
        %v1317 = vpop.f32.mrf.mxu0
        %v1318 = vadd.f32 0.0, %v1317
        %v1319 = vpop.f32.mrf.mxu0
        %1320 = vmatprep.mubr.f32.mxu0 0.0
        %1321 = vmatmul.mubr.f32.gmra.mxu0 %v1241
        %v1322 = vpop.f32.mrf.mxu0
        %v1323 = vadd.f32 0.0, %v1322
        %v1324 = vpop.f32.mrf.mxu0
        %1325 = vmatprep.mubr.f32.mxu0 0.0
        %1326 = vmatmul.mubr.f32.gmra.mxu0 %v1244
        %v1327 = vpop.f32.mrf.mxu0
        %v1328 = vadd.f32 0.0, %v1327
        %v1329 = vpop.f32.mrf.mxu0
        %1330 = vdwg.mxu0
        %v1331 = vadd.f32 %v1207, %v1313
        %v1332 = vadd.f32 %v1212, %v1318
        %v1333 = vadd.f32 %v1217, %v1323
        %v1334 = vadd.f32 %v1222, %v1328
        %v1335 = vld [vmem:[#allocation3 + $0x3] sm:$0xff]
        %v1336 = vld [vmem:[#allocation3 + $0xb] sm:$0xff]
        %v1337 = vld [vmem:[#allocation3 + $0x1b] sm:$0xff]
        %v1338 = vld [vmem:[#allocation3 + $0x23] sm:$0xff]
        %s1339 = scalar_lea.vmem %s730, 96 [#allocation10]
        %v1340 = vld [vmem:[%s1339] sm:$0xff]
        %v1341 = vld [vmem:[%s1339 + $0x8] sm:$0xff]
        %v1342 = vld [vmem:[%s1339 + $0x10] sm:$0xff]
        %v1343 = vld [vmem:[%s1339 + $0x18] sm:$0xff]
        %v1345 = vsel %vm903, %v1335, 0
        %v1348 = vsel %vm903, %v1336, 0
        %v1351 = vsel %vm903, %v1337, 0
        %v1354 = vsel %vm903, %v1338, 0
        %1356 = vmatprep.subr.mxu0 0.0
        %1357 = vmatpush1.msra.mxu0 0.0
        %1358 = vmatprep.subr.mxu0 0.0
        %1359 = vmatpush1.msra.mxu0 0.0
        %1360 = vmatprep.subr.mxu0 0.0
        %1361 = vmatpush1.msra.mxu0 0.0
        %1362 = vmatprep.subr.mxu0 0.0
        %1363 = vmatpush1.msra.mxu0 0.0
        %1364 = vmatprep.subr.mxu0 0.0
        %1365 = vmatpush1.msra.mxu0 0.0
        %1366 = vmatprep.subr.mxu0 0.0
        %1367 = vmatpush1.msra.mxu0 0.0
        %1368 = vmatprep.subr.mxu0 0.0
        %1369 = vmatpush1.msra.mxu0 0.0
        %1370 = vmatprep.subr.mxu0 0.0
        %1371 = vmatpush1.msra.mxu0 0.0
        %1372 = vmatprep.subr.mxu0 0.0
        %1373 = vmatpush1.msra.mxu0 0.0
        %1374 = vmatprep.subr.mxu0 0.0
        %1375 = vmatpush1.msra.mxu0 0.0
        %1376 = vmatprep.subr.mxu0 0.0
        %1377 = vmatpush1.msra.mxu0 0.0
        %1378 = vmatprep.subr.mxu0 0.0
        %1379 = vmatpush1.msra.mxu0 0.0
        %1380 = vmatprep.subr.mxu0 0.0
        %1381 = vmatpush1.msra.mxu0 %v1343
        %1382 = vmatprep.subr.mxu0 0.0
        %1383 = vmatpush1.msra.mxu0 %v1342
        %1384 = vmatprep.subr.mxu0 0.0
        %1385 = vmatpush1.msra.mxu0 %v1341
        %1386 = vmatprep.subr.mxu0 0.0
        %1387 = vmatpush1.msra.mxu0 %v1340
        %1388 = vmatprep.subr.mxu0 0.0
        %1389 = vmatpush2.msra.mxu0 0.0
        %1390 = vmatprep.subr.mxu0 0.0
        %1391 = vmatpush2.msra.mxu0 0.0
        %1392 = vmatprep.subr.mxu0 0.0
        %1393 = vmatpush2.msra.mxu0 0.0
        %1394 = vmatprep.subr.mxu0 0.0
        %1395 = vmatpush2.msra.mxu0 0.0
        %1396 = vmatprep.subr.mxu0 0.0
        %1397 = vmatpush2.msra.mxu0 0.0
        %1398 = vmatprep.subr.mxu0 0.0
        %1399 = vmatpush2.msra.mxu0 0.0
        %1400 = vmatprep.subr.mxu0 0.0
        %1401 = vmatpush2.msra.mxu0 0.0
        %1402 = vmatprep.subr.mxu0 0.0
        %1403 = vmatpush2.msra.mxu0 0.0
        %1404 = vmatprep.subr.mxu0 0.0
        %1405 = vmatpush2.msra.mxu0 0.0
        %1406 = vmatprep.subr.mxu0 0.0
        %1407 = vmatpush2.msra.mxu0 0.0
        %1408 = vmatprep.subr.mxu0 0.0
        %1409 = vmatpush2.msra.mxu0 0.0
        %1410 = vmatprep.subr.mxu0 0.0
        %1411 = vmatpush2.msra.mxu0 0.0
        %1412 = vmatprep.subr.mxu0 0.0
        %1413 = vmatpush2.msra.mxu0 0.0
        %1414 = vmatprep.subr.mxu0 0.0
        %1415 = vmatpush2.msra.mxu0 0.0
        %1416 = vmatprep.subr.mxu0 0.0
        %1417 = vmatpush2.msra.mxu0 0.0
        %1418 = vmatprep.subr.mxu0 0.0
        %1419 = vmatpush2.msra.mxu0 0.0
        %1420 = vmatprep.mubr.f32.mxu0 0.0
        %1421 = vmatmul.mubr.f32.gmra.mxu0 %v1345
        %v1422 = vpop.f32.mrf.mxu0
        %v1423 = vadd.f32 0.0, %v1422
        %v1424 = vpop.f32.mrf.mxu0
        %1425 = vmatprep.mubr.f32.mxu0 0.0
        %1426 = vmatmul.mubr.f32.gmra.mxu0 %v1348
        %v1427 = vpop.f32.mrf.mxu0
        %v1428 = vadd.f32 0.0, %v1427
        %v1429 = vpop.f32.mrf.mxu0
        %1430 = vmatprep.mubr.f32.mxu0 0.0
        %1431 = vmatmul.mubr.f32.gmra.mxu0 %v1351
        %v1432 = vpop.f32.mrf.mxu0
        %v1433 = vadd.f32 0.0, %v1432
        %v1434 = vpop.f32.mrf.mxu0
        %1435 = vmatprep.mubr.f32.mxu0 0.0
        %1436 = vmatmul.mubr.f32.gmra.mxu0 %v1354
        %v1437 = vpop.f32.mrf.mxu0
        %v1438 = vadd.f32 0.0, %v1437
        %v1439 = vpop.f32.mrf.mxu0
        %1440 = vdwg.mxu0
        %v1441 = vadd.f32 %v1331, %v1423
        %v1442 = vadd.f32 %v1332, %v1428
        %v1443 = vadd.f32 %v1333, %v1433
        %v1444 = vadd.f32 %v1334, %v1438
        %v1445 = vld [vmem:[#allocation3 + $0x4] sm:$0xff]
        %v1446 = vld [vmem:[#allocation3 + $0xc] sm:$0xff]
        %v1447 = vld [vmem:[#allocation3 + $0x1c] sm:$0xff]
        %v1448 = vld [vmem:[#allocation3 + $0x24] sm:$0xff]
        %s1449 = scalar_lea.vmem %s730, 128 [#allocation10]
        %v1450 = vld [vmem:[%s1449] sm:$0xff]
        %v1451 = vld [vmem:[%s1449 + $0x8] sm:$0xff]
        %v1452 = vld [vmem:[%s1449 + $0x10] sm:$0xff]
        %v1453 = vld [vmem:[%s1449 + $0x18] sm:$0xff]
        %v1455 = vsel %vm903, %v1445, 0
        %v1458 = vsel %vm903, %v1446, 0
        %v1461 = vsel %vm903, %v1447, 0
        %v1464 = vsel %vm903, %v1448, 0
        %1466 = vmatprep.subr.mxu0 0.0
        %1467 = vmatpush1.msra.mxu0 0.0
        %1468 = vmatprep.subr.mxu0 0.0
        %1469 = vmatpush1.msra.mxu0 0.0
        %1470 = vmatprep.subr.mxu0 0.0
        %1471 = vmatpush1.msra.mxu0 0.0
        %1472 = vmatprep.subr.mxu0 0.0
        %1473 = vmatpush1.msra.mxu0 0.0
        %1474 = vmatprep.subr.mxu0 0.0
        %1475 = vmatpush1.msra.mxu0 0.0
        %1476 = vmatprep.subr.mxu0 0.0
        %1477 = vmatpush1.msra.mxu0 0.0
        %1478 = vmatprep.subr.mxu0 0.0
        %1479 = vmatpush1.msra.mxu0 0.0
        %1480 = vmatprep.subr.mxu0 0.0
        %1481 = vmatpush1.msra.mxu0 0.0
        %1482 = vmatprep.subr.mxu0 0.0
        %1483 = vmatpush1.msra.mxu0 0.0
        %1484 = vmatprep.subr.mxu0 0.0
        %1485 = vmatpush1.msra.mxu0 0.0
        %1486 = vmatprep.subr.mxu0 0.0
        %1487 = vmatpush1.msra.mxu0 0.0
        %1488 = vmatprep.subr.mxu0 0.0
        %1489 = vmatpush1.msra.mxu0 0.0
        %1490 = vmatprep.subr.mxu0 0.0
        %1491 = vmatpush1.msra.mxu0 %v1453
        %1492 = vmatprep.subr.mxu0 0.0
        %1493 = vmatpush1.msra.mxu0 %v1452
        %1494 = vmatprep.subr.mxu0 0.0
        %1495 = vmatpush1.msra.mxu0 %v1451
        %1496 = vmatprep.subr.mxu0 0.0
        %1497 = vmatpush1.msra.mxu0 %v1450
        %1498 = vmatprep.subr.mxu0 0.0
        %1499 = vmatpush2.msra.mxu0 0.0
        %1500 = vmatprep.subr.mxu0 0.0
        %1501 = vmatpush2.msra.mxu0 0.0
        %1502 = vmatprep.subr.mxu0 0.0
        %1503 = vmatpush2.msra.mxu0 0.0
        %1504 = vmatprep.subr.mxu0 0.0
        %1505 = vmatpush2.msra.mxu0 0.0
        %1506 = vmatprep.subr.mxu0 0.0
        %1507 = vmatpush2.msra.mxu0 0.0
        %1508 = vmatprep.subr.mxu0 0.0
        %1509 = vmatpush2.msra.mxu0 0.0
        %1510 = vmatprep.subr.mxu0 0.0
        %1511 = vmatpush2.msra.mxu0 0.0
        %1512 = vmatprep.subr.mxu0 0.0
        %1513 = vmatpush2.msra.mxu0 0.0
        %1514 = vmatprep.subr.mxu0 0.0
        %1515 = vmatpush2.msra.mxu0 0.0
        %1516 = vmatprep.subr.mxu0 0.0
        %1517 = vmatpush2.msra.mxu0 0.0
        %1518 = vmatprep.subr.mxu0 0.0
        %1519 = vmatpush2.msra.mxu0 0.0
        %1520 = vmatprep.subr.mxu0 0.0
        %1521 = vmatpush2.msra.mxu0 0.0
        %1522 = vmatprep.subr.mxu0 0.0
        %1523 = vmatpush2.msra.mxu0 0.0
        %1524 = vmatprep.subr.mxu0 0.0
        %1525 = vmatpush2.msra.mxu0 0.0
        %1526 = vmatprep.subr.mxu0 0.0
        %1527 = vmatpush2.msra.mxu0 0.0
        %1528 = vmatprep.subr.mxu0 0.0
        %1529 = vmatpush2.msra.mxu0 0.0
        %1530 = vmatprep.mubr.f32.mxu0 0.0
        %1531 = vmatmul.mubr.f32.gmra.mxu0 %v1455
        %v1532 = vpop.f32.mrf.mxu0
        %v1533 = vadd.f32 0.0, %v1532
        %v1534 = vpop.f32.mrf.mxu0
        %1535 = vmatprep.mubr.f32.mxu0 0.0
        %1536 = vmatmul.mubr.f32.gmra.mxu0 %v1458
        %v1537 = vpop.f32.mrf.mxu0
        %v1538 = vadd.f32 0.0, %v1537
        %v1539 = vpop.f32.mrf.mxu0
        %1540 = vmatprep.mubr.f32.mxu0 0.0
        %1541 = vmatmul.mubr.f32.gmra.mxu0 %v1461
        %v1542 = vpop.f32.mrf.mxu0
        %v1543 = vadd.f32 0.0, %v1542
        %v1544 = vpop.f32.mrf.mxu0
        %1545 = vmatprep.mubr.f32.mxu0 0.0
        %1546 = vmatmul.mubr.f32.gmra.mxu0 %v1464
        %v1547 = vpop.f32.mrf.mxu0
        %v1548 = vadd.f32 0.0, %v1547
        %v1549 = vpop.f32.mrf.mxu0
        %1550 = vdwg.mxu0
        %v1551 = vadd.f32 %v1441, %v1533
        %v1552 = vadd.f32 %v1442, %v1538
        %v1553 = vadd.f32 %v1443, %v1543
        %v1554 = vadd.f32 %v1444, %v1548
        %v1555 = vld [vmem:[%s861] sm:$0x1]
        %v1557 = vlaneseq
        %v1558 = vshrl.u32 %v1557, 7
        %v1559 = vsub.s32 0, %v1558
        %v1560 = vrot.slane %v1555, %v1559
        %v1562 = vadd.f32 %v1551, %v1560
        %v1563 = vadd.f32 %v1552, %v1560
        %v1564 = vadd.f32 %v1553, %v1560
        %v1565 = vadd.f32 %v1554, %v1560
        %s1566 = scalar_lea.vmem %s712, 1 [#allocation7]
        %v1567 = vld [vmem:[%s1566] sm:$0x1]
        %s1568 = scalar_lea.vmem %s721, 1 [#allocation9]
        %v1569 = vld [vmem:[%s1568] sm:$0x1]
        %v1570 = vsel %vm903, %v1562, 0.0
        %1571 = vadd.xlane.f32.xlu0 %v1570
        %v1572 = vpop.xlane.xlu0 %1571
        %v1573 = vsel %vm903, %v1563, 0.0
        %1574 = vadd.xlane.f32.xlu0 %v1573
        %v1575 = vpop.xlane.xlu0 %1574
        %v1576 = vsel %vm903, %v1564, 0.0
        %1577 = vadd.xlane.f32.xlu0 %v1576
        %v1578 = vpop.xlane.xlu0 %1577
        %v1579 = vsel %vm903, %v1565, 0.0
        %1580 = vadd.xlane.f32.xlu0 %v1579
        %v1581 = vpop.xlane.xlu0 %1580
        %v1582 = vmul.f32 %v1572, %v925
        %v1583 = vmul.f32 %v1575, %v925
        %v1584 = vmul.f32 %v1578, %v925
        %v1585 = vmul.f32 %v1581, %v925
        %v1586 = vsub.f32 %v1562, %v1582
        %v1587 = vsub.f32 %v1563, %v1583
        %v1588 = vsub.f32 %v1564, %v1584
        %v1589 = vsub.f32 %v1565, %v1585
        %v1590 = vmul.f32 %v1586, %v1586
        %v1591 = vmul.f32 %v1587, %v1587
        %v1592 = vmul.f32 %v1588, %v1588
        %v1593 = vmul.f32 %v1589, %v1589
        %v1594 = vsel %vm903, %v1590, 0.0
        %1595 = vadd.xlane.f32.xlu0 %v1594
        %v1596 = vpop.xlane.xlu0 %1595
        %v1597 = vsel %vm903, %v1591, 0.0
        %1598 = vadd.xlane.f32.xlu0 %v1597
        %v1599 = vpop.xlane.xlu0 %1598
        %v1600 = vsel %vm903, %v1592, 0.0
        %1601 = vadd.xlane.f32.xlu0 %v1600
        %v1602 = vpop.xlane.xlu0 %1601
        %v1603 = vsel %vm903, %v1593, 0.0
        %1604 = vadd.xlane.f32.xlu0 %v1603
        %v1605 = vpop.xlane.xlu0 %1604
        %v1606 = vmul.f32 %v1596, %v925
        %v1607 = vmul.f32 %v1599, %v925
        %v1608 = vmul.f32 %v1602, %v925
        %v1609 = vmul.f32 %v1605, %v925
        %v1610 = vadd.f32 %v1606, 1e-05
        %v1611 = vadd.f32 %v1607, 1e-05
        %v1612 = vadd.f32 %v1608, 1e-05
        %v1613 = vadd.f32 %v1609, 1e-05
        %v1614 = vrsqrt.pop %v1610
        %v1615 = vrsqrt.pop %v1611
        %v1616 = vrsqrt.pop %v1612
        %v1617 = vrsqrt.pop %v1613
        %v1618 = vmul.f32 %v1586, %v1614
        %v1619 = vmul.f32 %v1587, %v1615
        %v1620 = vmul.f32 %v1588, %v1616
        %v1621 = vmul.f32 %v1589, %v1617
        %v1623 = vlaneseq
        %v1624 = vshrl.u32 %v1623, 7
        %v1625 = vsub.s32 0, %v1624
        %v1626 = vrot.slane %v1567, %v1625
        %v1628 = vmul.f32 %v1618, %v1626
        %v1629 = vmul.f32 %v1619, %v1626
        %v1630 = vmul.f32 %v1620, %v1626
        %v1631 = vmul.f32 %v1621, %v1626
        %v1633 = vlaneseq
        %v1634 = vshrl.u32 %v1633, 7
        %v1635 = vsub.s32 0, %v1634
        %v1636 = vrot.slane %v1569, %v1635
        %v1638 = vadd.f32 %v1628, %v1636
        %v1639 = vadd.f32 %v1629, %v1636
        %v1640 = vadd.f32 %v1630, %v1636
        %v1641 = vadd.f32 %v1631, %v1636
        %v1642 = vmul.f32 %v1638, 0.5
        %v1643 = vmul.f32 %v1639, 0.5
        %v1644 = vmul.f32 %v1640, 0.5
        %v1645 = vmul.f32 %v1641, 0.5
        %v1646 = vadd.f32 %v895, %v1642
        %v1647 = vadd.f32 %v896, %v1643
        %v1648 = vadd.f32 %v897, %v1644
        %v1649 = vadd.f32 %v898, %v1645
        %s1650 = scalar_lea.vmem %s712, 2 [#allocation7]
        %v1651 = vld [vmem:[%s1650] sm:$0x1]
        %s1652 = scalar_lea.vmem %s721, 2 [#allocation9]
        %v1653 = vld [vmem:[%s1652] sm:$0x1]
        %v1654 = vsel %vm903, %v1646, 0.0
        %1655 = vadd.xlane.f32.xlu0 %v1654
        %v1656 = vpop.xlane.xlu0 %1655
        %v1657 = vsel %vm903, %v1647, 0.0
        %1658 = vadd.xlane.f32.xlu0 %v1657
        %v1659 = vpop.xlane.xlu0 %1658
        %v1660 = vsel %vm903, %v1648, 0.0
        %1661 = vadd.xlane.f32.xlu0 %v1660
        %v1662 = vpop.xlane.xlu0 %1661
        %v1663 = vsel %vm903, %v1649, 0.0
        %1664 = vadd.xlane.f32.xlu0 %v1663
        %v1665 = vpop.xlane.xlu0 %1664
        %v1666 = vmul.f32 %v1656, %v925
        %v1667 = vmul.f32 %v1659, %v925
        %v1668 = vmul.f32 %v1662, %v925
        %v1669 = vmul.f32 %v1665, %v925
        %v1670 = vsub.f32 %v1646, %v1666
        %v1671 = vsub.f32 %v1647, %v1667
        %v1672 = vsub.f32 %v1648, %v1668
        %v1673 = vsub.f32 %v1649, %v1669
        %v1674 = vmul.f32 %v1670, %v1670
        %v1675 = vmul.f32 %v1671, %v1671
        %v1676 = vmul.f32 %v1672, %v1672
        %v1677 = vmul.f32 %v1673, %v1673
        %v1678 = vsel %vm903, %v1674, 0.0
        %1679 = vadd.xlane.f32.xlu0 %v1678
        %v1680 = vpop.xlane.xlu0 %1679
        %v1681 = vsel %vm903, %v1675, 0.0
        %1682 = vadd.xlane.f32.xlu0 %v1681
        %v1683 = vpop.xlane.xlu0 %1682
        %v1684 = vsel %vm903, %v1676, 0.0
        %1685 = vadd.xlane.f32.xlu0 %v1684
        %v1686 = vpop.xlane.xlu0 %1685
        %v1687 = vsel %vm903, %v1677, 0.0
        %1688 = vadd.xlane.f32.xlu0 %v1687
        %v1689 = vpop.xlane.xlu0 %1688
        %v1690 = vmul.f32 %v1680, %v925
        %v1691 = vmul.f32 %v1683, %v925
        %v1692 = vmul.f32 %v1686, %v925
        %v1693 = vmul.f32 %v1689, %v925
        %v1694 = vadd.f32 %v1690, 1e-05
        %v1695 = vadd.f32 %v1691, 1e-05
        %v1696 = vadd.f32 %v1692, 1e-05
        %v1697 = vadd.f32 %v1693, 1e-05
        %v1698 = vrsqrt.pop %v1694
        %v1699 = vrsqrt.pop %v1695
        %v1700 = vrsqrt.pop %v1696
        %v1701 = vrsqrt.pop %v1697
        %v1702 = vmul.f32 %v1670, %v1698
        %v1703 = vmul.f32 %v1671, %v1699
        %v1704 = vmul.f32 %v1672, %v1700
        %v1705 = vmul.f32 %v1673, %v1701
        %v1707 = vlaneseq
        %v1708 = vshrl.u32 %v1707, 7
        %v1709 = vsub.s32 0, %v1708
        %v1710 = vrot.slane %v1651, %v1709
        %v1712 = vmul.f32 %v1702, %v1710
        %v1713 = vmul.f32 %v1703, %v1710
        %v1714 = vmul.f32 %v1704, %v1710
        %v1715 = vmul.f32 %v1705, %v1710
        %v1717 = vlaneseq
        %v1718 = vshrl.u32 %v1717, 7
        %v1719 = vsub.s32 0, %v1718
        %v1720 = vrot.slane %v1653, %v1719
        %v1722 = vadd.f32 %v1712, %v1720
        %v1723 = vadd.f32 %v1713, %v1720
        %v1724 = vadd.f32 %v1714, %v1720
        %v1725 = vadd.f32 %v1715, %v1720
        %v1726 = vmul.f32 %v1722, %v989
        %v1727 = vmul.f32 %v1723, %v994
        %v1728 = vmul.f32 %v1724, %v999
        %v1729 = vmul.f32 %v1725, %v1004
        %1730 = vst.msk [vmem:[#allocation3 + $0x2] sm:$0xff] %vm903, %v1726
        %1731 = vst.msk [vmem:[#allocation3 + $0xa] sm:$0xff] %vm903, %v1727
        %1732 = vst.msk [vmem:[#allocation3 + $0x1a] sm:$0xff] %vm903, %v1728
        %1733 = vst.msk [vmem:[#allocation3 + $0x22] sm:$0xff] %vm903, %v1729
        %v1734 = vld [vmem:[#allocation3] sm:$0xff]
        %v1735 = vld [vmem:[#allocation3 + $0x8] sm:$0xff]
        %v1736 = vld [vmem:[#allocation3 + $0x18] sm:$0xff]
        %v1737 = vld [vmem:[#allocation3 + $0x20] sm:$0xff]
        %s1738 = scalar_lea.vmem %s730, 160 [#allocation10]
        %v1739 = vld [vmem:[%s1738] sm:$0xff]
        %v1740 = vld [vmem:[%s1738 + $0x8] sm:$0xff]
        %v1741 = vld [vmem:[%s1738 + $0x10] sm:$0xff]
        %v1742 = vld [vmem:[%s1738 + $0x18] sm:$0xff]
        %v1743 = vld [vmem:[#allocation3 + $0x1] sm:$0xff]
        %v1744 = vld [vmem:[#allocation3 + $0x9] sm:$0xff]
        %v1745 = vld [vmem:[#allocation3 + $0x19] sm:$0xff]
        %v1746 = vld [vmem:[#allocation3 + $0x21] sm:$0xff]
        %s1747 = scalar_lea.vmem %s730, 192 [#allocation10]
        %v1748 = vld [vmem:[%s1747] sm:$0xff]
        %v1749 = vld [vmem:[%s1747 + $0x8] sm:$0xff]
        %v1750 = vld [vmem:[%s1747 + $0x10] sm:$0xff]
        %v1751 = vld [vmem:[%s1747 + $0x18] sm:$0xff]
        %v1753 = vsel %vm903, %v1743, 0
        %v1756 = vsel %vm903, %v1744, 0
        %v1759 = vsel %vm903, %v1745, 0
        %v1762 = vsel %vm903, %v1746, 0
        %1764 = vmatprep.subr.mxu0 0.0
        %1765 = vmatpush1.msra.mxu0 0.0
        %1766 = vmatprep.subr.mxu0 0.0
        %1767 = vmatpush1.msra.mxu0 0.0
        %1768 = vmatprep.subr.mxu0 0.0
        %1769 = vmatpush1.msra.mxu0 0.0
        %1770 = vmatprep.subr.mxu0 0.0
        %1771 = vmatpush1.msra.mxu0 0.0
        %1772 = vmatprep.subr.mxu0 0.0
        %1773 = vmatpush1.msra.mxu0 0.0
        %1774 = vmatprep.subr.mxu0 0.0
        %1775 = vmatpush1.msra.mxu0 0.0
        %1776 = vmatprep.subr.mxu0 0.0
        %1777 = vmatpush1.msra.mxu0 0.0
        %1778 = vmatprep.subr.mxu0 0.0
        %1779 = vmatpush1.msra.mxu0 0.0
        %1780 = vmatprep.subr.mxu0 0.0
        %1781 = vmatpush1.msra.mxu0 0.0
        %1782 = vmatprep.subr.mxu0 0.0
        %1783 = vmatpush1.msra.mxu0 0.0
        %1784 = vmatprep.subr.mxu0 0.0
        %1785 = vmatpush1.msra.mxu0 0.0
        %1786 = vmatprep.subr.mxu0 0.0
        %1787 = vmatpush1.msra.mxu0 0.0
        %1788 = vmatprep.subr.mxu0 0.0
        %1789 = vmatpush1.msra.mxu0 %v1751
        %1790 = vmatprep.subr.mxu0 0.0
        %1791 = vmatpush1.msra.mxu0 %v1750
        %1792 = vmatprep.subr.mxu0 0.0
        %1793 = vmatpush1.msra.mxu0 %v1749
        %1794 = vmatprep.subr.mxu0 0.0
        %1795 = vmatpush1.msra.mxu0 %v1748
        %1796 = vmatprep.subr.mxu0 0.0
        %1797 = vmatpush2.msra.mxu0 0.0
        %1798 = vmatprep.subr.mxu0 0.0
        %1799 = vmatpush2.msra.mxu0 0.0
        %1800 = vmatprep.subr.mxu0 0.0
        %1801 = vmatpush2.msra.mxu0 0.0
        %1802 = vmatprep.subr.mxu0 0.0
        %1803 = vmatpush2.msra.mxu0 0.0
        %1804 = vmatprep.subr.mxu0 0.0
        %1805 = vmatpush2.msra.mxu0 0.0
        %1806 = vmatprep.subr.mxu0 0.0
        %1807 = vmatpush2.msra.mxu0 0.0
        %1808 = vmatprep.subr.mxu0 0.0
        %1809 = vmatpush2.msra.mxu0 0.0
        %1810 = vmatprep.subr.mxu0 0.0
        %1811 = vmatpush2.msra.mxu0 0.0
        %1812 = vmatprep.subr.mxu0 0.0
        %1813 = vmatpush2.msra.mxu0 0.0
        %1814 = vmatprep.subr.mxu0 0.0
        %1815 = vmatpush2.msra.mxu0 0.0
        %1816 = vmatprep.subr.mxu0 0.0
        %1817 = vmatpush2.msra.mxu0 0.0
        %1818 = vmatprep.subr.mxu0 0.0
        %1819 = vmatpush2.msra.mxu0 0.0
        %1820 = vmatprep.subr.mxu0 0.0
        %1821 = vmatpush2.msra.mxu0 0.0
        %1822 = vmatprep.subr.mxu0 0.0
        %1823 = vmatpush2.msra.mxu0 0.0
        %1824 = vmatprep.subr.mxu0 0.0
        %1825 = vmatpush2.msra.mxu0 0.0
        %1826 = vmatprep.subr.mxu0 0.0
        %1827 = vmatpush2.msra.mxu0 0.0
        %1828 = vmatprep.mubr.f32.mxu0 0.0
        %1829 = vmatmul.mubr.f32.gmra.mxu0 %v1753
        %v1830 = vpop.f32.mrf.mxu0
        %v1831 = vadd.f32 0.0, %v1830
        %v1832 = vpop.f32.mrf.mxu0
        %1833 = vmatprep.mubr.f32.mxu0 0.0
        %1834 = vmatmul.mubr.f32.gmra.mxu0 %v1756
        %v1835 = vpop.f32.mrf.mxu0
        %v1836 = vadd.f32 0.0, %v1835
        %v1837 = vpop.f32.mrf.mxu0
        %1838 = vmatprep.mubr.f32.mxu0 0.0
        %1839 = vmatmul.mubr.f32.gmra.mxu0 %v1759
        %v1840 = vpop.f32.mrf.mxu0
        %v1841 = vadd.f32 0.0, %v1840
        %v1842 = vpop.f32.mrf.mxu0
        %1843 = vmatprep.mubr.f32.mxu0 0.0
        %1844 = vmatmul.mubr.f32.gmra.mxu0 %v1762
        %v1845 = vpop.f32.mrf.mxu0
        %v1846 = vadd.f32 0.0, %v1845
        %v1847 = vpop.f32.mrf.mxu0
        %1848 = vdwg.mxu0
        %v1850 = vsel %vm903, %v1734, 0
        %v1853 = vsel %vm903, %v1735, 0
        %v1856 = vsel %vm903, %v1736, 0
        %v1859 = vsel %vm903, %v1737, 0
        %1861 = vmatprep.subr.mxu0 0.0
        %1862 = vmatpush1.msra.mxu0 0.0
        %1863 = vmatprep.subr.mxu0 0.0
        %1864 = vmatpush1.msra.mxu0 0.0
        %1865 = vmatprep.subr.mxu0 0.0
        %1866 = vmatpush1.msra.mxu0 0.0
        %1867 = vmatprep.subr.mxu0 0.0
        %1868 = vmatpush1.msra.mxu0 0.0
        %1869 = vmatprep.subr.mxu0 0.0
        %1870 = vmatpush1.msra.mxu0 0.0
        %1871 = vmatprep.subr.mxu0 0.0
        %1872 = vmatpush1.msra.mxu0 0.0
        %1873 = vmatprep.subr.mxu0 0.0
        %1874 = vmatpush1.msra.mxu0 0.0
        %1875 = vmatprep.subr.mxu0 0.0
        %1876 = vmatpush1.msra.mxu0 0.0
        %1877 = vmatprep.subr.mxu0 0.0
        %1878 = vmatpush1.msra.mxu0 0.0
        %1879 = vmatprep.subr.mxu0 0.0
        %1880 = vmatpush1.msra.mxu0 0.0
        %1881 = vmatprep.subr.mxu0 0.0
        %1882 = vmatpush1.msra.mxu0 0.0
        %1883 = vmatprep.subr.mxu0 0.0
        %1884 = vmatpush1.msra.mxu0 0.0
        %1885 = vmatprep.subr.mxu0 0.0
        %1886 = vmatpush1.msra.mxu0 %v1742
        %1887 = vmatprep.subr.mxu0 0.0
        %1888 = vmatpush1.msra.mxu0 %v1741
        %1889 = vmatprep.subr.mxu0 0.0
        %1890 = vmatpush1.msra.mxu0 %v1740
        %1891 = vmatprep.subr.mxu0 0.0
        %1892 = vmatpush1.msra.mxu0 %v1739
        %1893 = vmatprep.subr.mxu0 0.0
        %1894 = vmatpush2.msra.mxu0 0.0
        %1895 = vmatprep.subr.mxu0 0.0
        %1896 = vmatpush2.msra.mxu0 0.0
        %1897 = vmatprep.subr.mxu0 0.0
        %1898 = vmatpush2.msra.mxu0 0.0
        %1899 = vmatprep.subr.mxu0 0.0
        %1900 = vmatpush2.msra.mxu0 0.0
        %1901 = vmatprep.subr.mxu0 0.0
        %1902 = vmatpush2.msra.mxu0 0.0
        %1903 = vmatprep.subr.mxu0 0.0
        %1904 = vmatpush2.msra.mxu0 0.0
        %1905 = vmatprep.subr.mxu0 0.0
        %1906 = vmatpush2.msra.mxu0 0.0
        %1907 = vmatprep.subr.mxu0 0.0
        %1908 = vmatpush2.msra.mxu0 0.0
        %1909 = vmatprep.subr.mxu0 0.0
        %1910 = vmatpush2.msra.mxu0 0.0
        %1911 = vmatprep.subr.mxu0 0.0
        %1912 = vmatpush2.msra.mxu0 0.0
        %1913 = vmatprep.subr.mxu0 0.0
        %1914 = vmatpush2.msra.mxu0 0.0
        %1915 = vmatprep.subr.mxu0 0.0
        %1916 = vmatpush2.msra.mxu0 0.0
        %1917 = vmatprep.subr.mxu0 0.0
        %1918 = vmatpush2.msra.mxu0 0.0
        %1919 = vmatprep.subr.mxu0 0.0
        %1920 = vmatpush2.msra.mxu0 0.0
        %1921 = vmatprep.subr.mxu0 0.0
        %1922 = vmatpush2.msra.mxu0 0.0
        %1923 = vmatprep.subr.mxu0 0.0
        %1924 = vmatpush2.msra.mxu0 0.0
        %1925 = vmatprep.mubr.f32.mxu0 0.0
        %1926 = vmatmul.mubr.f32.gmra.mxu0 %v1850
        %v1927 = vpop.f32.mrf.mxu0
        %v1928 = vadd.f32 %v1831, %v1927
        %v1929 = vpop.f32.mrf.mxu0
        %1930 = vmatprep.mubr.f32.mxu0 0.0
        %1931 = vmatmul.mubr.f32.gmra.mxu0 %v1853
        %v1932 = vpop.f32.mrf.mxu0
        %v1933 = vadd.f32 %v1836, %v1932
        %v1934 = vpop.f32.mrf.mxu0
        %1935 = vmatprep.mubr.f32.mxu0 0.0
        %1936 = vmatmul.mubr.f32.gmra.mxu0 %v1856
        %v1937 = vpop.f32.mrf.mxu0
        %v1938 = vadd.f32 %v1841, %v1937
        %v1939 = vpop.f32.mrf.mxu0
        %1940 = vmatprep.mubr.f32.mxu0 0.0
        %1941 = vmatmul.mubr.f32.gmra.mxu0 %v1859
        %v1942 = vpop.f32.mrf.mxu0
        %v1943 = vadd.f32 %v1846, %v1942
        %v1944 = vpop.f32.mrf.mxu0
        %1945 = vdwg.mxu0
        %v1946 = vld [vmem:[#allocation3 + $0x2] sm:$0xff]
        %v1947 = vld [vmem:[#allocation3 + $0xa] sm:$0xff]
        %v1948 = vld [vmem:[#allocation3 + $0x1a] sm:$0xff]
        %v1949 = vld [vmem:[#allocation3 + $0x22] sm:$0xff]
        %s1950 = scalar_lea.vmem %s730, 224 [#allocation10]
        %v1951 = vld [vmem:[%s1950] sm:$0xff]
        %v1952 = vld [vmem:[%s1950 + $0x8] sm:$0xff]
        %v1953 = vld [vmem:[%s1950 + $0x10] sm:$0xff]
        %v1954 = vld [vmem:[%s1950 + $0x18] sm:$0xff]
        %v1956 = vsel %vm903, %v1946, 0
        %v1959 = vsel %vm903, %v1947, 0
        %v1962 = vsel %vm903, %v1948, 0
        %v1965 = vsel %vm903, %v1949, 0
        %1967 = vmatprep.subr.mxu0 0.0
        %1968 = vmatpush1.msra.mxu0 0.0
        %1969 = vmatprep.subr.mxu0 0.0
        %1970 = vmatpush1.msra.mxu0 0.0
        %1971 = vmatprep.subr.mxu0 0.0
        %1972 = vmatpush1.msra.mxu0 0.0
        %1973 = vmatprep.subr.mxu0 0.0
        %1974 = vmatpush1.msra.mxu0 0.0
        %1975 = vmatprep.subr.mxu0 0.0
        %1976 = vmatpush1.msra.mxu0 0.0
        %1977 = vmatprep.subr.mxu0 0.0
        %1978 = vmatpush1.msra.mxu0 0.0
        %1979 = vmatprep.subr.mxu0 0.0
        %1980 = vmatpush1.msra.mxu0 0.0
        %1981 = vmatprep.subr.mxu0 0.0
        %1982 = vmatpush1.msra.mxu0 0.0
        %1983 = vmatprep.subr.mxu0 0.0
        %1984 = vmatpush1.msra.mxu0 0.0
        %1985 = vmatprep.subr.mxu0 0.0
        %1986 = vmatpush1.msra.mxu0 0.0
        %1987 = vmatprep.subr.mxu0 0.0
        %1988 = vmatpush1.msra.mxu0 0.0
        %1989 = vmatprep.subr.mxu0 0.0
        %1990 = vmatpush1.msra.mxu0 0.0
        %1991 = vmatprep.subr.mxu0 0.0
        %1992 = vmatpush1.msra.mxu0 %v1954
        %1993 = vmatprep.subr.mxu0 0.0
        %1994 = vmatpush1.msra.mxu0 %v1953
        %1995 = vmatprep.subr.mxu0 0.0
        %1996 = vmatpush1.msra.mxu0 %v1952
        %1997 = vmatprep.subr.mxu0 0.0
        %1998 = vmatpush1.msra.mxu0 %v1951
        %1999 = vmatprep.subr.mxu0 0.0
        %2000 = vmatpush2.msra.mxu0 0.0
        %2001 = vmatprep.subr.mxu0 0.0
        %2002 = vmatpush2.msra.mxu0 0.0
        %2003 = vmatprep.subr.mxu0 0.0
        %2004 = vmatpush2.msra.mxu0 0.0
        %2005 = vmatprep.subr.mxu0 0.0
        %2006 = vmatpush2.msra.mxu0 0.0
        %2007 = vmatprep.subr.mxu0 0.0
        %2008 = vmatpush2.msra.mxu0 0.0
        %2009 = vmatprep.subr.mxu0 0.0
        %2010 = vmatpush2.msra.mxu0 0.0
        %2011 = vmatprep.subr.mxu0 0.0
        %2012 = vmatpush2.msra.mxu0 0.0
        %2013 = vmatprep.subr.mxu0 0.0
        %2014 = vmatpush2.msra.mxu0 0.0
        %2015 = vmatprep.subr.mxu0 0.0
        %2016 = vmatpush2.msra.mxu0 0.0
        %2017 = vmatprep.subr.mxu0 0.0
        %2018 = vmatpush2.msra.mxu0 0.0
        %2019 = vmatprep.subr.mxu0 0.0
        %2020 = vmatpush2.msra.mxu0 0.0
        %2021 = vmatprep.subr.mxu0 0.0
        %2022 = vmatpush2.msra.mxu0 0.0
        %2023 = vmatprep.subr.mxu0 0.0
        %2024 = vmatpush2.msra.mxu0 0.0
        %2025 = vmatprep.subr.mxu0 0.0
        %2026 = vmatpush2.msra.mxu0 0.0
        %2027 = vmatprep.subr.mxu0 0.0
        %2028 = vmatpush2.msra.mxu0 0.0
        %2029 = vmatprep.subr.mxu0 0.0
        %2030 = vmatpush2.msra.mxu0 0.0
        %2031 = vmatprep.mubr.f32.mxu0 0.0
        %2032 = vmatmul.mubr.f32.gmra.mxu0 %v1956
        %v2033 = vpop.f32.mrf.mxu0
        %v2034 = vadd.f32 0.0, %v2033
        %v2035 = vpop.f32.mrf.mxu0
        %2036 = vmatprep.mubr.f32.mxu0 0.0
        %2037 = vmatmul.mubr.f32.gmra.mxu0 %v1959
        %v2038 = vpop.f32.mrf.mxu0
        %v2039 = vadd.f32 0.0, %v2038
        %v2040 = vpop.f32.mrf.mxu0
        %2041 = vmatprep.mubr.f32.mxu0 0.0
        %2042 = vmatmul.mubr.f32.gmra.mxu0 %v1962
        %v2043 = vpop.f32.mrf.mxu0
        %v2044 = vadd.f32 0.0, %v2043
        %v2045 = vpop.f32.mrf.mxu0
        %2046 = vmatprep.mubr.f32.mxu0 0.0
        %2047 = vmatmul.mubr.f32.gmra.mxu0 %v1965
        %v2048 = vpop.f32.mrf.mxu0
        %v2049 = vadd.f32 0.0, %v2048
        %v2050 = vpop.f32.mrf.mxu0
        %2051 = vdwg.mxu0
        %v2052 = vadd.f32 %v1928, %v2034
        %v2053 = vadd.f32 %v1933, %v2039
        %v2054 = vadd.f32 %v1938, %v2044
        %v2055 = vadd.f32 %v1943, %v2049
        %v2056 = vld [vmem:[#allocation3 + $0x3] sm:$0xff]
        %v2057 = vld [vmem:[#allocation3 + $0xb] sm:$0xff]
        %v2058 = vld [vmem:[#allocation3 + $0x1b] sm:$0xff]
        %v2059 = vld [vmem:[#allocation3 + $0x23] sm:$0xff]
        %s2060 = scalar_lea.vmem %s730, 256 [#allocation10]
        %v2061 = vld [vmem:[%s2060] sm:$0xff]
        %v2062 = vld [vmem:[%s2060 + $0x8] sm:$0xff]
        %v2063 = vld [vmem:[%s2060 + $0x10] sm:$0xff]
        %v2064 = vld [vmem:[%s2060 + $0x18] sm:$0xff]
        %v2066 = vsel %vm903, %v2056, 0
        %v2069 = vsel %vm903, %v2057, 0
        %v2072 = vsel %vm903, %v2058, 0
        %v2075 = vsel %vm903, %v2059, 0
        %2077 = vmatprep.subr.mxu0 0.0
        %2078 = vmatpush1.msra.mxu0 0.0
        %2079 = vmatprep.subr.mxu0 0.0
        %2080 = vmatpush1.msra.mxu0 0.0
        %2081 = vmatprep.subr.mxu0 0.0
        %2082 = vmatpush1.msra.mxu0 0.0
        %2083 = vmatprep.subr.mxu0 0.0
        %2084 = vmatpush1.msra.mxu0 0.0
        %2085 = vmatprep.subr.mxu0 0.0
        %2086 = vmatpush1.msra.mxu0 0.0
        %2087 = vmatprep.subr.mxu0 0.0
        %2088 = vmatpush1.msra.mxu0 0.0
        %2089 = vmatprep.subr.mxu0 0.0
        %2090 = vmatpush1.msra.mxu0 0.0
        %2091 = vmatprep.subr.mxu0 0.0
        %2092 = vmatpush1.msra.mxu0 0.0
        %2093 = vmatprep.subr.mxu0 0.0
        %2094 = vmatpush1.msra.mxu0 0.0
        %2095 = vmatprep.subr.mxu0 0.0
        %2096 = vmatpush1.msra.mxu0 0.0
        %2097 = vmatprep.subr.mxu0 0.0
        %2098 = vmatpush1.msra.mxu0 0.0
        %2099 = vmatprep.subr.mxu0 0.0
        %2100 = vmatpush1.msra.mxu0 0.0
        %2101 = vmatprep.subr.mxu0 0.0
        %2102 = vmatpush1.msra.mxu0 %v2064
        %2103 = vmatprep.subr.mxu0 0.0
        %2104 = vmatpush1.msra.mxu0 %v2063
        %2105 = vmatprep.subr.mxu0 0.0
        %2106 = vmatpush1.msra.mxu0 %v2062
        %2107 = vmatprep.subr.mxu0 0.0
        %2108 = vmatpush1.msra.mxu0 %v2061
        %2109 = vmatprep.subr.mxu0 0.0
        %2110 = vmatpush2.msra.mxu0 0.0
        %2111 = vmatprep.subr.mxu0 0.0
        %2112 = vmatpush2.msra.mxu0 0.0
        %2113 = vmatprep.subr.mxu0 0.0
        %2114 = vmatpush2.msra.mxu0 0.0
        %2115 = vmatprep.subr.mxu0 0.0
        %2116 = vmatpush2.msra.mxu0 0.0
        %2117 = vmatprep.subr.mxu0 0.0
        %2118 = vmatpush2.msra.mxu0 0.0
        %2119 = vmatprep.subr.mxu0 0.0
        %2120 = vmatpush2.msra.mxu0 0.0
        %2121 = vmatprep.subr.mxu0 0.0
        %2122 = vmatpush2.msra.mxu0 0.0
        %2123 = vmatprep.subr.mxu0 0.0
        %2124 = vmatpush2.msra.mxu0 0.0
        %2125 = vmatprep.subr.mxu0 0.0
        %2126 = vmatpush2.msra.mxu0 0.0
        %2127 = vmatprep.subr.mxu0 0.0
        %2128 = vmatpush2.msra.mxu0 0.0
        %2129 = vmatprep.subr.mxu0 0.0
        %2130 = vmatpush2.msra.mxu0 0.0
        %2131 = vmatprep.subr.mxu0 0.0
        %2132 = vmatpush2.msra.mxu0 0.0
        %2133 = vmatprep.subr.mxu0 0.0
        %2134 = vmatpush2.msra.mxu0 0.0
        %2135 = vmatprep.subr.mxu0 0.0
        %2136 = vmatpush2.msra.mxu0 0.0
        %2137 = vmatprep.subr.mxu0 0.0
        %2138 = vmatpush2.msra.mxu0 0.0
        %2139 = vmatprep.subr.mxu0 0.0
        %2140 = vmatpush2.msra.mxu0 0.0
        %2141 = vmatprep.mubr.f32.mxu0 0.0
        %2142 = vmatmul.mubr.f32.gmra.mxu0 %v2066
        %v2143 = vpop.f32.mrf.mxu0
        %v2144 = vadd.f32 0.0, %v2143
        %v2145 = vpop.f32.mrf.mxu0
        %2146 = vmatprep.mubr.f32.mxu0 0.0
        %2147 = vmatmul.mubr.f32.gmra.mxu0 %v2069
        %v2148 = vpop.f32.mrf.mxu0
        %v2149 = vadd.f32 0.0, %v2148
        %v2150 = vpop.f32.mrf.mxu0
        %2151 = vmatprep.mubr.f32.mxu0 0.0
        %2152 = vmatmul.mubr.f32.gmra.mxu0 %v2072
        %v2153 = vpop.f32.mrf.mxu0
        %v2154 = vadd.f32 0.0, %v2153
        %v2155 = vpop.f32.mrf.mxu0
        %2156 = vmatprep.mubr.f32.mxu0 0.0
        %2157 = vmatmul.mubr.f32.gmra.mxu0 %v2075
        %v2158 = vpop.f32.mrf.mxu0
        %v2159 = vadd.f32 0.0, %v2158
        %v2160 = vpop.f32.mrf.mxu0
        %2161 = vdwg.mxu0
        %v2162 = vadd.f32 %v2052, %v2144
        %v2163 = vadd.f32 %v2053, %v2149
        %v2164 = vadd.f32 %v2054, %v2154
        %v2165 = vadd.f32 %v2055, %v2159
        %v2166 = vld [vmem:[#allocation3 + $0x4] sm:$0xff]
        %v2167 = vld [vmem:[#allocation3 + $0xc] sm:$0xff]
        %v2168 = vld [vmem:[#allocation3 + $0x1c] sm:$0xff]
        %v2169 = vld [vmem:[#allocation3 + $0x24] sm:$0xff]
        %s2170 = scalar_lea.vmem %s730, 288 [#allocation10]
        %v2171 = vld [vmem:[%s2170] sm:$0xff]
        %v2172 = vld [vmem:[%s2170 + $0x8] sm:$0xff]
        %v2173 = vld [vmem:[%s2170 + $0x10] sm:$0xff]
        %v2174 = vld [vmem:[%s2170 + $0x18] sm:$0xff]
        %v2176 = vsel %vm903, %v2166, 0
        %v2179 = vsel %vm903, %v2167, 0
        %v2182 = vsel %vm903, %v2168, 0
        %v2185 = vsel %vm903, %v2169, 0
        %2187 = vmatprep.subr.mxu0 0.0
        %2188 = vmatpush1.msra.mxu0 0.0
        %2189 = vmatprep.subr.mxu0 0.0
        %2190 = vmatpush1.msra.mxu0 0.0
        %2191 = vmatprep.subr.mxu0 0.0
        %2192 = vmatpush1.msra.mxu0 0.0
        %2193 = vmatprep.subr.mxu0 0.0
        %2194 = vmatpush1.msra.mxu0 0.0
        %2195 = vmatprep.subr.mxu0 0.0
        %2196 = vmatpush1.msra.mxu0 0.0
        %2197 = vmatprep.subr.mxu0 0.0
        %2198 = vmatpush1.msra.mxu0 0.0
        %2199 = vmatprep.subr.mxu0 0.0
        %2200 = vmatpush1.msra.mxu0 0.0
        %2201 = vmatprep.subr.mxu0 0.0
        %2202 = vmatpush1.msra.mxu0 0.0
        %2203 = vmatprep.subr.mxu0 0.0
        %2204 = vmatpush1.msra.mxu0 0.0
        %2205 = vmatprep.subr.mxu0 0.0
        %2206 = vmatpush1.msra.mxu0 0.0
        %2207 = vmatprep.subr.mxu0 0.0
        %2208 = vmatpush1.msra.mxu0 0.0
        %2209 = vmatprep.subr.mxu0 0.0
        %2210 = vmatpush1.msra.mxu0 0.0
        %2211 = vmatprep.subr.mxu0 0.0
        %2212 = vmatpush1.msra.mxu0 %v2174
        %2213 = vmatprep.subr.mxu0 0.0
        %2214 = vmatpush1.msra.mxu0 %v2173
        %2215 = vmatprep.subr.mxu0 0.0
        %2216 = vmatpush1.msra.mxu0 %v2172
        %2217 = vmatprep.subr.mxu0 0.0
        %2218 = vmatpush1.msra.mxu0 %v2171
        %2219 = vmatprep.subr.mxu0 0.0
        %2220 = vmatpush2.msra.mxu0 0.0
        %2221 = vmatprep.subr.mxu0 0.0
        %2222 = vmatpush2.msra.mxu0 0.0
        %2223 = vmatprep.subr.mxu0 0.0
        %2224 = vmatpush2.msra.mxu0 0.0
        %2225 = vmatprep.subr.mxu0 0.0
        %2226 = vmatpush2.msra.mxu0 0.0
        %2227 = vmatprep.subr.mxu0 0.0
        %2228 = vmatpush2.msra.mxu0 0.0
        %2229 = vmatprep.subr.mxu0 0.0
        %2230 = vmatpush2.msra.mxu0 0.0
        %2231 = vmatprep.subr.mxu0 0.0
        %2232 = vmatpush2.msra.mxu0 0.0
        %2233 = vmatprep.subr.mxu0 0.0
        %2234 = vmatpush2.msra.mxu0 0.0
        %2235 = vmatprep.subr.mxu0 0.0
        %2236 = vmatpush2.msra.mxu0 0.0
        %2237 = vmatprep.subr.mxu0 0.0
        %2238 = vmatpush2.msra.mxu0 0.0
        %2239 = vmatprep.subr.mxu0 0.0
        %2240 = vmatpush2.msra.mxu0 0.0
        %2241 = vmatprep.subr.mxu0 0.0
        %2242 = vmatpush2.msra.mxu0 0.0
        %2243 = vmatprep.subr.mxu0 0.0
        %2244 = vmatpush2.msra.mxu0 0.0
        %2245 = vmatprep.subr.mxu0 0.0
        %2246 = vmatpush2.msra.mxu0 0.0
        %2247 = vmatprep.subr.mxu0 0.0
        %2248 = vmatpush2.msra.mxu0 0.0
        %2249 = vmatprep.subr.mxu0 0.0
        %2250 = vmatpush2.msra.mxu0 0.0
        %2251 = vmatprep.mubr.f32.mxu0 0.0
        %2252 = vmatmul.mubr.f32.gmra.mxu0 %v2176
        %v2253 = vpop.f32.mrf.mxu0
        %v2254 = vadd.f32 0.0, %v2253
        %v2255 = vpop.f32.mrf.mxu0
        %2256 = vmatprep.mubr.f32.mxu0 0.0
        %2257 = vmatmul.mubr.f32.gmra.mxu0 %v2179
        %v2258 = vpop.f32.mrf.mxu0
        %v2259 = vadd.f32 0.0, %v2258
        %v2260 = vpop.f32.mrf.mxu0
        %2261 = vmatprep.mubr.f32.mxu0 0.0
        %2262 = vmatmul.mubr.f32.gmra.mxu0 %v2182
        %v2263 = vpop.f32.mrf.mxu0
        %v2264 = vadd.f32 0.0, %v2263
        %v2265 = vpop.f32.mrf.mxu0
        %2266 = vmatprep.mubr.f32.mxu0 0.0
        %2267 = vmatmul.mubr.f32.gmra.mxu0 %v2185
        %v2268 = vpop.f32.mrf.mxu0
        %v2269 = vadd.f32 0.0, %v2268
        %v2270 = vpop.f32.mrf.mxu0
        %2271 = vdwg.mxu0
        %v2272 = vadd.f32 %v2162, %v2254
        %v2273 = vadd.f32 %v2163, %v2259
        %v2274 = vadd.f32 %v2164, %v2264
        %v2275 = vadd.f32 %v2165, %v2269
        %s2276 = scalar_lea.vmem %s861, 1
        %v2277 = vld [vmem:[%s2276] sm:$0x1]
        %v2279 = vlaneseq
        %v2280 = vshrl.u32 %v2279, 7
        %v2281 = vsub.s32 0, %v2280
        %v2282 = vrot.slane %v2277, %v2281
        %v2284 = vadd.f32 %v2272, %v2282
        %v2285 = vadd.f32 %v2273, %v2282
        %v2286 = vadd.f32 %v2274, %v2282
        %v2287 = vadd.f32 %v2275, %v2282
        %s2288 = scalar_lea.vmem %s712, 3 [#allocation7]
        %v2289 = vld [vmem:[%s2288] sm:$0x1]
        %s2290 = scalar_lea.vmem %s721, 3 [#allocation9]
        %v2291 = vld [vmem:[%s2290] sm:$0x1]
        %v2292 = vsel %vm903, %v2284, 0.0
        %2293 = vadd.xlane.f32.xlu0 %v2292
        %v2294 = vpop.xlane.xlu0 %2293
        %v2295 = vsel %vm903, %v2285, 0.0
        %2296 = vadd.xlane.f32.xlu0 %v2295
        %v2297 = vpop.xlane.xlu0 %2296
        %v2298 = vsel %vm903, %v2286, 0.0
        %2299 = vadd.xlane.f32.xlu0 %v2298
        %v2300 = vpop.xlane.xlu0 %2299
        %v2301 = vsel %vm903, %v2287, 0.0
        %2302 = vadd.xlane.f32.xlu0 %v2301
        %v2303 = vpop.xlane.xlu0 %2302
        %v2304 = vmul.f32 %v2294, %v925
        %v2305 = vmul.f32 %v2297, %v925
        %v2306 = vmul.f32 %v2300, %v925
        %v2307 = vmul.f32 %v2303, %v925
        %v2308 = vsub.f32 %v2284, %v2304
        %v2309 = vsub.f32 %v2285, %v2305
        %v2310 = vsub.f32 %v2286, %v2306
        %v2311 = vsub.f32 %v2287, %v2307
        %v2312 = vmul.f32 %v2308, %v2308
        %v2313 = vmul.f32 %v2309, %v2309
        %v2314 = vmul.f32 %v2310, %v2310
        %v2315 = vmul.f32 %v2311, %v2311
        %v2316 = vsel %vm903, %v2312, 0.0
        %2317 = vadd.xlane.f32.xlu0 %v2316
        %v2318 = vpop.xlane.xlu0 %2317
        %v2319 = vsel %vm903, %v2313, 0.0
        %2320 = vadd.xlane.f32.xlu0 %v2319
        %v2321 = vpop.xlane.xlu0 %2320
        %v2322 = vsel %vm903, %v2314, 0.0
        %2323 = vadd.xlane.f32.xlu0 %v2322
        %v2324 = vpop.xlane.xlu0 %2323
        %v2325 = vsel %vm903, %v2315, 0.0
        %2326 = vadd.xlane.f32.xlu0 %v2325
        %v2327 = vpop.xlane.xlu0 %2326
        %v2328 = vmul.f32 %v2318, %v925
        %v2329 = vmul.f32 %v2321, %v925
        %v2330 = vmul.f32 %v2324, %v925
        %v2331 = vmul.f32 %v2327, %v925
        %v2332 = vadd.f32 %v2328, 1e-05
        %v2333 = vadd.f32 %v2329, 1e-05
        %v2334 = vadd.f32 %v2330, 1e-05
        %v2335 = vadd.f32 %v2331, 1e-05
        %v2336 = vrsqrt.pop %v2332
        %v2337 = vrsqrt.pop %v2333
        %v2338 = vrsqrt.pop %v2334
        %v2339 = vrsqrt.pop %v2335
        %v2340 = vmul.f32 %v2308, %v2336
        %v2341 = vmul.f32 %v2309, %v2337
        %v2342 = vmul.f32 %v2310, %v2338
        %v2343 = vmul.f32 %v2311, %v2339
        %v2345 = vlaneseq
        %v2346 = vshrl.u32 %v2345, 7
        %v2347 = vsub.s32 0, %v2346
        %v2348 = vrot.slane %v2289, %v2347
        %v2350 = vmul.f32 %v2340, %v2348
        %v2351 = vmul.f32 %v2341, %v2348
        %v2352 = vmul.f32 %v2342, %v2348
        %v2353 = vmul.f32 %v2343, %v2348
        %v2355 = vlaneseq
        %v2356 = vshrl.u32 %v2355, 7
        %v2357 = vsub.s32 0, %v2356
        %v2358 = vrot.slane %v2291, %v2357
        %v2360 = vadd.f32 %v2350, %v2358
        %v2361 = vadd.f32 %v2351, %v2358
        %v2362 = vadd.f32 %v2352, %v2358
        %v2363 = vadd.f32 %v2353, %v2358
        %v2364 = vmul.f32 %v2360, 0.5
        %v2365 = vmul.f32 %v2361, 0.5
        %v2366 = vmul.f32 %v2362, 0.5
        %v2367 = vmul.f32 %v2363, 0.5
        %v2368 = vadd.f32 %v1646, %v2364
        %v2369 = vadd.f32 %v1647, %v2365
        %v2370 = vadd.f32 %v1648, %v2366
        %v2371 = vadd.f32 %v1649, %v2367
        %s2372 = scalar_lea.vmem %s712, 4 [#allocation7]
        %v2373 = vld [vmem:[%s2372] sm:$0x1]
        %s2374 = scalar_lea.vmem %s721, 4 [#allocation9]
        %v2375 = vld [vmem:[%s2374] sm:$0x1]
        %v2376 = vsel %vm903, %v2368, 0.0
        %2377 = vadd.xlane.f32.xlu0 %v2376
        %v2378 = vpop.xlane.xlu0 %2377
        %v2379 = vsel %vm903, %v2369, 0.0
        %2380 = vadd.xlane.f32.xlu0 %v2379
        %v2381 = vpop.xlane.xlu0 %2380
        %v2382 = vsel %vm903, %v2370, 0.0
        %2383 = vadd.xlane.f32.xlu0 %v2382
        %v2384 = vpop.xlane.xlu0 %2383
        %v2385 = vsel %vm903, %v2371, 0.0
        %2386 = vadd.xlane.f32.xlu0 %v2385
        %v2387 = vpop.xlane.xlu0 %2386
        %v2388 = vmul.f32 %v2378, %v925
        %v2389 = vmul.f32 %v2381, %v925
        %v2390 = vmul.f32 %v2384, %v925
        %v2391 = vmul.f32 %v2387, %v925
        %v2392 = vsub.f32 %v2368, %v2388
        %v2393 = vsub.f32 %v2369, %v2389
        %v2394 = vsub.f32 %v2370, %v2390
        %v2395 = vsub.f32 %v2371, %v2391
        %v2396 = vmul.f32 %v2392, %v2392
        %v2397 = vmul.f32 %v2393, %v2393
        %v2398 = vmul.f32 %v2394, %v2394
        %v2399 = vmul.f32 %v2395, %v2395
        %v2400 = vsel %vm903, %v2396, 0.0
        %2401 = vadd.xlane.f32.xlu0 %v2400
        %v2402 = vpop.xlane.xlu0 %2401
        %v2403 = vsel %vm903, %v2397, 0.0
        %2404 = vadd.xlane.f32.xlu0 %v2403
        %v2405 = vpop.xlane.xlu0 %2404
        %v2406 = vsel %vm903, %v2398, 0.0
        %2407 = vadd.xlane.f32.xlu0 %v2406
        %v2408 = vpop.xlane.xlu0 %2407
        %v2409 = vsel %vm903, %v2399, 0.0
        %2410 = vadd.xlane.f32.xlu0 %v2409
        %v2411 = vpop.xlane.xlu0 %2410
        %v2412 = vmul.f32 %v2402, %v925
        %v2413 = vmul.f32 %v2405, %v925
        %v2414 = vmul.f32 %v2408, %v925
        %v2415 = vmul.f32 %v2411, %v925
        %v2416 = vadd.f32 %v2412, 1e-05
        %v2417 = vadd.f32 %v2413, 1e-05
        %v2418 = vadd.f32 %v2414, 1e-05
        %v2419 = vadd.f32 %v2415, 1e-05
        %v2420 = vrsqrt.pop %v2416
        %v2421 = vrsqrt.pop %v2417
        %v2422 = vrsqrt.pop %v2418
        %v2423 = vrsqrt.pop %v2419
        %v2424 = vmul.f32 %v2392, %v2420
        %v2425 = vmul.f32 %v2393, %v2421
        %v2426 = vmul.f32 %v2394, %v2422
        %v2427 = vmul.f32 %v2395, %v2423
        %v2429 = vlaneseq
        %v2430 = vshrl.u32 %v2429, 7
        %v2431 = vsub.s32 0, %v2430
        %v2432 = vrot.slane %v2373, %v2431
        %v2434 = vmul.f32 %v2424, %v2432
        %v2435 = vmul.f32 %v2425, %v2432
        %v2436 = vmul.f32 %v2426, %v2432
        %v2437 = vmul.f32 %v2427, %v2432
        %v2439 = vlaneseq
        %v2440 = vshrl.u32 %v2439, 7
        %v2441 = vsub.s32 0, %v2440
        %v2442 = vrot.slane %v2375, %v2441
        %v2444 = vadd.f32 %v2434, %v2442
        %v2445 = vadd.f32 %v2435, %v2442
        %v2446 = vadd.f32 %v2436, %v2442
        %v2447 = vadd.f32 %v2437, %v2442
        %v2448 = vld [vmem:[%s739] sm:$0xff]
        %v2449 = vld [vmem:[%s739 + $0x8] sm:$0xff]
        %v2450 = vld [vmem:[%s739 + $0x10] sm:$0xff]
        %v2451 = vld [vmem:[%s739 + $0x18] sm:$0xff]
        %v2452 = vld [vmem:[%s864] sm:$0x1]
        %v2454 = vlaneseq
        %v2455 = vshrl.u32 %v2454, 7
        %v2456 = vsub.s32 0, %v2455
        %v2457 = vrot.slane %v2452, %v2456
        %v2460 = vsel %vm903, %v2444, 0
        %v2463 = vsel %vm903, %v2445, 0
        %v2466 = vsel %vm903, %v2446, 0
        %v2469 = vsel %vm903, %v2447, 0
        %2471 = vmatprep.subr.mxu0 0.0
        %2472 = vmatpush1.msra.mxu0 0.0
        %2473 = vmatprep.subr.mxu0 0.0
        %2474 = vmatpush1.msra.mxu0 0.0
        %2475 = vmatprep.subr.mxu0 0.0
        %2476 = vmatpush1.msra.mxu0 0.0
        %2477 = vmatprep.subr.mxu0 0.0
        %2478 = vmatpush1.msra.mxu0 0.0
        %2479 = vmatprep.subr.mxu0 0.0
        %2480 = vmatpush1.msra.mxu0 0.0
        %2481 = vmatprep.subr.mxu0 0.0
        %2482 = vmatpush1.msra.mxu0 0.0
        %2483 = vmatprep.subr.mxu0 0.0
        %2484 = vmatpush1.msra.mxu0 0.0
        %2485 = vmatprep.subr.mxu0 0.0
        %2486 = vmatpush1.msra.mxu0 0.0
        %2487 = vmatprep.subr.mxu0 0.0
        %2488 = vmatpush1.msra.mxu0 0.0
        %2489 = vmatprep.subr.mxu0 0.0
        %2490 = vmatpush1.msra.mxu0 0.0
        %2491 = vmatprep.subr.mxu0 0.0
        %2492 = vmatpush1.msra.mxu0 0.0
        %2493 = vmatprep.subr.mxu0 0.0
        %2494 = vmatpush1.msra.mxu0 0.0
        %2495 = vmatprep.subr.mxu0 0.0
        %2496 = vmatpush1.msra.mxu0 %v2451
        %2497 = vmatprep.subr.mxu0 0.0
        %2498 = vmatpush1.msra.mxu0 %v2450
        %2499 = vmatprep.subr.mxu0 0.0
        %2500 = vmatpush1.msra.mxu0 %v2449
        %2501 = vmatprep.subr.mxu0 0.0
        %2502 = vmatpush1.msra.mxu0 %v2448
        %2503 = vmatprep.subr.mxu0 0.0
        %2504 = vmatpush2.msra.mxu0 0.0
        %2505 = vmatprep.subr.mxu0 0.0
        %2506 = vmatpush2.msra.mxu0 0.0
        %2507 = vmatprep.subr.mxu0 0.0
        %2508 = vmatpush2.msra.mxu0 0.0
        %2509 = vmatprep.subr.mxu0 0.0
        %2510 = vmatpush2.msra.mxu0 0.0
        %2511 = vmatprep.subr.mxu0 0.0
        %2512 = vmatpush2.msra.mxu0 0.0
        %2513 = vmatprep.subr.mxu0 0.0
        %2514 = vmatpush2.msra.mxu0 0.0
        %2515 = vmatprep.subr.mxu0 0.0
        %2516 = vmatpush2.msra.mxu0 0.0
        %2517 = vmatprep.subr.mxu0 0.0
        %2518 = vmatpush2.msra.mxu0 0.0
        %2519 = vmatprep.subr.mxu0 0.0
        %2520 = vmatpush2.msra.mxu0 0.0
        %2521 = vmatprep.subr.mxu0 0.0
        %2522 = vmatpush2.msra.mxu0 0.0
        %2523 = vmatprep.subr.mxu0 0.0
        %2524 = vmatpush2.msra.mxu0 0.0
        %2525 = vmatprep.subr.mxu0 0.0
        %2526 = vmatpush2.msra.mxu0 0.0
        %2527 = vmatprep.subr.mxu0 0.0
        %2528 = vmatpush2.msra.mxu0 0.0
        %2529 = vmatprep.subr.mxu0 0.0
        %2530 = vmatpush2.msra.mxu0 0.0
        %2531 = vmatprep.subr.mxu0 0.0
        %2532 = vmatpush2.msra.mxu0 0.0
        %2533 = vmatprep.subr.mxu0 0.0
        %2534 = vmatpush2.msra.mxu0 0.0
        %2535 = vmatprep.mubr.f32.mxu0 0.0
        %2536 = vmatmul.mubr.f32.gmra.mxu0 %v2460
        %v2537 = vpop.f32.mrf.mxu0
        %v2538 = vadd.f32 %v2457, %v2537
        %v2539 = vpop.f32.mrf.mxu0
        %2540 = vmatprep.mubr.f32.mxu0 0.0
        %2541 = vmatmul.mubr.f32.gmra.mxu0 %v2463
        %v2542 = vpop.f32.mrf.mxu0
        %v2543 = vadd.f32 %v2457, %v2542
        %v2544 = vpop.f32.mrf.mxu0
        %2545 = vmatprep.mubr.f32.mxu0 0.0
        %2546 = vmatmul.mubr.f32.gmra.mxu0 %v2466
        %v2547 = vpop.f32.mrf.mxu0
        %v2548 = vadd.f32 %v2457, %v2547
        %v2549 = vpop.f32.mrf.mxu0
        %2550 = vmatprep.mubr.f32.mxu0 0.0
        %2551 = vmatmul.mubr.f32.gmra.mxu0 %v2469
        %v2552 = vpop.f32.mrf.mxu0
        %v2553 = vadd.f32 %v2457, %v2552
        %v2554 = vpop.f32.mrf.mxu0
        %2555 = vdwg.mxu0
        %v2556 = vmul.f32 %v2538, 0.35355338
        %v2557 = vmul.f32 %v2543, 0.35355338
        %v2558 = vmul.f32 %v2548, 0.35355338
        %v2559 = vmul.f32 %v2553, 0.35355338
        %v2560 = vld [vmem:[%s3] sm:$0x1]
        %v2561 = vld [vmem:[%s3 + $0x1] sm:$0x1]
        %v2564 = vlaneseq
        %v2565 = vshrl.u32 %v2564, 7
        %v2566 = vsub.s32 0, %v2565
        %v2567 = vrot.slane %v2560, %v2566
        %v2568 = vlaneseq
        %v2569 = vshrl.u32 %v2568, 7
        %v2570 = vsub.s32 0, %v2569
        %v2571 = vrot.slane %v2561, %v2570
        %v2574 = vld [vmem:[%s4] sm:$0x1]
        %v2575 = vld [vmem:[%s4 + $0x1] sm:$0x1]
        %v2578 = vlaneseq
        %v2579 = vshrl.u32 %v2578, 7
        %v2580 = vsub.s32 0, %v2579
        %v2581 = vrot.slane %v2574, %v2580
        %v2582 = vlaneseq
        %v2583 = vshrl.u32 %v2582, 7
        %v2584 = vsub.s32 0, %v2583
        %v2585 = vrot.slane %v2575, %v2584
        %2590 = vrot.lane.b32.xlu0 %v2538, 96
        %v2591 = vpop.permute.xlu0 %2590
        %2592 = vrot.lane.b32.xlu0 %v2543, 96
        %v2593 = vpop.permute.xlu0 %2592
        %vm2594 = vcmask 64512
        %v2596 = vsel %vm2594, %v2556, 0
        %v2599 = vsel %vm2594, %v2557, 0
        %v2601 = vsel %vm2594, %v2591, 0
        %v2603 = vsel %vm2594, %v2593, 0
        %2605 = vmatprep.subr.mxu0 0.0
        %2606 = vmatpush1.xpose.msra.mxu0 0.0
        %2607 = vmatprep.subr.mxu0 0.0
        %2608 = vmatpush1.xpose.msra.mxu0 0.0
        %2609 = vmatprep.subr.mxu0 0.0
        %2610 = vmatpush1.xpose.msra.mxu0 0.0
        %2611 = vmatprep.subr.mxu0 0.0
        %2612 = vmatpush1.xpose.msra.mxu0 0.0
        %2613 = vmatprep.subr.mxu0 0.0
        %2614 = vmatpush1.xpose.msra.mxu0 0.0
        %2615 = vmatprep.subr.mxu0 0.0
        %2616 = vmatpush1.xpose.msra.mxu0 0.0
        %2617 = vmatprep.subr.mxu0 0.0
        %2618 = vmatpush1.xpose.msra.mxu0 0.0
        %2619 = vmatprep.subr.mxu0 0.0
        %2620 = vmatpush1.xpose.msra.mxu0 0.0
        %2621 = vmatprep.subr.mxu0 0.0
        %2622 = vmatpush1.xpose.msra.mxu0 0.0
        %2623 = vmatprep.subr.mxu0 0.0
        %2624 = vmatpush1.xpose.msra.mxu0 0.0
        %2625 = vmatprep.subr.mxu0 0.0
        %2626 = vmatpush1.xpose.msra.mxu0 0.0
        %2627 = vmatprep.subr.mxu0 0.0
        %2628 = vmatpush1.xpose.msra.mxu0 0.0
        %2629 = vmatprep.subr.mxu0 0.0
        %2630 = vmatpush1.xpose.msra.mxu0 0.0
        %2631 = vmatprep.subr.mxu0 0.0
        %2632 = vmatpush1.xpose.msra.mxu0 0.0
        %2633 = vmatprep.subr.mxu0 0.0
        %2634 = vmatpush1.xpose.msra.mxu0 %v2603
        %2635 = vmatprep.subr.mxu0 0.0
        %2636 = vmatpush1.xpose.msra.mxu0 %v2601
        %2637 = vmatprep.subr.mxu0 0.0
        %2638 = vmatpush2.xpose.msra.mxu0 0.0
        %2639 = vmatprep.subr.mxu0 0.0
        %2640 = vmatpush2.xpose.msra.mxu0 0.0
        %2641 = vmatprep.subr.mxu0 0.0
        %2642 = vmatpush2.xpose.msra.mxu0 0.0
        %2643 = vmatprep.subr.mxu0 0.0
        %2644 = vmatpush2.xpose.msra.mxu0 0.0
        %2645 = vmatprep.subr.mxu0 0.0
        %2646 = vmatpush2.xpose.msra.mxu0 0.0
        %2647 = vmatprep.subr.mxu0 0.0
        %2648 = vmatpush2.xpose.msra.mxu0 0.0
        %2649 = vmatprep.subr.mxu0 0.0
        %2650 = vmatpush2.xpose.msra.mxu0 0.0
        %2651 = vmatprep.subr.mxu0 0.0
        %2652 = vmatpush2.xpose.msra.mxu0 0.0
        %2653 = vmatprep.subr.mxu0 0.0
        %2654 = vmatpush2.xpose.msra.mxu0 0.0
        %2655 = vmatprep.subr.mxu0 0.0
        %2656 = vmatpush2.xpose.msra.mxu0 0.0
        %2657 = vmatprep.subr.mxu0 0.0
        %2658 = vmatpush2.xpose.msra.mxu0 0.0
        %2659 = vmatprep.subr.mxu0 0.0
        %2660 = vmatpush2.xpose.msra.mxu0 0.0
        %2661 = vmatprep.subr.mxu0 0.0
        %2662 = vmatpush2.xpose.msra.mxu0 0.0
        %2663 = vmatprep.subr.mxu0 0.0
        %2664 = vmatpush2.xpose.msra.mxu0 0.0
        %2665 = vmatprep.subr.mxu0 0.0
        %2666 = vmatpush2.xpose.msra.mxu0 0.0
        %2667 = vmatprep.subr.mxu0 0.0
        %2668 = vmatpush2.xpose.msra.mxu0 0.0
        %2669 = vmatprep.mubr.f32.mxu0 0.0
        %2670 = vmatmul.mubr.f32.gmra.mxu0 %v2596
        %v2671 = vpop.f32.mrf.mxu0
        %v2672 = vadd.f32 0.0, %v2671
        %v2673 = vpop.f32.mrf.mxu0
        %2674 = vmatprep.mubr.f32.mxu0 0.0
        %2675 = vmatmul.mubr.f32.gmra.mxu0 %v2599
        %v2676 = vpop.f32.mrf.mxu0
        %v2677 = vadd.f32 0.0, %v2676
        %v2678 = vpop.f32.mrf.mxu0
        %2679 = vdwg.mxu0
        %2682 = vrot.lane.b32.xlu0 %v2548, 96
        %v2683 = vpop.permute.xlu0 %2682
        %2684 = vrot.lane.b32.xlu0 %v2553, 96
        %v2685 = vpop.permute.xlu0 %2684
        %v2687 = vsel %vm2594, %v2558, 0
        %v2690 = vsel %vm2594, %v2559, 0
        %v2692 = vsel %vm2594, %v2683, 0
        %v2694 = vsel %vm2594, %v2685, 0
        %2696 = vmatprep.subr.mxu0 0.0
        %2697 = vmatpush1.xpose.msra.mxu0 0.0
        %2698 = vmatprep.subr.mxu0 0.0
        %2699 = vmatpush1.xpose.msra.mxu0 0.0
        %2700 = vmatprep.subr.mxu0 0.0
        %2701 = vmatpush1.xpose.msra.mxu0 0.0
        %2702 = vmatprep.subr.mxu0 0.0
        %2703 = vmatpush1.xpose.msra.mxu0 0.0
        %2704 = vmatprep.subr.mxu0 0.0
        %2705 = vmatpush1.xpose.msra.mxu0 0.0
        %2706 = vmatprep.subr.mxu0 0.0
        %2707 = vmatpush1.xpose.msra.mxu0 0.0
        %2708 = vmatprep.subr.mxu0 0.0
        %2709 = vmatpush1.xpose.msra.mxu0 0.0
        %2710 = vmatprep.subr.mxu0 0.0
        %2711 = vmatpush1.xpose.msra.mxu0 0.0
        %2712 = vmatprep.subr.mxu0 0.0
        %2713 = vmatpush1.xpose.msra.mxu0 0.0
        %2714 = vmatprep.subr.mxu0 0.0
        %2715 = vmatpush1.xpose.msra.mxu0 0.0
        %2716 = vmatprep.subr.mxu0 0.0
        %2717 = vmatpush1.xpose.msra.mxu0 0.0
        %2718 = vmatprep.subr.mxu0 0.0
        %2719 = vmatpush1.xpose.msra.mxu0 0.0
        %2720 = vmatprep.subr.mxu0 0.0
        %2721 = vmatpush1.xpose.msra.mxu0 0.0
        %2722 = vmatprep.subr.mxu0 0.0
        %2723 = vmatpush1.xpose.msra.mxu0 0.0
        %2724 = vmatprep.subr.mxu0 0.0
        %2725 = vmatpush1.xpose.msra.mxu0 %v2694
        %2726 = vmatprep.subr.mxu0 0.0
        %2727 = vmatpush1.xpose.msra.mxu0 %v2692
        %2728 = vmatprep.subr.mxu0 0.0
        %2729 = vmatpush2.xpose.msra.mxu0 0.0
        %2730 = vmatprep.subr.mxu0 0.0
        %2731 = vmatpush2.xpose.msra.mxu0 0.0
        %2732 = vmatprep.subr.mxu0 0.0
        %2733 = vmatpush2.xpose.msra.mxu0 0.0
        %2734 = vmatprep.subr.mxu0 0.0
        %2735 = vmatpush2.xpose.msra.mxu0 0.0
        %2736 = vmatprep.subr.mxu0 0.0
        %2737 = vmatpush2.xpose.msra.mxu0 0.0
        %2738 = vmatprep.subr.mxu0 0.0
        %2739 = vmatpush2.xpose.msra.mxu0 0.0
        %2740 = vmatprep.subr.mxu0 0.0
        %2741 = vmatpush2.xpose.msra.mxu0 0.0
        %2742 = vmatprep.subr.mxu0 0.0
        %2743 = vmatpush2.xpose.msra.mxu0 0.0
        %2744 = vmatprep.subr.mxu0 0.0
        %2745 = vmatpush2.xpose.msra.mxu0 0.0
        %2746 = vmatprep.subr.mxu0 0.0
        %2747 = vmatpush2.xpose.msra.mxu0 0.0
        %2748 = vmatprep.subr.mxu0 0.0
        %2749 = vmatpush2.xpose.msra.mxu0 0.0
        %2750 = vmatprep.subr.mxu0 0.0
        %2751 = vmatpush2.xpose.msra.mxu0 0.0
        %2752 = vmatprep.subr.mxu0 0.0
        %2753 = vmatpush2.xpose.msra.mxu0 0.0
        %2754 = vmatprep.subr.mxu0 0.0
        %2755 = vmatpush2.xpose.msra.mxu0 0.0
        %2756 = vmatprep.subr.mxu0 0.0
        %2757 = vmatpush2.xpose.msra.mxu0 0.0
        %2758 = vmatprep.subr.mxu0 0.0
        %2759 = vmatpush2.xpose.msra.mxu0 0.0
        %2760 = vmatprep.mubr.f32.mxu0 0.0
        %2761 = vmatmul.mubr.f32.gmra.mxu0 %v2687
        %v2762 = vpop.f32.mrf.mxu0
        %v2763 = vadd.f32 0.0, %v2762
        %v2764 = vpop.f32.mrf.mxu0
        %2765 = vmatprep.mubr.f32.mxu0 0.0
        %2766 = vmatmul.mubr.f32.gmra.mxu0 %v2690
        %v2767 = vpop.f32.mrf.mxu0
        %v2768 = vadd.f32 0.0, %v2767
        %v2769 = vpop.f32.mrf.mxu0
        %2770 = vdwg.mxu0
        %v2771 = vmul.f32 %v2672, %v2567
        %v2772 = vmul.f32 %v2677, %v2567
        %v2773 = vmul.f32 %v2763, %v2571
        %v2774 = vmul.f32 %v2768, %v2571
        %v2775 = vadd.f32 %v2771, %v2581
        %v2776 = vadd.f32 %v2772, %v2581
        %v2777 = vadd.f32 %v2773, %v2585
        %v2778 = vadd.f32 %v2774, %v2585
        %vm2779 = vcmask 130048
        %v2780 = vsel %vm2779, %v2775, -inf
        %2781 = vmax.xlane.f32.xlu0 %v2780
        %v2782 = vpop.xlane.xlu0 %2781
        %v2783 = vsel %vm2779, %v2776, -inf
        %2784 = vmax.xlane.f32.xlu0 %v2783
        %v2785 = vpop.xlane.xlu0 %2784
        %v2786 = vsel %vm2779, %v2777, -inf
        %2787 = vmax.xlane.f32.xlu0 %v2786
        %v2788 = vpop.xlane.xlu0 %2787
        %v2789 = vsel %vm2779, %v2778, -inf
        %2790 = vmax.xlane.f32.xlu0 %v2789
        %v2791 = vpop.xlane.xlu0 %2790
        %v2792 = vsub.f32 %v2775, %v2782
        %v2793 = vsub.f32 %v2776, %v2785
        %v2794 = vsub.f32 %v2777, %v2788
        %v2795 = vsub.f32 %v2778, %v2791
        %v2796 = vmul.f32 %v2792, 1.442695
        %v2797 = vpow.pop %v2796
        %v2798 = vmul.f32 %v2793, 1.442695
        %v2799 = vpow.pop %v2798
        %v2800 = vmul.f32 %v2794, 1.442695
        %v2801 = vpow.pop %v2800
        %v2802 = vmul.f32 %v2795, 1.442695
        %v2803 = vpow.pop %v2802
        %v2804 = vsel %vm2779, %v2797, 0.0
        %2805 = vadd.xlane.f32.xlu0 %v2804
        %v2806 = vpop.xlane.xlu0 %2805
        %v2807 = vsel %vm2779, %v2799, 0.0
        %2808 = vadd.xlane.f32.xlu0 %v2807
        %v2809 = vpop.xlane.xlu0 %2808
        %v2810 = vsel %vm2779, %v2801, 0.0
        %2811 = vadd.xlane.f32.xlu0 %v2810
        %v2812 = vpop.xlane.xlu0 %2811
        %v2813 = vsel %vm2779, %v2803, 0.0
        %2814 = vadd.xlane.f32.xlu0 %v2813
        %v2815 = vpop.xlane.xlu0 %2814
        %v2816 = vrcp.pop %v2806
        %v2817 = vrcp.pop %v2809
        %v2818 = vrcp.pop %v2812
        %v2819 = vrcp.pop %v2815
        %v2820 = vmul.f32 %v2806, %v2816
        %v2821 = vmul.f32 %v2809, %v2817
        %v2822 = vmul.f32 %v2812, %v2818
        %v2823 = vmul.f32 %v2815, %v2819
        %v2824 = vsub.f32 2.0, %v2820
        %v2825 = vsub.f32 2.0, %v2821
        %v2826 = vsub.f32 2.0, %v2822
        %v2827 = vsub.f32 2.0, %v2823
        %v2828 = vmul.f32 %v2816, %v2824
        %v2829 = vmul.f32 %v2817, %v2825
        %v2830 = vmul.f32 %v2818, %v2826
        %v2831 = vmul.f32 %v2819, %v2827
        %v2832 = vmul.f32 %v2797, %v2828
        %v2833 = vmul.f32 %v2799, %v2829
        %v2834 = vmul.f32 %v2801, %v2830
        %v2835 = vmul.f32 %v2803, %v2831
        %2836 = vrot.lane.b32.xlu0 %v2538, 64
        %v2837 = vpop.permute.xlu0 %2836
        %2838 = vrot.lane.b32.xlu0 %v2543, 64
        %v2839 = vpop.permute.xlu0 %2838
        %v2843 = vsel %vm2779, %v2832, 0
        %v2846 = vsel %vm2779, %v2833, 0
        %2848 = vmatprep.subr.mxu0 0.0
        %2849 = vmatpush1.msra.mxu0 0.0
        %2850 = vmatprep.subr.mxu0 0.0
        %2851 = vmatpush1.msra.mxu0 0.0
        %2852 = vmatprep.subr.mxu0 0.0
        %2853 = vmatpush1.msra.mxu0 0.0
        %2854 = vmatprep.subr.mxu0 0.0
        %2855 = vmatpush1.msra.mxu0 0.0
        %2856 = vmatprep.subr.mxu0 0.0
        %2857 = vmatpush1.msra.mxu0 0.0
        %2858 = vmatprep.subr.mxu0 0.0
        %2859 = vmatpush1.msra.mxu0 0.0
        %2860 = vmatprep.subr.mxu0 0.0
        %2861 = vmatpush1.msra.mxu0 0.0
        %2862 = vmatprep.subr.mxu0 0.0
        %2863 = vmatpush1.msra.mxu0 0.0
        %2864 = vmatprep.subr.mxu0 0.0
        %2865 = vmatpush1.msra.mxu0 0.0
        %2866 = vmatprep.subr.mxu0 0.0
        %2867 = vmatpush1.msra.mxu0 0.0
        %2868 = vmatprep.subr.mxu0 0.0
        %2869 = vmatpush1.msra.mxu0 0.0
        %2870 = vmatprep.subr.mxu0 0.0
        %2871 = vmatpush1.msra.mxu0 0.0
        %2872 = vmatprep.subr.mxu0 0.0
        %2873 = vmatpush1.msra.mxu0 0.0
        %2874 = vmatprep.subr.mxu0 0.0
        %2875 = vmatpush1.msra.mxu0 0.0
        %2876 = vmatprep.subr.mxu0 0.0
        %2877 = vmatpush1.msra.mxu0 %v2839
        %2878 = vmatprep.subr.mxu0 0.0
        %2879 = vmatpush1.msra.mxu0 %v2837
        %2880 = vmatprep.subr.mxu0 0.0
        %2881 = vmatpush2.msra.mxu0 0.0
        %2882 = vmatprep.subr.mxu0 0.0
        %2883 = vmatpush2.msra.mxu0 0.0
        %2884 = vmatprep.subr.mxu0 0.0
        %2885 = vmatpush2.msra.mxu0 0.0
        %2886 = vmatprep.subr.mxu0 0.0
        %2887 = vmatpush2.msra.mxu0 0.0
        %2888 = vmatprep.subr.mxu0 0.0
        %2889 = vmatpush2.msra.mxu0 0.0
        %2890 = vmatprep.subr.mxu0 0.0
        %2891 = vmatpush2.msra.mxu0 0.0
        %2892 = vmatprep.subr.mxu0 0.0
        %2893 = vmatpush2.msra.mxu0 0.0
        %2894 = vmatprep.subr.mxu0 0.0
        %2895 = vmatpush2.msra.mxu0 0.0
        %2896 = vmatprep.subr.mxu0 0.0
        %2897 = vmatpush2.msra.mxu0 0.0
        %2898 = vmatprep.subr.mxu0 0.0
        %2899 = vmatpush2.msra.mxu0 0.0
        %2900 = vmatprep.subr.mxu0 0.0
        %2901 = vmatpush2.msra.mxu0 0.0
        %2902 = vmatprep.subr.mxu0 0.0
        %2903 = vmatpush2.msra.mxu0 0.0
        %2904 = vmatprep.subr.mxu0 0.0
        %2905 = vmatpush2.msra.mxu0 0.0
        %2906 = vmatprep.subr.mxu0 0.0
        %2907 = vmatpush2.msra.mxu0 0.0
        %2908 = vmatprep.subr.mxu0 0.0
        %2909 = vmatpush2.msra.mxu0 0.0
        %2910 = vmatprep.subr.mxu0 0.0
        %2911 = vmatpush2.msra.mxu0 0.0
        %2912 = vmatprep.mubr.f32.mxu0 0.0
        %2913 = vmatmul.mubr.f32.gmra.mxu0 %v2843
        %v2914 = vpop.f32.mrf.mxu0
        %v2915 = vadd.f32 0.0, %v2914
        %v2916 = vpop.f32.mrf.mxu0
        %2917 = vmatprep.mubr.f32.mxu0 0.0
        %2918 = vmatmul.mubr.f32.gmra.mxu0 %v2846
        %v2919 = vpop.f32.mrf.mxu0
        %v2920 = vadd.f32 0.0, %v2919
        %v2921 = vpop.f32.mrf.mxu0
        %2922 = vdwg.mxu0
        %2923 = vrot.lane.b32.xlu0 %v2548, 64
        %v2924 = vpop.permute.xlu0 %2923
        %2925 = vrot.lane.b32.xlu0 %v2553, 64
        %v2926 = vpop.permute.xlu0 %2925
        %v2930 = vsel %vm2779, %v2834, 0
        %v2933 = vsel %vm2779, %v2835, 0
        %2935 = vmatprep.subr.mxu0 0.0
        %2936 = vmatpush1.msra.mxu0 0.0
        %2937 = vmatprep.subr.mxu0 0.0
        %2938 = vmatpush1.msra.mxu0 0.0
        %2939 = vmatprep.subr.mxu0 0.0
        %2940 = vmatpush1.msra.mxu0 0.0
        %2941 = vmatprep.subr.mxu0 0.0
        %2942 = vmatpush1.msra.mxu0 0.0
        %2943 = vmatprep.subr.mxu0 0.0
        %2944 = vmatpush1.msra.mxu0 0.0
        %2945 = vmatprep.subr.mxu0 0.0
        %2946 = vmatpush1.msra.mxu0 0.0
        %2947 = vmatprep.subr.mxu0 0.0
        %2948 = vmatpush1.msra.mxu0 0.0
        %2949 = vmatprep.subr.mxu0 0.0
        %2950 = vmatpush1.msra.mxu0 0.0
        %2951 = vmatprep.subr.mxu0 0.0
        %2952 = vmatpush1.msra.mxu0 0.0
        %2953 = vmatprep.subr.mxu0 0.0
        %2954 = vmatpush1.msra.mxu0 0.0
        %2955 = vmatprep.subr.mxu0 0.0
        %2956 = vmatpush1.msra.mxu0 0.0
        %2957 = vmatprep.subr.mxu0 0.0
        %2958 = vmatpush1.msra.mxu0 0.0
        %2959 = vmatprep.subr.mxu0 0.0
        %2960 = vmatpush1.msra.mxu0 0.0
        %2961 = vmatprep.subr.mxu0 0.0
        %2962 = vmatpush1.msra.mxu0 0.0
        %2963 = vmatprep.subr.mxu0 0.0
        %2964 = vmatpush1.msra.mxu0 %v2926
        %2965 = vmatprep.subr.mxu0 0.0
        %2966 = vmatpush1.msra.mxu0 %v2924
        %2967 = vmatprep.subr.mxu0 0.0
        %2968 = vmatpush2.msra.mxu0 0.0
        %2969 = vmatprep.subr.mxu0 0.0
        %2970 = vmatpush2.msra.mxu0 0.0
        %2971 = vmatprep.subr.mxu0 0.0
        %2972 = vmatpush2.msra.mxu0 0.0
        %2973 = vmatprep.subr.mxu0 0.0
        %2974 = vmatpush2.msra.mxu0 0.0
        %2975 = vmatprep.subr.mxu0 0.0
        %2976 = vmatpush2.msra.mxu0 0.0
        %2977 = vmatprep.subr.mxu0 0.0
        %2978 = vmatpush2.msra.mxu0 0.0
        %2979 = vmatprep.subr.mxu0 0.0
        %2980 = vmatpush2.msra.mxu0 0.0
        %2981 = vmatprep.subr.mxu0 0.0
        %2982 = vmatpush2.msra.mxu0 0.0
        %2983 = vmatprep.subr.mxu0 0.0
        %2984 = vmatpush2.msra.mxu0 0.0
        %2985 = vmatprep.subr.mxu0 0.0
        %2986 = vmatpush2.msra.mxu0 0.0
        %2987 = vmatprep.subr.mxu0 0.0
        %2988 = vmatpush2.msra.mxu0 0.0
        %2989 = vmatprep.subr.mxu0 0.0
        %2990 = vmatpush2.msra.mxu0 0.0
        %2991 = vmatprep.subr.mxu0 0.0
        %2992 = vmatpush2.msra.mxu0 0.0
        %2993 = vmatprep.subr.mxu0 0.0
        %2994 = vmatpush2.msra.mxu0 0.0
        %2995 = vmatprep.subr.mxu0 0.0
        %2996 = vmatpush2.msra.mxu0 0.0
        %2997 = vmatprep.subr.mxu0 0.0
        %2998 = vmatpush2.msra.mxu0 0.0
        %2999 = vmatprep.mubr.f32.mxu0 0.0
        %3000 = vmatmul.mubr.f32.gmra.mxu0 %v2930
        %v3001 = vpop.f32.mrf.mxu0
        %v3002 = vadd.f32 0.0, %v3001
        %v3003 = vpop.f32.mrf.mxu0
        %3004 = vmatprep.mubr.f32.mxu0 0.0
        %3005 = vmatmul.mubr.f32.gmra.mxu0 %v2933
        %v3006 = vpop.f32.mrf.mxu0
        %v3007 = vadd.f32 0.0, %v3006
        %v3008 = vpop.f32.mrf.mxu0
        %3009 = vdwg.mxu0
        %3010 = vst.msk [vmem:[#allocation2] sm:$0xff] %vm2594, %v2915
        %3011 = vst.msk [vmem:[#allocation2 + $0x8] sm:$0xff] %vm2594, %v2920
        %3012 = vst.msk [vmem:[#allocation2 + $0x10] sm:$0xff] %vm2594, %v3002
        %3013 = vst.msk [vmem:[#allocation2 + $0x18] sm:$0xff] %vm2594, %v3007
        %3014 = vrot.lane.b32.xlu0 %v2556, 120
        %v3015 = vpop.permute.xlu0 %3014
        %3016 = vrot.lane.b32.xlu0 %v2557, 120
        %v3017 = vpop.permute.xlu0 %3016
        %3018 = vrot.lane.b32.xlu0 %v2538, 88
        %v3019 = vpop.permute.xlu0 %3018
        %3020 = vrot.lane.b32.xlu0 %v2543, 88
        %v3021 = vpop.permute.xlu0 %3020
        %v3022 = vsel %vm2594, %v3015, 0
        %v3024 = vsel %vm2594, %v3017, 0
        %v3026 = vsel %vm2594, %v3019, 0
        %v3028 = vsel %vm2594, %v3021, 0
        %3030 = vmatprep.subr.mxu0 0.0
        %3031 = vmatpush1.xpose.msra.mxu0 0.0
        %3032 = vmatprep.subr.mxu0 0.0
        %3033 = vmatpush1.xpose.msra.mxu0 0.0
        %3034 = vmatprep.subr.mxu0 0.0
        %3035 = vmatpush1.xpose.msra.mxu0 0.0
        %3036 = vmatprep.subr.mxu0 0.0
        %3037 = vmatpush1.xpose.msra.mxu0 0.0
        %3038 = vmatprep.subr.mxu0 0.0
        %3039 = vmatpush1.xpose.msra.mxu0 0.0
        %3040 = vmatprep.subr.mxu0 0.0
        %3041 = vmatpush1.xpose.msra.mxu0 0.0
        %3042 = vmatprep.subr.mxu0 0.0
        %3043 = vmatpush1.xpose.msra.mxu0 0.0
        %3044 = vmatprep.subr.mxu0 0.0
        %3045 = vmatpush1.xpose.msra.mxu0 0.0
        %3046 = vmatprep.subr.mxu0 0.0
        %3047 = vmatpush1.xpose.msra.mxu0 0.0
        %3048 = vmatprep.subr.mxu0 0.0
        %3049 = vmatpush1.xpose.msra.mxu0 0.0
        %3050 = vmatprep.subr.mxu0 0.0
        %3051 = vmatpush1.xpose.msra.mxu0 0.0
        %3052 = vmatprep.subr.mxu0 0.0
        %3053 = vmatpush1.xpose.msra.mxu0 0.0
        %3054 = vmatprep.subr.mxu0 0.0
        %3055 = vmatpush1.xpose.msra.mxu0 0.0
        %3056 = vmatprep.subr.mxu0 0.0
        %3057 = vmatpush1.xpose.msra.mxu0 0.0
        %3058 = vmatprep.subr.mxu0 0.0
        %3059 = vmatpush1.xpose.msra.mxu0 %v3028
        %3060 = vmatprep.subr.mxu0 0.0
        %3061 = vmatpush1.xpose.msra.mxu0 %v3026
        %3062 = vmatprep.subr.mxu0 0.0
        %3063 = vmatpush2.xpose.msra.mxu0 0.0
        %3064 = vmatprep.subr.mxu0 0.0
        %3065 = vmatpush2.xpose.msra.mxu0 0.0
        %3066 = vmatprep.subr.mxu0 0.0
        %3067 = vmatpush2.xpose.msra.mxu0 0.0
        %3068 = vmatprep.subr.mxu0 0.0
        %3069 = vmatpush2.xpose.msra.mxu0 0.0
        %3070 = vmatprep.subr.mxu0 0.0
        %3071 = vmatpush2.xpose.msra.mxu0 0.0
        %3072 = vmatprep.subr.mxu0 0.0
        %3073 = vmatpush2.xpose.msra.mxu0 0.0
        %3074 = vmatprep.subr.mxu0 0.0
        %3075 = vmatpush2.xpose.msra.mxu0 0.0
        %3076 = vmatprep.subr.mxu0 0.0
        %3077 = vmatpush2.xpose.msra.mxu0 0.0
        %3078 = vmatprep.subr.mxu0 0.0
        %3079 = vmatpush2.xpose.msra.mxu0 0.0
        %3080 = vmatprep.subr.mxu0 0.0
        %3081 = vmatpush2.xpose.msra.mxu0 0.0
        %3082 = vmatprep.subr.mxu0 0.0
        %3083 = vmatpush2.xpose.msra.mxu0 0.0
        %3084 = vmatprep.subr.mxu0 0.0
        %3085 = vmatpush2.xpose.msra.mxu0 0.0
        %3086 = vmatprep.subr.mxu0 0.0
        %3087 = vmatpush2.xpose.msra.mxu0 0.0
        %3088 = vmatprep.subr.mxu0 0.0
        %3089 = vmatpush2.xpose.msra.mxu0 0.0
        %3090 = vmatprep.subr.mxu0 0.0
        %3091 = vmatpush2.xpose.msra.mxu0 0.0
        %3092 = vmatprep.subr.mxu0 0.0
        %3093 = vmatpush2.xpose.msra.mxu0 0.0
        %3094 = vmatprep.mubr.f32.mxu0 0.0
        %3095 = vmatmul.mubr.f32.gmra.mxu0 %v3022
        %v3096 = vpop.f32.mrf.mxu0
        %v3097 = vadd.f32 0.0, %v3096
        %v3098 = vpop.f32.mrf.mxu0
        %3099 = vmatprep.mubr.f32.mxu0 0.0
        %3100 = vmatmul.mubr.f32.gmra.mxu0 %v3024
        %v3101 = vpop.f32.mrf.mxu0
        %v3102 = vadd.f32 0.0, %v3101
        %v3103 = vpop.f32.mrf.mxu0
        %3104 = vdwg.mxu0
        %3105 = vrot.lane.b32.xlu0 %v2558, 120
        %v3106 = vpop.permute.xlu0 %3105
        %3107 = vrot.lane.b32.xlu0 %v2559, 120
        %v3108 = vpop.permute.xlu0 %3107
        %3109 = vrot.lane.b32.xlu0 %v2548, 88
        %v3110 = vpop.permute.xlu0 %3109
        %3111 = vrot.lane.b32.xlu0 %v2553, 88
        %v3112 = vpop.permute.xlu0 %3111
        %v3113 = vsel %vm2594, %v3106, 0
        %v3115 = vsel %vm2594, %v3108, 0
        %v3117 = vsel %vm2594, %v3110, 0
        %v3119 = vsel %vm2594, %v3112, 0
        %3121 = vmatprep.subr.mxu0 0.0
        %3122 = vmatpush1.xpose.msra.mxu0 0.0
        %3123 = vmatprep.subr.mxu0 0.0
        %3124 = vmatpush1.xpose.msra.mxu0 0.0
        %3125 = vmatprep.subr.mxu0 0.0
        %3126 = vmatpush1.xpose.msra.mxu0 0.0
        %3127 = vmatprep.subr.mxu0 0.0
        %3128 = vmatpush1.xpose.msra.mxu0 0.0
        %3129 = vmatprep.subr.mxu0 0.0
        %3130 = vmatpush1.xpose.msra.mxu0 0.0
        %3131 = vmatprep.subr.mxu0 0.0
        %3132 = vmatpush1.xpose.msra.mxu0 0.0
        %3133 = vmatprep.subr.mxu0 0.0
        %3134 = vmatpush1.xpose.msra.mxu0 0.0
        %3135 = vmatprep.subr.mxu0 0.0
        %3136 = vmatpush1.xpose.msra.mxu0 0.0
        %3137 = vmatprep.subr.mxu0 0.0
        %3138 = vmatpush1.xpose.msra.mxu0 0.0
        %3139 = vmatprep.subr.mxu0 0.0
        %3140 = vmatpush1.xpose.msra.mxu0 0.0
        %3141 = vmatprep.subr.mxu0 0.0
        %3142 = vmatpush1.xpose.msra.mxu0 0.0
        %3143 = vmatprep.subr.mxu0 0.0
        %3144 = vmatpush1.xpose.msra.mxu0 0.0
        %3145 = vmatprep.subr.mxu0 0.0
        %3146 = vmatpush1.xpose.msra.mxu0 0.0
        %3147 = vmatprep.subr.mxu0 0.0
        %3148 = vmatpush1.xpose.msra.mxu0 0.0
        %3149 = vmatprep.subr.mxu0 0.0
        %3150 = vmatpush1.xpose.msra.mxu0 %v3119
        %3151 = vmatprep.subr.mxu0 0.0
        %3152 = vmatpush1.xpose.msra.mxu0 %v3117
        %3153 = vmatprep.subr.mxu0 0.0
        %3154 = vmatpush2.xpose.msra.mxu0 0.0
        %3155 = vmatprep.subr.mxu0 0.0
        %3156 = vmatpush2.xpose.msra.mxu0 0.0
        %3157 = vmatprep.subr.mxu0 0.0
        %3158 = vmatpush2.xpose.msra.mxu0 0.0
        %3159 = vmatprep.subr.mxu0 0.0
        %3160 = vmatpush2.xpose.msra.mxu0 0.0
        %3161 = vmatprep.subr.mxu0 0.0
        %3162 = vmatpush2.xpose.msra.mxu0 0.0
        %3163 = vmatprep.subr.mxu0 0.0
        %3164 = vmatpush2.xpose.msra.mxu0 0.0
        %3165 = vmatprep.subr.mxu0 0.0
        %3166 = vmatpush2.xpose.msra.mxu0 0.0
        %3167 = vmatprep.subr.mxu0 0.0
        %3168 = vmatpush2.xpose.msra.mxu0 0.0
        %3169 = vmatprep.subr.mxu0 0.0
        %3170 = vmatpush2.xpose.msra.mxu0 0.0
        %3171 = vmatprep.subr.mxu0 0.0
        %3172 = vmatpush2.xpose.msra.mxu0 0.0
        %3173 = vmatprep.subr.mxu0 0.0
        %3174 = vmatpush2.xpose.msra.mxu0 0.0
        %3175 = vmatprep.subr.mxu0 0.0
        %3176 = vmatpush2.xpose.msra.mxu0 0.0
        %3177 = vmatprep.subr.mxu0 0.0
        %3178 = vmatpush2.xpose.msra.mxu0 0.0
        %3179 = vmatprep.subr.mxu0 0.0
        %3180 = vmatpush2.xpose.msra.mxu0 0.0
        %3181 = vmatprep.subr.mxu0 0.0
        %3182 = vmatpush2.xpose.msra.mxu0 0.0
        %3183 = vmatprep.subr.mxu0 0.0
        %3184 = vmatpush2.xpose.msra.mxu0 0.0
        %3185 = vmatprep.mubr.f32.mxu0 0.0
        %3186 = vmatmul.mubr.f32.gmra.mxu0 %v3113
        %v3187 = vpop.f32.mrf.mxu0
        %v3188 = vadd.f32 0.0, %v3187
        %v3189 = vpop.f32.mrf.mxu0
        %3190 = vmatprep.mubr.f32.mxu0 0.0
        %3191 = vmatmul.mubr.f32.gmra.mxu0 %v3115
        %v3192 = vpop.f32.mrf.mxu0
        %v3193 = vadd.f32 0.0, %v3192
        %v3194 = vpop.f32.mrf.mxu0
        %3195 = vdwg.mxu0
        %v3196 = vmul.f32 %v3097, %v2567
        %v3197 = vmul.f32 %v3102, %v2567
        %v3198 = vmul.f32 %v3188, %v2571
        %v3199 = vmul.f32 %v3193, %v2571
        %v3200 = vadd.f32 %v3196, %v2581
        %v3201 = vadd.f32 %v3197, %v2581
        %v3202 = vadd.f32 %v3198, %v2585
        %v3203 = vadd.f32 %v3199, %v2585
        %v3204 = vsel %vm2779, %v3200, -inf
        %3205 = vmax.xlane.f32.xlu0 %v3204
        %v3206 = vpop.xlane.xlu0 %3205
        %v3207 = vsel %vm2779, %v3201, -inf
        %3208 = vmax.xlane.f32.xlu0 %v3207
        %v3209 = vpop.xlane.xlu0 %3208
        %v3210 = vsel %vm2779, %v3202, -inf
        %3211 = vmax.xlane.f32.xlu0 %v3210
        %v3212 = vpop.xlane.xlu0 %3211
        %v3213 = vsel %vm2779, %v3203, -inf
        %3214 = vmax.xlane.f32.xlu0 %v3213
        %v3215 = vpop.xlane.xlu0 %3214
        %v3216 = vsub.f32 %v3200, %v3206
        %v3217 = vsub.f32 %v3201, %v3209
        %v3218 = vsub.f32 %v3202, %v3212
        %v3219 = vsub.f32 %v3203, %v3215
        %v3220 = vmul.f32 %v3216, 1.442695
        %v3221 = vpow.pop %v3220
        %v3222 = vmul.f32 %v3217, 1.442695
        %v3223 = vpow.pop %v3222
        %v3224 = vmul.f32 %v3218, 1.442695
        %v3225 = vpow.pop %v3224
        %v3226 = vmul.f32 %v3219, 1.442695
        %v3227 = vpow.pop %v3226
        %v3228 = vsel %vm2779, %v3221, 0.0
        %3229 = vadd.xlane.f32.xlu0 %v3228
        %v3230 = vpop.xlane.xlu0 %3229
        %v3231 = vsel %vm2779, %v3223, 0.0
        %3232 = vadd.xlane.f32.xlu0 %v3231
        %v3233 = vpop.xlane.xlu0 %3232
        %v3234 = vsel %vm2779, %v3225, 0.0
        %3235 = vadd.xlane.f32.xlu0 %v3234
        %v3236 = vpop.xlane.xlu0 %3235
        %v3237 = vsel %vm2779, %v3227, 0.0
        %3238 = vadd.xlane.f32.xlu0 %v3237
        %v3239 = vpop.xlane.xlu0 %3238
        %v3240 = vrcp.pop %v3230
        %v3241 = vrcp.pop %v3233
        %v3242 = vrcp.pop %v3236
        %v3243 = vrcp.pop %v3239
        %v3244 = vmul.f32 %v3230, %v3240
        %v3245 = vmul.f32 %v3233, %v3241
        %v3246 = vmul.f32 %v3236, %v3242
        %v3247 = vmul.f32 %v3239, %v3243
        %v3248 = vsub.f32 2.0, %v3244
        %v3249 = vsub.f32 2.0, %v3245
        %v3250 = vsub.f32 2.0, %v3246
        %v3251 = vsub.f32 2.0, %v3247
        %v3252 = vmul.f32 %v3240, %v3248
        %v3253 = vmul.f32 %v3241, %v3249
        %v3254 = vmul.f32 %v3242, %v3250
        %v3255 = vmul.f32 %v3243, %v3251
        %v3256 = vmul.f32 %v3221, %v3252
        %v3257 = vmul.f32 %v3223, %v3253
        %v3258 = vmul.f32 %v3225, %v3254
        %v3259 = vmul.f32 %v3227, %v3255
        %3260 = vrot.lane.b32.xlu0 %v2538, 56
        %v3261 = vpop.permute.xlu0 %3260
        %3262 = vrot.lane.b32.xlu0 %v2543, 56
        %v3263 = vpop.permute.xlu0 %3262
        %v3267 = vsel %vm2779, %v3256, 0
        %v3270 = vsel %vm2779, %v3257, 0
        %3272 = vmatprep.subr.mxu0 0.0
        %3273 = vmatpush1.msra.mxu0 0.0
        %3274 = vmatprep.subr.mxu0 0.0
        %3275 = vmatpush1.msra.mxu0 0.0
        %3276 = vmatprep.subr.mxu0 0.0
        %3277 = vmatpush1.msra.mxu0 0.0
        %3278 = vmatprep.subr.mxu0 0.0
        %3279 = vmatpush1.msra.mxu0 0.0
        %3280 = vmatprep.subr.mxu0 0.0
        %3281 = vmatpush1.msra.mxu0 0.0
        %3282 = vmatprep.subr.mxu0 0.0
        %3283 = vmatpush1.msra.mxu0 0.0
        %3284 = vmatprep.subr.mxu0 0.0
        %3285 = vmatpush1.msra.mxu0 0.0
        %3286 = vmatprep.subr.mxu0 0.0
        %3287 = vmatpush1.msra.mxu0 0.0
        %3288 = vmatprep.subr.mxu0 0.0
        %3289 = vmatpush1.msra.mxu0 0.0
        %3290 = vmatprep.subr.mxu0 0.0
        %3291 = vmatpush1.msra.mxu0 0.0
        %3292 = vmatprep.subr.mxu0 0.0
        %3293 = vmatpush1.msra.mxu0 0.0
        %3294 = vmatprep.subr.mxu0 0.0
        %3295 = vmatpush1.msra.mxu0 0.0
        %3296 = vmatprep.subr.mxu0 0.0
        %3297 = vmatpush1.msra.mxu0 0.0
        %3298 = vmatprep.subr.mxu0 0.0
        %3299 = vmatpush1.msra.mxu0 0.0
        %3300 = vmatprep.subr.mxu0 0.0
        %3301 = vmatpush1.msra.mxu0 %v3263
        %3302 = vmatprep.subr.mxu0 0.0
        %3303 = vmatpush1.msra.mxu0 %v3261
        %3304 = vmatprep.subr.mxu0 0.0
        %3305 = vmatpush2.msra.mxu0 0.0
        %3306 = vmatprep.subr.mxu0 0.0
        %3307 = vmatpush2.msra.mxu0 0.0
        %3308 = vmatprep.subr.mxu0 0.0
        %3309 = vmatpush2.msra.mxu0 0.0
        %3310 = vmatprep.subr.mxu0 0.0
        %3311 = vmatpush2.msra.mxu0 0.0
        %3312 = vmatprep.subr.mxu0 0.0
        %3313 = vmatpush2.msra.mxu0 0.0
        %3314 = vmatprep.subr.mxu0 0.0
        %3315 = vmatpush2.msra.mxu0 0.0
        %3316 = vmatprep.subr.mxu0 0.0
        %3317 = vmatpush2.msra.mxu0 0.0
        %3318 = vmatprep.subr.mxu0 0.0
        %3319 = vmatpush2.msra.mxu0 0.0
        %3320 = vmatprep.subr.mxu0 0.0
        %3321 = vmatpush2.msra.mxu0 0.0
        %3322 = vmatprep.subr.mxu0 0.0
        %3323 = vmatpush2.msra.mxu0 0.0
        %3324 = vmatprep.subr.mxu0 0.0
        %3325 = vmatpush2.msra.mxu0 0.0
        %3326 = vmatprep.subr.mxu0 0.0
        %3327 = vmatpush2.msra.mxu0 0.0
        %3328 = vmatprep.subr.mxu0 0.0
        %3329 = vmatpush2.msra.mxu0 0.0
        %3330 = vmatprep.subr.mxu0 0.0
        %3331 = vmatpush2.msra.mxu0 0.0
        %3332 = vmatprep.subr.mxu0 0.0
        %3333 = vmatpush2.msra.mxu0 0.0
        %3334 = vmatprep.subr.mxu0 0.0
        %3335 = vmatpush2.msra.mxu0 0.0
        %3336 = vmatprep.mubr.f32.mxu0 0.0
        %3337 = vmatmul.mubr.f32.gmra.mxu0 %v3267
        %v3338 = vpop.f32.mrf.mxu0
        %v3339 = vadd.f32 0.0, %v3338
        %v3340 = vpop.f32.mrf.mxu0
        %3341 = vmatprep.mubr.f32.mxu0 0.0
        %3342 = vmatmul.mubr.f32.gmra.mxu0 %v3270
        %v3343 = vpop.f32.mrf.mxu0
        %v3344 = vadd.f32 0.0, %v3343
        %v3345 = vpop.f32.mrf.mxu0
        %3346 = vdwg.mxu0
        %3347 = vrot.lane.b32.xlu0 %v2548, 56
        %v3348 = vpop.permute.xlu0 %3347
        %3349 = vrot.lane.b32.xlu0 %v2553, 56
        %v3350 = vpop.permute.xlu0 %3349
        %v3354 = vsel %vm2779, %v3258, 0
        %v3357 = vsel %vm2779, %v3259, 0
        %3359 = vmatprep.subr.mxu0 0.0
        %3360 = vmatpush1.msra.mxu0 0.0
        %3361 = vmatprep.subr.mxu0 0.0
        %3362 = vmatpush1.msra.mxu0 0.0
        %3363 = vmatprep.subr.mxu0 0.0
        %3364 = vmatpush1.msra.mxu0 0.0
        %3365 = vmatprep.subr.mxu0 0.0
        %3366 = vmatpush1.msra.mxu0 0.0
        %3367 = vmatprep.subr.mxu0 0.0
        %3368 = vmatpush1.msra.mxu0 0.0
        %3369 = vmatprep.subr.mxu0 0.0
        %3370 = vmatpush1.msra.mxu0 0.0
        %3371 = vmatprep.subr.mxu0 0.0
        %3372 = vmatpush1.msra.mxu0 0.0
        %3373 = vmatprep.subr.mxu0 0.0
        %3374 = vmatpush1.msra.mxu0 0.0
        %3375 = vmatprep.subr.mxu0 0.0
        %3376 = vmatpush1.msra.mxu0 0.0
        %3377 = vmatprep.subr.mxu0 0.0
        %3378 = vmatpush1.msra.mxu0 0.0
        %3379 = vmatprep.subr.mxu0 0.0
        %3380 = vmatpush1.msra.mxu0 0.0
        %3381 = vmatprep.subr.mxu0 0.0
        %3382 = vmatpush1.msra.mxu0 0.0
        %3383 = vmatprep.subr.mxu0 0.0
        %3384 = vmatpush1.msra.mxu0 0.0
        %3385 = vmatprep.subr.mxu0 0.0
        %3386 = vmatpush1.msra.mxu0 0.0
        %3387 = vmatprep.subr.mxu0 0.0
        %3388 = vmatpush1.msra.mxu0 %v3350
        %3389 = vmatprep.subr.mxu0 0.0
        %3390 = vmatpush1.msra.mxu0 %v3348
        %3391 = vmatprep.subr.mxu0 0.0
        %3392 = vmatpush2.msra.mxu0 0.0
        %3393 = vmatprep.subr.mxu0 0.0
        %3394 = vmatpush2.msra.mxu0 0.0
        %3395 = vmatprep.subr.mxu0 0.0
        %3396 = vmatpush2.msra.mxu0 0.0
        %3397 = vmatprep.subr.mxu0 0.0
        %3398 = vmatpush2.msra.mxu0 0.0
        %3399 = vmatprep.subr.mxu0 0.0
        %3400 = vmatpush2.msra.mxu0 0.0
        %3401 = vmatprep.subr.mxu0 0.0
        %3402 = vmatpush2.msra.mxu0 0.0
        %3403 = vmatprep.subr.mxu0 0.0
        %3404 = vmatpush2.msra.mxu0 0.0
        %3405 = vmatprep.subr.mxu0 0.0
        %3406 = vmatpush2.msra.mxu0 0.0
        %3407 = vmatprep.subr.mxu0 0.0
        %3408 = vmatpush2.msra.mxu0 0.0
        %3409 = vmatprep.subr.mxu0 0.0
        %3410 = vmatpush2.msra.mxu0 0.0
        %3411 = vmatprep.subr.mxu0 0.0
        %3412 = vmatpush2.msra.mxu0 0.0
        %3413 = vmatprep.subr.mxu0 0.0
        %3414 = vmatpush2.msra.mxu0 0.0
        %3415 = vmatprep.subr.mxu0 0.0
        %3416 = vmatpush2.msra.mxu0 0.0
        %3417 = vmatprep.subr.mxu0 0.0
        %3418 = vmatpush2.msra.mxu0 0.0
        %3419 = vmatprep.subr.mxu0 0.0
        %3420 = vmatpush2.msra.mxu0 0.0
        %3421 = vmatprep.subr.mxu0 0.0
        %3422 = vmatpush2.msra.mxu0 0.0
        %3423 = vmatprep.mubr.f32.mxu0 0.0
        %3424 = vmatmul.mubr.f32.gmra.mxu0 %v3354
        %v3425 = vpop.f32.mrf.mxu0
        %v3426 = vadd.f32 0.0, %v3425
        %v3427 = vpop.f32.mrf.mxu0
        %3428 = vmatprep.mubr.f32.mxu0 0.0
        %3429 = vmatmul.mubr.f32.gmra.mxu0 %v3357
        %v3430 = vpop.f32.mrf.mxu0
        %v3431 = vadd.f32 0.0, %v3430
        %v3432 = vpop.f32.mrf.mxu0
        %3433 = vdwg.mxu0
        %3438 = vrot.lane.b32.xlu0 %v3339, 8
        %v3439 = vpop.permute.xlu0 %3438
        %3440 = vrot.lane.b32.xlu0 %v3344, 8
        %v3441 = vpop.permute.xlu0 %3440
        %3442 = vrot.lane.b32.xlu0 %v3426, 8
        %v3443 = vpop.permute.xlu0 %3442
        %3444 = vrot.lane.b32.xlu0 %v3431, 8
        %v3445 = vpop.permute.xlu0 %3444
        %vm3450 = vcmask 130112
        %3451 = vst.msk [vmem:[#allocation2] sm:$0xff] %vm3450, %v3439
        %3452 = vst.msk [vmem:[#allocation2 + $0x8] sm:$0xff] %vm3450, %v3441
        %3453 = vst.msk [vmem:[#allocation2 + $0x10] sm:$0xff] %vm3450, %v3443
        %3454 = vst.msk [vmem:[#allocation2 + $0x18] sm:$0xff] %vm3450, %v3445
        %3455 = vrot.lane.b32.xlu0 %v2556, 112
        %v3456 = vpop.permute.xlu0 %3455
        %3457 = vrot.lane.b32.xlu0 %v2557, 112
        %v3458 = vpop.permute.xlu0 %3457
        %3459 = vrot.lane.b32.xlu0 %v2538, 80
        %v3460 = vpop.permute.xlu0 %3459
        %3461 = vrot.lane.b32.xlu0 %v2543, 80
        %v3462 = vpop.permute.xlu0 %3461
        %v3463 = vsel %vm2594, %v3456, 0
        %v3465 = vsel %vm2594, %v3458, 0
        %v3467 = vsel %vm2594, %v3460, 0
        %v3469 = vsel %vm2594, %v3462, 0
        %3471 = vmatprep.subr.mxu0 0.0
        %3472 = vmatpush1.xpose.msra.mxu0 0.0
        %3473 = vmatprep.subr.mxu0 0.0
        %3474 = vmatpush1.xpose.msra.mxu0 0.0
        %3475 = vmatprep.subr.mxu0 0.0
        %3476 = vmatpush1.xpose.msra.mxu0 0.0
        %3477 = vmatprep.subr.mxu0 0.0
        %3478 = vmatpush1.xpose.msra.mxu0 0.0
        %3479 = vmatprep.subr.mxu0 0.0
        %3480 = vmatpush1.xpose.msra.mxu0 0.0
        %3481 = vmatprep.subr.mxu0 0.0
        %3482 = vmatpush1.xpose.msra.mxu0 0.0
        %3483 = vmatprep.subr.mxu0 0.0
        %3484 = vmatpush1.xpose.msra.mxu0 0.0
        %3485 = vmatprep.subr.mxu0 0.0
        %3486 = vmatpush1.xpose.msra.mxu0 0.0
        %3487 = vmatprep.subr.mxu0 0.0
        %3488 = vmatpush1.xpose.msra.mxu0 0.0
        %3489 = vmatprep.subr.mxu0 0.0
        %3490 = vmatpush1.xpose.msra.mxu0 0.0
        %3491 = vmatprep.subr.mxu0 0.0
        %3492 = vmatpush1.xpose.msra.mxu0 0.0
        %3493 = vmatprep.subr.mxu0 0.0
        %3494 = vmatpush1.xpose.msra.mxu0 0.0
        %3495 = vmatprep.subr.mxu0 0.0
        %3496 = vmatpush1.xpose.msra.mxu0 0.0
        %3497 = vmatprep.subr.mxu0 0.0
        %3498 = vmatpush1.xpose.msra.mxu0 0.0
        %3499 = vmatprep.subr.mxu0 0.0
        %3500 = vmatpush1.xpose.msra.mxu0 %v3469
        %3501 = vmatprep.subr.mxu0 0.0
        %3502 = vmatpush1.xpose.msra.mxu0 %v3467
        %3503 = vmatprep.subr.mxu0 0.0
        %3504 = vmatpush2.xpose.msra.mxu0 0.0
        %3505 = vmatprep.subr.mxu0 0.0
        %3506 = vmatpush2.xpose.msra.mxu0 0.0
        %3507 = vmatprep.subr.mxu0 0.0
        %3508 = vmatpush2.xpose.msra.mxu0 0.0
        %3509 = vmatprep.subr.mxu0 0.0
        %3510 = vmatpush2.xpose.msra.mxu0 0.0
        %3511 = vmatprep.subr.mxu0 0.0
        %3512 = vmatpush2.xpose.msra.mxu0 0.0
        %3513 = vmatprep.subr.mxu0 0.0
        %3514 = vmatpush2.xpose.msra.mxu0 0.0
        %3515 = vmatprep.subr.mxu0 0.0
        %3516 = vmatpush2.xpose.msra.mxu0 0.0
        %3517 = vmatprep.subr.mxu0 0.0
        %3518 = vmatpush2.xpose.msra.mxu0 0.0
        %3519 = vmatprep.subr.mxu0 0.0
        %3520 = vmatpush2.xpose.msra.mxu0 0.0
        %3521 = vmatprep.subr.mxu0 0.0
        %3522 = vmatpush2.xpose.msra.mxu0 0.0
        %3523 = vmatprep.subr.mxu0 0.0
        %3524 = vmatpush2.xpose.msra.mxu0 0.0
        %3525 = vmatprep.subr.mxu0 0.0
        %3526 = vmatpush2.xpose.msra.mxu0 0.0
        %3527 = vmatprep.subr.mxu0 0.0
        %3528 = vmatpush2.xpose.msra.mxu0 0.0
        %3529 = vmatprep.subr.mxu0 0.0
        %3530 = vmatpush2.xpose.msra.mxu0 0.0
        %3531 = vmatprep.subr.mxu0 0.0
        %3532 = vmatpush2.xpose.msra.mxu0 0.0
        %3533 = vmatprep.subr.mxu0 0.0
        %3534 = vmatpush2.xpose.msra.mxu0 0.0
        %3535 = vmatprep.mubr.f32.mxu0 0.0
        %3536 = vmatmul.mubr.f32.gmra.mxu0 %v3463
        %v3537 = vpop.f32.mrf.mxu0
        %v3538 = vadd.f32 0.0, %v3537
        %v3539 = vpop.f32.mrf.mxu0
        %3540 = vmatprep.mubr.f32.mxu0 0.0
        %3541 = vmatmul.mubr.f32.gmra.mxu0 %v3465
        %v3542 = vpop.f32.mrf.mxu0
        %v3543 = vadd.f32 0.0, %v3542
        %v3544 = vpop.f32.mrf.mxu0
        %3545 = vdwg.mxu0
        %3546 = vrot.lane.b32.xlu0 %v2558, 112
        %v3547 = vpop.permute.xlu0 %3546
        %3548 = vrot.lane.b32.xlu0 %v2559, 112
        %v3549 = vpop.permute.xlu0 %3548
        %3550 = vrot.lane.b32.xlu0 %v2548, 80
        %v3551 = vpop.permute.xlu0 %3550
        %3552 = vrot.lane.b32.xlu0 %v2553, 80
        %v3553 = vpop.permute.xlu0 %3552
        %v3554 = vsel %vm2594, %v3547, 0
        %v3556 = vsel %vm2594, %v3549, 0
        %v3558 = vsel %vm2594, %v3551, 0
        %v3560 = vsel %vm2594, %v3553, 0
        %3562 = vmatprep.subr.mxu0 0.0
        %3563 = vmatpush1.xpose.msra.mxu0 0.0
        %3564 = vmatprep.subr.mxu0 0.0
        %3565 = vmatpush1.xpose.msra.mxu0 0.0
        %3566 = vmatprep.subr.mxu0 0.0
        %3567 = vmatpush1.xpose.msra.mxu0 0.0
        %3568 = vmatprep.subr.mxu0 0.0
        %3569 = vmatpush1.xpose.msra.mxu0 0.0
        %3570 = vmatprep.subr.mxu0 0.0
        %3571 = vmatpush1.xpose.msra.mxu0 0.0
        %3572 = vmatprep.subr.mxu0 0.0
        %3573 = vmatpush1.xpose.msra.mxu0 0.0
        %3574 = vmatprep.subr.mxu0 0.0
        %3575 = vmatpush1.xpose.msra.mxu0 0.0
        %3576 = vmatprep.subr.mxu0 0.0
        %3577 = vmatpush1.xpose.msra.mxu0 0.0
        %3578 = vmatprep.subr.mxu0 0.0
        %3579 = vmatpush1.xpose.msra.mxu0 0.0
        %3580 = vmatprep.subr.mxu0 0.0
        %3581 = vmatpush1.xpose.msra.mxu0 0.0
        %3582 = vmatprep.subr.mxu0 0.0
        %3583 = vmatpush1.xpose.msra.mxu0 0.0
        %3584 = vmatprep.subr.mxu0 0.0
        %3585 = vmatpush1.xpose.msra.mxu0 0.0
        %3586 = vmatprep.subr.mxu0 0.0
        %3587 = vmatpush1.xpose.msra.mxu0 0.0
        %3588 = vmatprep.subr.mxu0 0.0
        %3589 = vmatpush1.xpose.msra.mxu0 0.0
        %3590 = vmatprep.subr.mxu0 0.0
        %3591 = vmatpush1.xpose.msra.mxu0 %v3560
        %3592 = vmatprep.subr.mxu0 0.0
        %3593 = vmatpush1.xpose.msra.mxu0 %v3558
        %3594 = vmatprep.subr.mxu0 0.0
        %3595 = vmatpush2.xpose.msra.mxu0 0.0
        %3596 = vmatprep.subr.mxu0 0.0
        %3597 = vmatpush2.xpose.msra.mxu0 0.0
        %3598 = vmatprep.subr.mxu0 0.0
        %3599 = vmatpush2.xpose.msra.mxu0 0.0
        %3600 = vmatprep.subr.mxu0 0.0
        %3601 = vmatpush2.xpose.msra.mxu0 0.0
        %3602 = vmatprep.subr.mxu0 0.0
        %3603 = vmatpush2.xpose.msra.mxu0 0.0
        %3604 = vmatprep.subr.mxu0 0.0
        %3605 = vmatpush2.xpose.msra.mxu0 0.0
        %3606 = vmatprep.subr.mxu0 0.0
        %3607 = vmatpush2.xpose.msra.mxu0 0.0
        %3608 = vmatprep.subr.mxu0 0.0
        %3609 = vmatpush2.xpose.msra.mxu0 0.0
        %3610 = vmatprep.subr.mxu0 0.0
        %3611 = vmatpush2.xpose.msra.mxu0 0.0
        %3612 = vmatprep.subr.mxu0 0.0
        %3613 = vmatpush2.xpose.msra.mxu0 0.0
        %3614 = vmatprep.subr.mxu0 0.0
        %3615 = vmatpush2.xpose.msra.mxu0 0.0
        %3616 = vmatprep.subr.mxu0 0.0
        %3617 = vmatpush2.xpose.msra.mxu0 0.0
        %3618 = vmatprep.subr.mxu0 0.0
        %3619 = vmatpush2.xpose.msra.mxu0 0.0
        %3620 = vmatprep.subr.mxu0 0.0
        %3621 = vmatpush2.xpose.msra.mxu0 0.0
        %3622 = vmatprep.subr.mxu0 0.0
        %3623 = vmatpush2.xpose.msra.mxu0 0.0
        %3624 = vmatprep.subr.mxu0 0.0
        %3625 = vmatpush2.xpose.msra.mxu0 0.0
        %3626 = vmatprep.mubr.f32.mxu0 0.0
        %3627 = vmatmul.mubr.f32.gmra.mxu0 %v3554
        %v3628 = vpop.f32.mrf.mxu0
        %v3629 = vadd.f32 0.0, %v3628
        %v3630 = vpop.f32.mrf.mxu0
        %3631 = vmatprep.mubr.f32.mxu0 0.0
        %3632 = vmatmul.mubr.f32.gmra.mxu0 %v3556
        %v3633 = vpop.f32.mrf.mxu0
        %v3634 = vadd.f32 0.0, %v3633
        %v3635 = vpop.f32.mrf.mxu0
        %3636 = vdwg.mxu0
        %v3637 = vmul.f32 %v3538, %v2567
        %v3638 = vmul.f32 %v3543, %v2567
        %v3639 = vmul.f32 %v3629, %v2571
        %v3640 = vmul.f32 %v3634, %v2571
        %v3641 = vadd.f32 %v3637, %v2581
        %v3642 = vadd.f32 %v3638, %v2581
        %v3643 = vadd.f32 %v3639, %v2585
        %v3644 = vadd.f32 %v3640, %v2585
        %v3645 = vsel %vm2779, %v3641, -inf
        %3646 = vmax.xlane.f32.xlu0 %v3645
        %v3647 = vpop.xlane.xlu0 %3646
        %v3648 = vsel %vm2779, %v3642, -inf
        %3649 = vmax.xlane.f32.xlu0 %v3648
        %v3650 = vpop.xlane.xlu0 %3649
        %v3651 = vsel %vm2779, %v3643, -inf
        %3652 = vmax.xlane.f32.xlu0 %v3651
        %v3653 = vpop.xlane.xlu0 %3652
        %v3654 = vsel %vm2779, %v3644, -inf
        %3655 = vmax.xlane.f32.xlu0 %v3654
        %v3656 = vpop.xlane.xlu0 %3655
        %v3657 = vsub.f32 %v3641, %v3647
        %v3658 = vsub.f32 %v3642, %v3650
        %v3659 = vsub.f32 %v3643, %v3653
        %v3660 = vsub.f32 %v3644, %v3656
        %v3661 = vmul.f32 %v3657, 1.442695
        %v3662 = vpow.pop %v3661
        %v3663 = vmul.f32 %v3658, 1.442695
        %v3664 = vpow.pop %v3663
        %v3665 = vmul.f32 %v3659, 1.442695
        %v3666 = vpow.pop %v3665
        %v3667 = vmul.f32 %v3660, 1.442695
        %v3668 = vpow.pop %v3667
        %v3669 = vsel %vm2779, %v3662, 0.0
        %3670 = vadd.xlane.f32.xlu0 %v3669
        %v3671 = vpop.xlane.xlu0 %3670
        %v3672 = vsel %vm2779, %v3664, 0.0
        %3673 = vadd.xlane.f32.xlu0 %v3672
        %v3674 = vpop.xlane.xlu0 %3673
        %v3675 = vsel %vm2779, %v3666, 0.0
        %3676 = vadd.xlane.f32.xlu0 %v3675
        %v3677 = vpop.xlane.xlu0 %3676
        %v3678 = vsel %vm2779, %v3668, 0.0
        %3679 = vadd.xlane.f32.xlu0 %v3678
        %v3680 = vpop.xlane.xlu0 %3679
        %v3681 = vrcp.pop %v3671
        %v3682 = vrcp.pop %v3674
        %v3683 = vrcp.pop %v3677
        %v3684 = vrcp.pop %v3680
        %v3685 = vmul.f32 %v3671, %v3681
        %v3686 = vmul.f32 %v3674, %v3682
        %v3687 = vmul.f32 %v3677, %v3683
        %v3688 = vmul.f32 %v3680, %v3684
        %v3689 = vsub.f32 2.0, %v3685
        %v3690 = vsub.f32 2.0, %v3686
        %v3691 = vsub.f32 2.0, %v3687
        %v3692 = vsub.f32 2.0, %v3688
        %v3693 = vmul.f32 %v3681, %v3689
        %v3694 = vmul.f32 %v3682, %v3690
        %v3695 = vmul.f32 %v3683, %v3691
        %v3696 = vmul.f32 %v3684, %v3692
        %v3697 = vmul.f32 %v3662, %v3693
        %v3698 = vmul.f32 %v3664, %v3694
        %v3699 = vmul.f32 %v3666, %v3695
        %v3700 = vmul.f32 %v3668, %v3696
        %3701 = vrot.lane.b32.xlu0 %v2538, 48
        %v3702 = vpop.permute.xlu0 %3701
        %3703 = vrot.lane.b32.xlu0 %v2543, 48
        %v3704 = vpop.permute.xlu0 %3703
        %v3708 = vsel %vm2779, %v3697, 0
        %v3711 = vsel %vm2779, %v3698, 0
        %3713 = vmatprep.subr.mxu0 0.0
        %3714 = vmatpush1.msra.mxu0 0.0
        %3715 = vmatprep.subr.mxu0 0.0
        %3716 = vmatpush1.msra.mxu0 0.0
        %3717 = vmatprep.subr.mxu0 0.0
        %3718 = vmatpush1.msra.mxu0 0.0
        %3719 = vmatprep.subr.mxu0 0.0
        %3720 = vmatpush1.msra.mxu0 0.0
        %3721 = vmatprep.subr.mxu0 0.0
        %3722 = vmatpush1.msra.mxu0 0.0
        %3723 = vmatprep.subr.mxu0 0.0
        %3724 = vmatpush1.msra.mxu0 0.0
        %3725 = vmatprep.subr.mxu0 0.0
        %3726 = vmatpush1.msra.mxu0 0.0
        %3727 = vmatprep.subr.mxu0 0.0
        %3728 = vmatpush1.msra.mxu0 0.0
        %3729 = vmatprep.subr.mxu0 0.0
        %3730 = vmatpush1.msra.mxu0 0.0
        %3731 = vmatprep.subr.mxu0 0.0
        %3732 = vmatpush1.msra.mxu0 0.0
        %3733 = vmatprep.subr.mxu0 0.0
        %3734 = vmatpush1.msra.mxu0 0.0
        %3735 = vmatprep.subr.mxu0 0.0
        %3736 = vmatpush1.msra.mxu0 0.0
        %3737 = vmatprep.subr.mxu0 0.0
        %3738 = vmatpush1.msra.mxu0 0.0
        %3739 = vmatprep.subr.mxu0 0.0
        %3740 = vmatpush1.msra.mxu0 0.0
        %3741 = vmatprep.subr.mxu0 0.0
        %3742 = vmatpush1.msra.mxu0 %v3704
        %3743 = vmatprep.subr.mxu0 0.0
        %3744 = vmatpush1.msra.mxu0 %v3702
        %3745 = vmatprep.subr.mxu0 0.0
        %3746 = vmatpush2.msra.mxu0 0.0
        %3747 = vmatprep.subr.mxu0 0.0
        %3748 = vmatpush2.msra.mxu0 0.0
        %3749 = vmatprep.subr.mxu0 0.0
        %3750 = vmatpush2.msra.mxu0 0.0
        %3751 = vmatprep.subr.mxu0 0.0
        %3752 = vmatpush2.msra.mxu0 0.0
        %3753 = vmatprep.subr.mxu0 0.0
        %3754 = vmatpush2.msra.mxu0 0.0
        %3755 = vmatprep.subr.mxu0 0.0
        %3756 = vmatpush2.msra.mxu0 0.0
        %3757 = vmatprep.subr.mxu0 0.0
        %3758 = vmatpush2.msra.mxu0 0.0
        %3759 = vmatprep.subr.mxu0 0.0
        %3760 = vmatpush2.msra.mxu0 0.0
        %3761 = vmatprep.subr.mxu0 0.0
        %3762 = vmatpush2.msra.mxu0 0.0
        %3763 = vmatprep.subr.mxu0 0.0
        %3764 = vmatpush2.msra.mxu0 0.0
        %3765 = vmatprep.subr.mxu0 0.0
        %3766 = vmatpush2.msra.mxu0 0.0
        %3767 = vmatprep.subr.mxu0 0.0
        %3768 = vmatpush2.msra.mxu0 0.0
        %3769 = vmatprep.subr.mxu0 0.0
        %3770 = vmatpush2.msra.mxu0 0.0
        %3771 = vmatprep.subr.mxu0 0.0
        %3772 = vmatpush2.msra.mxu0 0.0
        %3773 = vmatprep.subr.mxu0 0.0
        %3774 = vmatpush2.msra.mxu0 0.0
        %3775 = vmatprep.subr.mxu0 0.0
        %3776 = vmatpush2.msra.mxu0 0.0
        %3777 = vmatprep.mubr.f32.mxu0 0.0
        %3778 = vmatmul.mubr.f32.gmra.mxu0 %v3708
        %v3779 = vpop.f32.mrf.mxu0
        %v3780 = vadd.f32 0.0, %v3779
        %v3781 = vpop.f32.mrf.mxu0
        %3782 = vmatprep.mubr.f32.mxu0 0.0
        %3783 = vmatmul.mubr.f32.gmra.mxu0 %v3711
        %v3784 = vpop.f32.mrf.mxu0
        %v3785 = vadd.f32 0.0, %v3784
        %v3786 = vpop.f32.mrf.mxu0
        %3787 = vdwg.mxu0
        %3788 = vrot.lane.b32.xlu0 %v2548, 48
        %v3789 = vpop.permute.xlu0 %3788
        %3790 = vrot.lane.b32.xlu0 %v2553, 48
        %v3791 = vpop.permute.xlu0 %3790
        %v3795 = vsel %vm2779, %v3699, 0
        %v3798 = vsel %vm2779, %v3700, 0
        %3800 = vmatprep.subr.mxu0 0.0
        %3801 = vmatpush1.msra.mxu0 0.0
        %3802 = vmatprep.subr.mxu0 0.0
        %3803 = vmatpush1.msra.mxu0 0.0
        %3804 = vmatprep.subr.mxu0 0.0
        %3805 = vmatpush1.msra.mxu0 0.0
        %3806 = vmatprep.subr.mxu0 0.0
        %3807 = vmatpush1.msra.mxu0 0.0
        %3808 = vmatprep.subr.mxu0 0.0
        %3809 = vmatpush1.msra.mxu0 0.0
        %3810 = vmatprep.subr.mxu0 0.0
        %3811 = vmatpush1.msra.mxu0 0.0
        %3812 = vmatprep.subr.mxu0 0.0
        %3813 = vmatpush1.msra.mxu0 0.0
        %3814 = vmatprep.subr.mxu0 0.0
        %3815 = vmatpush1.msra.mxu0 0.0
        %3816 = vmatprep.subr.mxu0 0.0
        %3817 = vmatpush1.msra.mxu0 0.0
        %3818 = vmatprep.subr.mxu0 0.0
        %3819 = vmatpush1.msra.mxu0 0.0
        %3820 = vmatprep.subr.mxu0 0.0
        %3821 = vmatpush1.msra.mxu0 0.0
        %3822 = vmatprep.subr.mxu0 0.0
        %3823 = vmatpush1.msra.mxu0 0.0
        %3824 = vmatprep.subr.mxu0 0.0
        %3825 = vmatpush1.msra.mxu0 0.0
        %3826 = vmatprep.subr.mxu0 0.0
        %3827 = vmatpush1.msra.mxu0 0.0
        %3828 = vmatprep.subr.mxu0 0.0
        %3829 = vmatpush1.msra.mxu0 %v3791
        %3830 = vmatprep.subr.mxu0 0.0
        %3831 = vmatpush1.msra.mxu0 %v3789
        %3832 = vmatprep.subr.mxu0 0.0
        %3833 = vmatpush2.msra.mxu0 0.0
        %3834 = vmatprep.subr.mxu0 0.0
        %3835 = vmatpush2.msra.mxu0 0.0
        %3836 = vmatprep.subr.mxu0 0.0
        %3837 = vmatpush2.msra.mxu0 0.0
        %3838 = vmatprep.subr.mxu0 0.0
        %3839 = vmatpush2.msra.mxu0 0.0
        %3840 = vmatprep.subr.mxu0 0.0
        %3841 = vmatpush2.msra.mxu0 0.0
        %3842 = vmatprep.subr.mxu0 0.0
        %3843 = vmatpush2.msra.mxu0 0.0
        %3844 = vmatprep.subr.mxu0 0.0
        %3845 = vmatpush2.msra.mxu0 0.0
        %3846 = vmatprep.subr.mxu0 0.0
        %3847 = vmatpush2.msra.mxu0 0.0
        %3848 = vmatprep.subr.mxu0 0.0
        %3849 = vmatpush2.msra.mxu0 0.0
        %3850 = vmatprep.subr.mxu0 0.0
        %3851 = vmatpush2.msra.mxu0 0.0
        %3852 = vmatprep.subr.mxu0 0.0
        %3853 = vmatpush2.msra.mxu0 0.0
        %3854 = vmatprep.subr.mxu0 0.0
        %3855 = vmatpush2.msra.mxu0 0.0
        %3856 = vmatprep.subr.mxu0 0.0
        %3857 = vmatpush2.msra.mxu0 0.0
        %3858 = vmatprep.subr.mxu0 0.0
        %3859 = vmatpush2.msra.mxu0 0.0
        %3860 = vmatprep.subr.mxu0 0.0
        %3861 = vmatpush2.msra.mxu0 0.0
        %3862 = vmatprep.subr.mxu0 0.0
        %3863 = vmatpush2.msra.mxu0 0.0
        %3864 = vmatprep.mubr.f32.mxu0 0.0
        %3865 = vmatmul.mubr.f32.gmra.mxu0 %v3795
        %v3866 = vpop.f32.mrf.mxu0
        %v3867 = vadd.f32 0.0, %v3866
        %v3868 = vpop.f32.mrf.mxu0
        %3869 = vmatprep.mubr.f32.mxu0 0.0
        %3870 = vmatmul.mubr.f32.gmra.mxu0 %v3798
        %v3871 = vpop.f32.mrf.mxu0
        %v3872 = vadd.f32 0.0, %v3871
        %v3873 = vpop.f32.mrf.mxu0
        %3874 = vdwg.mxu0
        %3879 = vrot.lane.b32.xlu0 %v3780, 16
        %v3880 = vpop.permute.xlu0 %3879
        %3881 = vrot.lane.b32.xlu0 %v3785, 16
        %v3882 = vpop.permute.xlu0 %3881
        %3883 = vrot.lane.b32.xlu0 %v3867, 16
        %v3884 = vpop.permute.xlu0 %3883
        %3885 = vrot.lane.b32.xlu0 %v3872, 16
        %v3886 = vpop.permute.xlu0 %3885
        %vm3891 = vcmask 195712
        %3892 = vst.msk [vmem:[#allocation2] sm:$0xff] %vm3891, %v3880
        %3893 = vst.msk [vmem:[#allocation2 + $0x8] sm:$0xff] %vm3891, %v3882
        %3894 = vst.msk [vmem:[#allocation2 + $0x10] sm:$0xff] %vm3891, %v3884
        %3895 = vst.msk [vmem:[#allocation2 + $0x18] sm:$0xff] %vm3891, %v3886
        %3896 = vrot.lane.b32.xlu0 %v2556, 104
        %v3897 = vpop.permute.xlu0 %3896
        %3898 = vrot.lane.b32.xlu0 %v2557, 104
        %v3899 = vpop.permute.xlu0 %3898
        %3900 = vrot.lane.b32.xlu0 %v2538, 72
        %v3901 = vpop.permute.xlu0 %3900
        %3902 = vrot.lane.b32.xlu0 %v2543, 72
        %v3903 = vpop.permute.xlu0 %3902
        %v3904 = vsel %vm2594, %v3897, 0
        %v3906 = vsel %vm2594, %v3899, 0
        %v3908 = vsel %vm2594, %v3901, 0
        %v3910 = vsel %vm2594, %v3903, 0
        %3912 = vmatprep.subr.mxu0 0.0
        %3913 = vmatpush1.xpose.msra.mxu0 0.0
        %3914 = vmatprep.subr.mxu0 0.0
        %3915 = vmatpush1.xpose.msra.mxu0 0.0
        %3916 = vmatprep.subr.mxu0 0.0
        %3917 = vmatpush1.xpose.msra.mxu0 0.0
        %3918 = vmatprep.subr.mxu0 0.0
        %3919 = vmatpush1.xpose.msra.mxu0 0.0
        %3920 = vmatprep.subr.mxu0 0.0
        %3921 = vmatpush1.xpose.msra.mxu0 0.0
        %3922 = vmatprep.subr.mxu0 0.0
        %3923 = vmatpush1.xpose.msra.mxu0 0.0
        %3924 = vmatprep.subr.mxu0 0.0
        %3925 = vmatpush1.xpose.msra.mxu0 0.0
        %3926 = vmatprep.subr.mxu0 0.0
        %3927 = vmatpush1.xpose.msra.mxu0 0.0
        %3928 = vmatprep.subr.mxu0 0.0
        %3929 = vmatpush1.xpose.msra.mxu0 0.0
        %3930 = vmatprep.subr.mxu0 0.0
        %3931 = vmatpush1.xpose.msra.mxu0 0.0
        %3932 = vmatprep.subr.mxu0 0.0
        %3933 = vmatpush1.xpose.msra.mxu0 0.0
        %3934 = vmatprep.subr.mxu0 0.0
        %3935 = vmatpush1.xpose.msra.mxu0 0.0
        %3936 = vmatprep.subr.mxu0 0.0
        %3937 = vmatpush1.xpose.msra.mxu0 0.0
        %3938 = vmatprep.subr.mxu0 0.0
        %3939 = vmatpush1.xpose.msra.mxu0 0.0
        %3940 = vmatprep.subr.mxu0 0.0
        %3941 = vmatpush1.xpose.msra.mxu0 %v3910
        %3942 = vmatprep.subr.mxu0 0.0
        %3943 = vmatpush1.xpose.msra.mxu0 %v3908
        %3944 = vmatprep.subr.mxu0 0.0
        %3945 = vmatpush2.xpose.msra.mxu0 0.0
        %3946 = vmatprep.subr.mxu0 0.0
        %3947 = vmatpush2.xpose.msra.mxu0 0.0
        %3948 = vmatprep.subr.mxu0 0.0
        %3949 = vmatpush2.xpose.msra.mxu0 0.0
        %3950 = vmatprep.subr.mxu0 0.0
        %3951 = vmatpush2.xpose.msra.mxu0 0.0
        %3952 = vmatprep.subr.mxu0 0.0
        %3953 = vmatpush2.xpose.msra.mxu0 0.0
        %3954 = vmatprep.subr.mxu0 0.0
        %3955 = vmatpush2.xpose.msra.mxu0 0.0
        %3956 = vmatprep.subr.mxu0 0.0
        %3957 = vmatpush2.xpose.msra.mxu0 0.0
        %3958 = vmatprep.subr.mxu0 0.0
        %3959 = vmatpush2.xpose.msra.mxu0 0.0
        %3960 = vmatprep.subr.mxu0 0.0
        %3961 = vmatpush2.xpose.msra.mxu0 0.0
        %3962 = vmatprep.subr.mxu0 0.0
        %3963 = vmatpush2.xpose.msra.mxu0 0.0
        %3964 = vmatprep.subr.mxu0 0.0
        %3965 = vmatpush2.xpose.msra.mxu0 0.0
        %3966 = vmatprep.subr.mxu0 0.0
        %3967 = vmatpush2.xpose.msra.mxu0 0.0
        %3968 = vmatprep.subr.mxu0 0.0
        %3969 = vmatpush2.xpose.msra.mxu0 0.0
        %3970 = vmatprep.subr.mxu0 0.0
        %3971 = vmatpush2.xpose.msra.mxu0 0.0
        %3972 = vmatprep.subr.mxu0 0.0
        %3973 = vmatpush2.xpose.msra.mxu0 0.0
        %3974 = vmatprep.subr.mxu0 0.0
        %3975 = vmatpush2.xpose.msra.mxu0 0.0
        %3976 = vmatprep.mubr.f32.mxu0 0.0
        %3977 = vmatmul.mubr.f32.gmra.mxu0 %v3904
        %v3978 = vpop.f32.mrf.mxu0
        %v3979 = vadd.f32 0.0, %v3978
        %v3980 = vpop.f32.mrf.mxu0
        %3981 = vmatprep.mubr.f32.mxu0 0.0
        %3982 = vmatmul.mubr.f32.gmra.mxu0 %v3906
        %v3983 = vpop.f32.mrf.mxu0
        %v3984 = vadd.f32 0.0, %v3983
        %v3985 = vpop.f32.mrf.mxu0
        %3986 = vdwg.mxu0
        %3987 = vrot.lane.b32.xlu0 %v2558, 104
        %v3988 = vpop.permute.xlu0 %3987
        %3989 = vrot.lane.b32.xlu0 %v2559, 104
        %v3990 = vpop.permute.xlu0 %3989
        %3991 = vrot.lane.b32.xlu0 %v2548, 72
        %v3992 = vpop.permute.xlu0 %3991
        %3993 = vrot.lane.b32.xlu0 %v2553, 72
        %v3994 = vpop.permute.xlu0 %3993
        %v3995 = vsel %vm2594, %v3988, 0
        %v3997 = vsel %vm2594, %v3990, 0
        %v3999 = vsel %vm2594, %v3992, 0
        %v4001 = vsel %vm2594, %v3994, 0
        %4003 = vmatprep.subr.mxu0 0.0
        %4004 = vmatpush1.xpose.msra.mxu0 0.0
        %4005 = vmatprep.subr.mxu0 0.0
        %4006 = vmatpush1.xpose.msra.mxu0 0.0
        %4007 = vmatprep.subr.mxu0 0.0
        %4008 = vmatpush1.xpose.msra.mxu0 0.0
        %4009 = vmatprep.subr.mxu0 0.0
        %4010 = vmatpush1.xpose.msra.mxu0 0.0
        %4011 = vmatprep.subr.mxu0 0.0
        %4012 = vmatpush1.xpose.msra.mxu0 0.0
        %4013 = vmatprep.subr.mxu0 0.0
        %4014 = vmatpush1.xpose.msra.mxu0 0.0
        %4015 = vmatprep.subr.mxu0 0.0
        %4016 = vmatpush1.xpose.msra.mxu0 0.0
        %4017 = vmatprep.subr.mxu0 0.0
        %4018 = vmatpush1.xpose.msra.mxu0 0.0
        %4019 = vmatprep.subr.mxu0 0.0
        %4020 = vmatpush1.xpose.msra.mxu0 0.0
        %4021 = vmatprep.subr.mxu0 0.0
        %4022 = vmatpush1.xpose.msra.mxu0 0.0
        %4023 = vmatprep.subr.mxu0 0.0
        %4024 = vmatpush1.xpose.msra.mxu0 0.0
        %4025 = vmatprep.subr.mxu0 0.0
        %4026 = vmatpush1.xpose.msra.mxu0 0.0
        %4027 = vmatprep.subr.mxu0 0.0
        %4028 = vmatpush1.xpose.msra.mxu0 0.0
        %4029 = vmatprep.subr.mxu0 0.0
        %4030 = vmatpush1.xpose.msra.mxu0 0.0
        %4031 = vmatprep.subr.mxu0 0.0
        %4032 = vmatpush1.xpose.msra.mxu0 %v4001
        %4033 = vmatprep.subr.mxu0 0.0
        %4034 = vmatpush1.xpose.msra.mxu0 %v3999
        %4035 = vmatprep.subr.mxu0 0.0
        %4036 = vmatpush2.xpose.msra.mxu0 0.0
        %4037 = vmatprep.subr.mxu0 0.0
        %4038 = vmatpush2.xpose.msra.mxu0 0.0
        %4039 = vmatprep.subr.mxu0 0.0
        %4040 = vmatpush2.xpose.msra.mxu0 0.0
        %4041 = vmatprep.subr.mxu0 0.0
        %4042 = vmatpush2.xpose.msra.mxu0 0.0
        %4043 = vmatprep.subr.mxu0 0.0
        %4044 = vmatpush2.xpose.msra.mxu0 0.0
        %4045 = vmatprep.subr.mxu0 0.0
        %4046 = vmatpush2.xpose.msra.mxu0 0.0
        %4047 = vmatprep.subr.mxu0 0.0
        %4048 = vmatpush2.xpose.msra.mxu0 0.0
        %4049 = vmatprep.subr.mxu0 0.0
        %4050 = vmatpush2.xpose.msra.mxu0 0.0
        %4051 = vmatprep.subr.mxu0 0.0
        %4052 = vmatpush2.xpose.msra.mxu0 0.0
        %4053 = vmatprep.subr.mxu0 0.0
        %4054 = vmatpush2.xpose.msra.mxu0 0.0
        %4055 = vmatprep.subr.mxu0 0.0
        %4056 = vmatpush2.xpose.msra.mxu0 0.0
        %4057 = vmatprep.subr.mxu0 0.0
        %4058 = vmatpush2.xpose.msra.mxu0 0.0
        %4059 = vmatprep.subr.mxu0 0.0
        %4060 = vmatpush2.xpose.msra.mxu0 0.0
        %4061 = vmatprep.subr.mxu0 0.0
        %4062 = vmatpush2.xpose.msra.mxu0 0.0
        %4063 = vmatprep.subr.mxu0 0.0
        %4064 = vmatpush2.xpose.msra.mxu0 0.0
        %4065 = vmatprep.subr.mxu0 0.0
        %4066 = vmatpush2.xpose.msra.mxu0 0.0
        %4067 = vmatprep.mubr.f32.mxu0 0.0
        %4068 = vmatmul.mubr.f32.gmra.mxu0 %v3995
        %v4069 = vpop.f32.mrf.mxu0
        %v4070 = vadd.f32 0.0, %v4069
        %v4071 = vpop.f32.mrf.mxu0
        %4072 = vmatprep.mubr.f32.mxu0 0.0
        %4073 = vmatmul.mubr.f32.gmra.mxu0 %v3997
        %v4074 = vpop.f32.mrf.mxu0
        %v4075 = vadd.f32 0.0, %v4074
        %v4076 = vpop.f32.mrf.mxu0
        %4077 = vdwg.mxu0
        %v4078 = vmul.f32 %v3979, %v2567
        %v4079 = vmul.f32 %v3984, %v2567
        %v4080 = vmul.f32 %v4070, %v2571
        %v4081 = vmul.f32 %v4075, %v2571
        %v4082 = vadd.f32 %v4078, %v2581
        %v4083 = vadd.f32 %v4079, %v2581
        %v4084 = vadd.f32 %v4080, %v2585
        %v4085 = vadd.f32 %v4081, %v2585
        %v4086 = vsel %vm2779, %v4082, -inf
        %4087 = vmax.xlane.f32.xlu0 %v4086
        %v4088 = vpop.xlane.xlu0 %4087
        %v4089 = vsel %vm2779, %v4083, -inf
        %4090 = vmax.xlane.f32.xlu0 %v4089
        %v4091 = vpop.xlane.xlu0 %4090
        %v4092 = vsel %vm2779, %v4084, -inf
        %4093 = vmax.xlane.f32.xlu0 %v4092
        %v4094 = vpop.xlane.xlu0 %4093
        %v4095 = vsel %vm2779, %v4085, -inf
        %4096 = vmax.xlane.f32.xlu0 %v4095
        %v4097 = vpop.xlane.xlu0 %4096
        %v4098 = vsub.f32 %v4082, %v4088
        %v4099 = vsub.f32 %v4083, %v4091
        %v4100 = vsub.f32 %v4084, %v4094
        %v4101 = vsub.f32 %v4085, %v4097
        %v4102 = vmul.f32 %v4098, 1.442695
        %v4103 = vpow.pop %v4102
        %v4104 = vmul.f32 %v4099, 1.442695
        %v4105 = vpow.pop %v4104
        %v4106 = vmul.f32 %v4100, 1.442695
        %v4107 = vpow.pop %v4106
        %v4108 = vmul.f32 %v4101, 1.442695
        %v4109 = vpow.pop %v4108
        %v4110 = vsel %vm2779, %v4103, 0.0
        %4111 = vadd.xlane.f32.xlu0 %v4110
        %v4112 = vpop.xlane.xlu0 %4111
        %v4113 = vsel %vm2779, %v4105, 0.0
        %4114 = vadd.xlane.f32.xlu0 %v4113
        %v4115 = vpop.xlane.xlu0 %4114
        %v4116 = vsel %vm2779, %v4107, 0.0
        %4117 = vadd.xlane.f32.xlu0 %v4116
        %v4118 = vpop.xlane.xlu0 %4117
        %v4119 = vsel %vm2779, %v4109, 0.0
        %4120 = vadd.xlane.f32.xlu0 %v4119
        %v4121 = vpop.xlane.xlu0 %4120
        %v4122 = vrcp.pop %v4112
        %v4123 = vrcp.pop %v4115
        %v4124 = vrcp.pop %v4118
        %v4125 = vrcp.pop %v4121
        %v4126 = vmul.f32 %v4112, %v4122
        %v4127 = vmul.f32 %v4115, %v4123
        %v4128 = vmul.f32 %v4118, %v4124
        %v4129 = vmul.f32 %v4121, %v4125
        %v4130 = vsub.f32 2.0, %v4126
        %v4131 = vsub.f32 2.0, %v4127
        %v4132 = vsub.f32 2.0, %v4128
        %v4133 = vsub.f32 2.0, %v4129
        %v4134 = vmul.f32 %v4122, %v4130
        %v4135 = vmul.f32 %v4123, %v4131
        %v4136 = vmul.f32 %v4124, %v4132
        %v4137 = vmul.f32 %v4125, %v4133
        %v4138 = vmul.f32 %v4103, %v4134
        %v4139 = vmul.f32 %v4105, %v4135
        %v4140 = vmul.f32 %v4107, %v4136
        %v4141 = vmul.f32 %v4109, %v4137
        %4142 = vrot.lane.b32.xlu0 %v2538, 40
        %v4143 = vpop.permute.xlu0 %4142
        %4144 = vrot.lane.b32.xlu0 %v2543, 40
        %v4145 = vpop.permute.xlu0 %4144
        %v4149 = vsel %vm2779, %v4138, 0
        %v4152 = vsel %vm2779, %v4139, 0
        %4154 = vmatprep.subr.mxu0 0.0
        %4155 = vmatpush1.msra.mxu0 0.0
        %4156 = vmatprep.subr.mxu0 0.0
        %4157 = vmatpush1.msra.mxu0 0.0
        %4158 = vmatprep.subr.mxu0 0.0
        %4159 = vmatpush1.msra.mxu0 0.0
        %4160 = vmatprep.subr.mxu0 0.0
        %4161 = vmatpush1.msra.mxu0 0.0
        %4162 = vmatprep.subr.mxu0 0.0
        %4163 = vmatpush1.msra.mxu0 0.0
        %4164 = vmatprep.subr.mxu0 0.0
        %4165 = vmatpush1.msra.mxu0 0.0
        %4166 = vmatprep.subr.mxu0 0.0
        %4167 = vmatpush1.msra.mxu0 0.0
        %4168 = vmatprep.subr.mxu0 0.0
        %4169 = vmatpush1.msra.mxu0 0.0
        %4170 = vmatprep.subr.mxu0 0.0
        %4171 = vmatpush1.msra.mxu0 0.0
        %4172 = vmatprep.subr.mxu0 0.0
        %4173 = vmatpush1.msra.mxu0 0.0
        %4174 = vmatprep.subr.mxu0 0.0
        %4175 = vmatpush1.msra.mxu0 0.0
        %4176 = vmatprep.subr.mxu0 0.0
        %4177 = vmatpush1.msra.mxu0 0.0
        %4178 = vmatprep.subr.mxu0 0.0
        %4179 = vmatpush1.msra.mxu0 0.0
        %4180 = vmatprep.subr.mxu0 0.0
        %4181 = vmatpush1.msra.mxu0 0.0
        %4182 = vmatprep.subr.mxu0 0.0
        %4183 = vmatpush1.msra.mxu0 %v4145
        %4184 = vmatprep.subr.mxu0 0.0
        %4185 = vmatpush1.msra.mxu0 %v4143
        %4186 = vmatprep.subr.mxu0 0.0
        %4187 = vmatpush2.msra.mxu0 0.0
        %4188 = vmatprep.subr.mxu0 0.0
        %4189 = vmatpush2.msra.mxu0 0.0
        %4190 = vmatprep.subr.mxu0 0.0
        %4191 = vmatpush2.msra.mxu0 0.0
        %4192 = vmatprep.subr.mxu0 0.0
        %4193 = vmatpush2.msra.mxu0 0.0
        %4194 = vmatprep.subr.mxu0 0.0
        %4195 = vmatpush2.msra.mxu0 0.0
        %4196 = vmatprep.subr.mxu0 0.0
        %4197 = vmatpush2.msra.mxu0 0.0
        %4198 = vmatprep.subr.mxu0 0.0
        %4199 = vmatpush2.msra.mxu0 0.0
        %4200 = vmatprep.subr.mxu0 0.0
        %4201 = vmatpush2.msra.mxu0 0.0
        %4202 = vmatprep.subr.mxu0 0.0
        %4203 = vmatpush2.msra.mxu0 0.0
        %4204 = vmatprep.subr.mxu0 0.0
        %4205 = vmatpush2.msra.mxu0 0.0
        %4206 = vmatprep.subr.mxu0 0.0
        %4207 = vmatpush2.msra.mxu0 0.0
        %4208 = vmatprep.subr.mxu0 0.0
        %4209 = vmatpush2.msra.mxu0 0.0
        %4210 = vmatprep.subr.mxu0 0.0
        %4211 = vmatpush2.msra.mxu0 0.0
        %4212 = vmatprep.subr.mxu0 0.0
        %4213 = vmatpush2.msra.mxu0 0.0
        %4214 = vmatprep.subr.mxu0 0.0
        %4215 = vmatpush2.msra.mxu0 0.0
        %4216 = vmatprep.subr.mxu0 0.0
        %4217 = vmatpush2.msra.mxu0 0.0
        %4218 = vmatprep.mubr.f32.mxu0 0.0
        %4219 = vmatmul.mubr.f32.gmra.mxu0 %v4149
        %v4220 = vpop.f32.mrf.mxu0
        %v4221 = vadd.f32 0.0, %v4220
        %v4222 = vpop.f32.mrf.mxu0
        %4223 = vmatprep.mubr.f32.mxu0 0.0
        %4224 = vmatmul.mubr.f32.gmra.mxu0 %v4152
        %v4225 = vpop.f32.mrf.mxu0
        %v4226 = vadd.f32 0.0, %v4225
        %v4227 = vpop.f32.mrf.mxu0
        %4228 = vdwg.mxu0
        %4229 = vrot.lane.b32.xlu0 %v2548, 40
        %v4230 = vpop.permute.xlu0 %4229
        %4231 = vrot.lane.b32.xlu0 %v2553, 40
        %v4232 = vpop.permute.xlu0 %4231
        %v4236 = vsel %vm2779, %v4140, 0
        %v4239 = vsel %vm2779, %v4141, 0
        %4241 = vmatprep.subr.mxu0 0.0
        %4242 = vmatpush1.msra.mxu0 0.0
        %4243 = vmatprep.subr.mxu0 0.0
        %4244 = vmatpush1.msra.mxu0 0.0
        %4245 = vmatprep.subr.mxu0 0.0
        %4246 = vmatpush1.msra.mxu0 0.0
        %4247 = vmatprep.subr.mxu0 0.0
        %4248 = vmatpush1.msra.mxu0 0.0
        %4249 = vmatprep.subr.mxu0 0.0
        %4250 = vmatpush1.msra.mxu0 0.0
        %4251 = vmatprep.subr.mxu0 0.0
        %4252 = vmatpush1.msra.mxu0 0.0
        %4253 = vmatprep.subr.mxu0 0.0
        %4254 = vmatpush1.msra.mxu0 0.0
        %4255 = vmatprep.subr.mxu0 0.0
        %4256 = vmatpush1.msra.mxu0 0.0
        %4257 = vmatprep.subr.mxu0 0.0
        %4258 = vmatpush1.msra.mxu0 0.0
        %4259 = vmatprep.subr.mxu0 0.0
        %4260 = vmatpush1.msra.mxu0 0.0
        %4261 = vmatprep.subr.mxu0 0.0
        %4262 = vmatpush1.msra.mxu0 0.0
        %4263 = vmatprep.subr.mxu0 0.0
        %4264 = vmatpush1.msra.mxu0 0.0
        %4265 = vmatprep.subr.mxu0 0.0
        %4266 = vmatpush1.msra.mxu0 0.0
        %4267 = vmatprep.subr.mxu0 0.0
        %4268 = vmatpush1.msra.mxu0 0.0
        %4269 = vmatprep.subr.mxu0 0.0
        %4270 = vmatpush1.msra.mxu0 %v4232
        %4271 = vmatprep.subr.mxu0 0.0
        %4272 = vmatpush1.msra.mxu0 %v4230
        %4273 = vmatprep.subr.mxu0 0.0
        %4274 = vmatpush2.msra.mxu0 0.0
        %4275 = vmatprep.subr.mxu0 0.0
        %4276 = vmatpush2.msra.mxu0 0.0
        %4277 = vmatprep.subr.mxu0 0.0
        %4278 = vmatpush2.msra.mxu0 0.0
        %4279 = vmatprep.subr.mxu0 0.0
        %4280 = vmatpush2.msra.mxu0 0.0
        %4281 = vmatprep.subr.mxu0 0.0
        %4282 = vmatpush2.msra.mxu0 0.0
        %4283 = vmatprep.subr.mxu0 0.0
        %4284 = vmatpush2.msra.mxu0 0.0
        %4285 = vmatprep.subr.mxu0 0.0
        %4286 = vmatpush2.msra.mxu0 0.0
        %4287 = vmatprep.subr.mxu0 0.0
        %4288 = vmatpush2.msra.mxu0 0.0
        %4289 = vmatprep.subr.mxu0 0.0
        %4290 = vmatpush2.msra.mxu0 0.0
        %4291 = vmatprep.subr.mxu0 0.0
        %4292 = vmatpush2.msra.mxu0 0.0
        %4293 = vmatprep.subr.mxu0 0.0
        %4294 = vmatpush2.msra.mxu0 0.0
        %4295 = vmatprep.subr.mxu0 0.0
        %4296 = vmatpush2.msra.mxu0 0.0
        %4297 = vmatprep.subr.mxu0 0.0
        %4298 = vmatpush2.msra.mxu0 0.0
        %4299 = vmatprep.subr.mxu0 0.0
        %4300 = vmatpush2.msra.mxu0 0.0
        %4301 = vmatprep.subr.mxu0 0.0
        %4302 = vmatpush2.msra.mxu0 0.0
        %4303 = vmatprep.subr.mxu0 0.0
        %4304 = vmatpush2.msra.mxu0 0.0
        %4305 = vmatprep.mubr.f32.mxu0 0.0
        %4306 = vmatmul.mubr.f32.gmra.mxu0 %v4236
        %v4307 = vpop.f32.mrf.mxu0
        %v4308 = vadd.f32 0.0, %v4307
        %v4309 = vpop.f32.mrf.mxu0
        %4310 = vmatprep.mubr.f32.mxu0 0.0
        %4311 = vmatmul.mubr.f32.gmra.mxu0 %v4239
        %v4312 = vpop.f32.mrf.mxu0
        %v4313 = vadd.f32 0.0, %v4312
        %v4314 = vpop.f32.mrf.mxu0
        %4315 = vdwg.mxu0
        %4320 = vrot.lane.b32.xlu0 %v4221, 24
        %v4321 = vpop.permute.xlu0 %4320
        %4322 = vrot.lane.b32.xlu0 %v4226, 24
        %v4323 = vpop.permute.xlu0 %4322
        %4324 = vrot.lane.b32.xlu0 %v4308, 24
        %v4325 = vpop.permute.xlu0 %4324
        %4326 = vrot.lane.b32.xlu0 %v4313, 24
        %v4327 = vpop.permute.xlu0 %4326
        %vm4332 = vcmask 261312
        %4333 = vst.msk [vmem:[#allocation2] sm:$0xff] %vm4332, %v4321
        %4334 = vst.msk [vmem:[#allocation2 + $0x8] sm:$0xff] %vm4332, %v4323
        %4335 = vst.msk [vmem:[#allocation2 + $0x10] sm:$0xff] %vm4332, %v4325
        %4336 = vst.msk [vmem:[#allocation2 + $0x18] sm:$0xff] %vm4332, %v4327
        %v4337 = vld [vmem:[#allocation2] sm:$0xff]
        %v4338 = vld [vmem:[#allocation2 + $0x8] sm:$0xff]
        %v4339 = vld [vmem:[#allocation2 + $0x10] sm:$0xff]
        %v4340 = vld [vmem:[#allocation2 + $0x18] sm:$0xff]
        %v4341 = vld [vmem:[%s748] sm:$0xff]
        %v4342 = vld [vmem:[%s748 + $0x8] sm:$0xff]
        %v4343 = vld [vmem:[%s748 + $0x10] sm:$0xff]
        %v4344 = vld [vmem:[%s748 + $0x18] sm:$0xff]
        %v4345 = vld [vmem:[%s867] sm:$0x1]
        %v4347 = vlaneseq
        %v4348 = vshrl.u32 %v4347, 7
        %v4349 = vsub.s32 0, %v4348
        %v4350 = vrot.slane %v4345, %v4349
        %v4353 = vsel %vm903, %v4337, 0
        %v4356 = vsel %vm903, %v4338, 0
        %v4359 = vsel %vm903, %v4339, 0
        %v4362 = vsel %vm903, %v4340, 0
        %4364 = vmatprep.subr.mxu0 0.0
        %4365 = vmatpush1.msra.mxu0 0.0
        %4366 = vmatprep.subr.mxu0 0.0
        %4367 = vmatpush1.msra.mxu0 0.0
        %4368 = vmatprep.subr.mxu0 0.0
        %4369 = vmatpush1.msra.mxu0 0.0
        %4370 = vmatprep.subr.mxu0 0.0
        %4371 = vmatpush1.msra.mxu0 0.0
        %4372 = vmatprep.subr.mxu0 0.0
        %4373 = vmatpush1.msra.mxu0 0.0
        %4374 = vmatprep.subr.mxu0 0.0
        %4375 = vmatpush1.msra.mxu0 0.0
        %4376 = vmatprep.subr.mxu0 0.0
        %4377 = vmatpush1.msra.mxu0 0.0
        %4378 = vmatprep.subr.mxu0 0.0
        %4379 = vmatpush1.msra.mxu0 0.0
        %4380 = vmatprep.subr.mxu0 0.0
        %4381 = vmatpush1.msra.mxu0 0.0
        %4382 = vmatprep.subr.mxu0 0.0
        %4383 = vmatpush1.msra.mxu0 0.0
        %4384 = vmatprep.subr.mxu0 0.0
        %4385 = vmatpush1.msra.mxu0 0.0
        %4386 = vmatprep.subr.mxu0 0.0
        %4387 = vmatpush1.msra.mxu0 0.0
        %4388 = vmatprep.subr.mxu0 0.0
        %4389 = vmatpush1.msra.mxu0 %v4344
        %4390 = vmatprep.subr.mxu0 0.0
        %4391 = vmatpush1.msra.mxu0 %v4343
        %4392 = vmatprep.subr.mxu0 0.0
        %4393 = vmatpush1.msra.mxu0 %v4342
        %4394 = vmatprep.subr.mxu0 0.0
        %4395 = vmatpush1.msra.mxu0 %v4341
        %4396 = vmatprep.subr.mxu0 0.0
        %4397 = vmatpush2.msra.mxu0 0.0
        %4398 = vmatprep.subr.mxu0 0.0
        %4399 = vmatpush2.msra.mxu0 0.0
        %4400 = vmatprep.subr.mxu0 0.0
        %4401 = vmatpush2.msra.mxu0 0.0
        %4402 = vmatprep.subr.mxu0 0.0
        %4403 = vmatpush2.msra.mxu0 0.0
        %4404 = vmatprep.subr.mxu0 0.0
        %4405 = vmatpush2.msra.mxu0 0.0
        %4406 = vmatprep.subr.mxu0 0.0
        %4407 = vmatpush2.msra.mxu0 0.0
        %4408 = vmatprep.subr.mxu0 0.0
        %4409 = vmatpush2.msra.mxu0 0.0
        %4410 = vmatprep.subr.mxu0 0.0
        %4411 = vmatpush2.msra.mxu0 0.0
        %4412 = vmatprep.subr.mxu0 0.0
        %4413 = vmatpush2.msra.mxu0 0.0
        %4414 = vmatprep.subr.mxu0 0.0
        %4415 = vmatpush2.msra.mxu0 0.0
        %4416 = vmatprep.subr.mxu0 0.0
        %4417 = vmatpush2.msra.mxu0 0.0
        %4418 = vmatprep.subr.mxu0 0.0
        %4419 = vmatpush2.msra.mxu0 0.0
        %4420 = vmatprep.subr.mxu0 0.0
        %4421 = vmatpush2.msra.mxu0 0.0
        %4422 = vmatprep.subr.mxu0 0.0
        %4423 = vmatpush2.msra.mxu0 0.0
        %4424 = vmatprep.subr.mxu0 0.0
        %4425 = vmatpush2.msra.mxu0 0.0
        %4426 = vmatprep.subr.mxu0 0.0
        %4427 = vmatpush2.msra.mxu0 0.0
        %4428 = vmatprep.mubr.f32.mxu0 0.0
        %4429 = vmatmul.mubr.f32.gmra.mxu0 %v4353
        %v4430 = vpop.f32.mrf.mxu0
        %v4431 = vadd.f32 %v4350, %v4430
        %v4432 = vpop.f32.mrf.mxu0
        %4433 = vmatprep.mubr.f32.mxu0 0.0
        %4434 = vmatmul.mubr.f32.gmra.mxu0 %v4356
        %v4435 = vpop.f32.mrf.mxu0
        %v4436 = vadd.f32 %v4350, %v4435
        %v4437 = vpop.f32.mrf.mxu0
        %4438 = vmatprep.mubr.f32.mxu0 0.0
        %4439 = vmatmul.mubr.f32.gmra.mxu0 %v4359
        %v4440 = vpop.f32.mrf.mxu0
        %v4441 = vadd.f32 %v4350, %v4440
        %v4442 = vpop.f32.mrf.mxu0
        %4443 = vmatprep.mubr.f32.mxu0 0.0
        %4444 = vmatmul.mubr.f32.gmra.mxu0 %v4362
        %v4445 = vpop.f32.mrf.mxu0
        %v4446 = vadd.f32 %v4350, %v4445
        %v4447 = vpop.f32.mrf.mxu0
        %4448 = vdwg.mxu0
        %s4449 = scalar_lea.vmem %s712, 5 [#allocation7]
        %v4450 = vld [vmem:[%s4449] sm:$0x1]
        %s4451 = scalar_lea.vmem %s721, 5 [#allocation9]
        %v4452 = vld [vmem:[%s4451] sm:$0x1]
        %v4453 = vsel %vm903, %v4431, 0.0
        %4454 = vadd.xlane.f32.xlu0 %v4453
        %v4455 = vpop.xlane.xlu0 %4454
        %v4456 = vsel %vm903, %v4436, 0.0
        %4457 = vadd.xlane.f32.xlu0 %v4456
        %v4458 = vpop.xlane.xlu0 %4457
        %v4459 = vsel %vm903, %v4441, 0.0
        %4460 = vadd.xlane.f32.xlu0 %v4459
        %v4461 = vpop.xlane.xlu0 %4460
        %v4462 = vsel %vm903, %v4446, 0.0
        %4463 = vadd.xlane.f32.xlu0 %v4462
        %v4464 = vpop.xlane.xlu0 %4463
        %v4465 = vmul.f32 %v4455, %v925
        %v4466 = vmul.f32 %v4458, %v925
        %v4467 = vmul.f32 %v4461, %v925
        %v4468 = vmul.f32 %v4464, %v925
        %v4469 = vsub.f32 %v4431, %v4465
        %v4470 = vsub.f32 %v4436, %v4466
        %v4471 = vsub.f32 %v4441, %v4467
        %v4472 = vsub.f32 %v4446, %v4468
        %v4473 = vmul.f32 %v4469, %v4469
        %v4474 = vmul.f32 %v4470, %v4470
        %v4475 = vmul.f32 %v4471, %v4471
        %v4476 = vmul.f32 %v4472, %v4472
        %v4477 = vsel %vm903, %v4473, 0.0
        %4478 = vadd.xlane.f32.xlu0 %v4477
        %v4479 = vpop.xlane.xlu0 %4478
        %v4480 = vsel %vm903, %v4474, 0.0
        %4481 = vadd.xlane.f32.xlu0 %v4480
        %v4482 = vpop.xlane.xlu0 %4481
        %v4483 = vsel %vm903, %v4475, 0.0
        %4484 = vadd.xlane.f32.xlu0 %v4483
        %v4485 = vpop.xlane.xlu0 %4484
        %v4486 = vsel %vm903, %v4476, 0.0
        %4487 = vadd.xlane.f32.xlu0 %v4486
        %v4488 = vpop.xlane.xlu0 %4487
        %v4489 = vmul.f32 %v4479, %v925
        %v4490 = vmul.f32 %v4482, %v925
        %v4491 = vmul.f32 %v4485, %v925
        %v4492 = vmul.f32 %v4488, %v925
        %v4493 = vadd.f32 %v4489, 1e-05
        %v4494 = vadd.f32 %v4490, 1e-05
        %v4495 = vadd.f32 %v4491, 1e-05
        %v4496 = vadd.f32 %v4492, 1e-05
        %v4497 = vrsqrt.pop %v4493
        %v4498 = vrsqrt.pop %v4494
        %v4499 = vrsqrt.pop %v4495
        %v4500 = vrsqrt.pop %v4496
        %v4501 = vmul.f32 %v4469, %v4497
        %v4502 = vmul.f32 %v4470, %v4498
        %v4503 = vmul.f32 %v4471, %v4499
        %v4504 = vmul.f32 %v4472, %v4500
        %v4506 = vlaneseq
        %v4507 = vshrl.u32 %v4506, 7
        %v4508 = vsub.s32 0, %v4507
        %v4509 = vrot.slane %v4450, %v4508
        %v4511 = vmul.f32 %v4501, %v4509
        %v4512 = vmul.f32 %v4502, %v4509
        %v4513 = vmul.f32 %v4503, %v4509
        %v4514 = vmul.f32 %v4504, %v4509
        %v4516 = vlaneseq
        %v4517 = vshrl.u32 %v4516, 7
        %v4518 = vsub.s32 0, %v4517
        %v4519 = vrot.slane %v4452, %v4518
        %v4521 = vadd.f32 %v4511, %v4519
        %v4522 = vadd.f32 %v4512, %v4519
        %v4523 = vadd.f32 %v4513, %v4519
        %v4524 = vadd.f32 %v4514, %v4519
        %v4525 = vmul.f32 %v4521, 0.5
        %v4526 = vmul.f32 %v4522, 0.5
        %v4527 = vmul.f32 %v4523, 0.5
        %v4528 = vmul.f32 %v4524, 0.5
        %v4529 = vadd.f32 %v2368, %v4525
        %v4530 = vadd.f32 %v2369, %v4526
        %v4531 = vadd.f32 %v2370, %v4527
        %v4532 = vadd.f32 %v2371, %v4528
        %s4533 = scalar_lea.vmem %s712, 6 [#allocation7]
        %v4534 = vld [vmem:[%s4533] sm:$0x1]
        %s4535 = scalar_lea.vmem %s721, 6 [#allocation9]
        %v4536 = vld [vmem:[%s4535] sm:$0x1]
        %v4537 = vsel %vm903, %v4529, 0.0
        %4538 = vadd.xlane.f32.xlu0 %v4537
        %v4539 = vpop.xlane.xlu0 %4538
        %v4540 = vsel %vm903, %v4530, 0.0
        %4541 = vadd.xlane.f32.xlu0 %v4540
        %v4542 = vpop.xlane.xlu0 %4541
        %v4543 = vsel %vm903, %v4531, 0.0
        %4544 = vadd.xlane.f32.xlu0 %v4543
        %v4545 = vpop.xlane.xlu0 %4544
        %v4546 = vsel %vm903, %v4532, 0.0
        %4547 = vadd.xlane.f32.xlu0 %v4546
        %v4548 = vpop.xlane.xlu0 %4547
        %v4549 = vmul.f32 %v4539, %v925
        %v4550 = vmul.f32 %v4542, %v925
        %v4551 = vmul.f32 %v4545, %v925
        %v4552 = vmul.f32 %v4548, %v925
        %v4553 = vsub.f32 %v4529, %v4549
        %v4554 = vsub.f32 %v4530, %v4550
        %v4555 = vsub.f32 %v4531, %v4551
        %v4556 = vsub.f32 %v4532, %v4552
        %v4557 = vmul.f32 %v4553, %v4553
        %v4558 = vmul.f32 %v4554, %v4554
        %v4559 = vmul.f32 %v4555, %v4555
        %v4560 = vmul.f32 %v4556, %v4556
        %v4561 = vsel %vm903, %v4557, 0.0
        %4562 = vadd.xlane.f32.xlu0 %v4561
        %v4563 = vpop.xlane.xlu0 %4562
        %v4564 = vsel %vm903, %v4558, 0.0
        %4565 = vadd.xlane.f32.xlu0 %v4564
        %v4566 = vpop.xlane.xlu0 %4565
        %v4567 = vsel %vm903, %v4559, 0.0
        %4568 = vadd.xlane.f32.xlu0 %v4567
        %v4569 = vpop.xlane.xlu0 %4568
        %v4570 = vsel %vm903, %v4560, 0.0
        %4571 = vadd.xlane.f32.xlu0 %v4570
        %v4572 = vpop.xlane.xlu0 %4571
        %v4573 = vmul.f32 %v4563, %v925
        %v4574 = vmul.f32 %v4566, %v925
        %v4575 = vmul.f32 %v4569, %v925
        %v4576 = vmul.f32 %v4572, %v925
        %v4577 = vadd.f32 %v4573, 1e-05
        %v4578 = vadd.f32 %v4574, 1e-05
        %v4579 = vadd.f32 %v4575, 1e-05
        %v4580 = vadd.f32 %v4576, 1e-05
        %v4581 = vrsqrt.pop %v4577
        %v4582 = vrsqrt.pop %v4578
        %v4583 = vrsqrt.pop %v4579
        %v4584 = vrsqrt.pop %v4580
        %v4585 = vmul.f32 %v4553, %v4581
        %v4586 = vmul.f32 %v4554, %v4582
        %v4587 = vmul.f32 %v4555, %v4583
        %v4588 = vmul.f32 %v4556, %v4584
        %v4590 = vlaneseq
        %v4591 = vshrl.u32 %v4590, 7
        %v4592 = vsub.s32 0, %v4591
        %v4593 = vrot.slane %v4534, %v4592
        %v4595 = vmul.f32 %v4585, %v4593
        %v4596 = vmul.f32 %v4586, %v4593
        %v4597 = vmul.f32 %v4587, %v4593
        %v4598 = vmul.f32 %v4588, %v4593
        %v4600 = vlaneseq
        %v4601 = vshrl.u32 %v4600, 7
        %v4602 = vsub.s32 0, %v4601
        %v4603 = vrot.slane %v4536, %v4602
        %v4605 = vadd.f32 %v4595, %v4603
        %v4606 = vadd.f32 %v4596, %v4603
        %v4607 = vadd.f32 %v4597, %v4603
        %v4608 = vadd.f32 %v4598, %v4603
        %v4609 = vld [vmem:[%s757] sm:$0xff]
        %v4610 = vld [vmem:[%s757 + $0x8] sm:$0xff]
        %v4611 = vld [vmem:[%s757 + $0x10] sm:$0xff]
        %v4612 = vld [vmem:[%s757 + $0x18] sm:$0xff]
        %v4613 = vld [vmem:[%s870] sm:$0x1]
        %v4615 = vlaneseq
        %v4616 = vshrl.u32 %v4615, 7
        %v4617 = vsub.s32 0, %v4616
        %v4618 = vrot.slane %v4613, %v4617
        %v4621 = vsel %vm903, %v4605, 0
        %v4624 = vsel %vm903, %v4606, 0
        %v4627 = vsel %vm903, %v4607, 0
        %v4630 = vsel %vm903, %v4608, 0
        %4632 = vmatprep.subr.mxu0 0.0
        %4633 = vmatpush1.msra.mxu0 0.0
        %4634 = vmatprep.subr.mxu0 0.0
        %4635 = vmatpush1.msra.mxu0 0.0
        %4636 = vmatprep.subr.mxu0 0.0
        %4637 = vmatpush1.msra.mxu0 0.0
        %4638 = vmatprep.subr.mxu0 0.0
        %4639 = vmatpush1.msra.mxu0 0.0
        %4640 = vmatprep.subr.mxu0 0.0
        %4641 = vmatpush1.msra.mxu0 0.0
        %4642 = vmatprep.subr.mxu0 0.0
        %4643 = vmatpush1.msra.mxu0 0.0
        %4644 = vmatprep.subr.mxu0 0.0
        %4645 = vmatpush1.msra.mxu0 0.0
        %4646 = vmatprep.subr.mxu0 0.0
        %4647 = vmatpush1.msra.mxu0 0.0
        %4648 = vmatprep.subr.mxu0 0.0
        %4649 = vmatpush1.msra.mxu0 0.0
        %4650 = vmatprep.subr.mxu0 0.0
        %4651 = vmatpush1.msra.mxu0 0.0
        %4652 = vmatprep.subr.mxu0 0.0
        %4653 = vmatpush1.msra.mxu0 0.0
        %4654 = vmatprep.subr.mxu0 0.0
        %4655 = vmatpush1.msra.mxu0 0.0
        %4656 = vmatprep.subr.mxu0 0.0
        %4657 = vmatpush1.msra.mxu0 %v4612
        %4658 = vmatprep.subr.mxu0 0.0
        %4659 = vmatpush1.msra.mxu0 %v4611
        %4660 = vmatprep.subr.mxu0 0.0
        %4661 = vmatpush1.msra.mxu0 %v4610
        %4662 = vmatprep.subr.mxu0 0.0
        %4663 = vmatpush1.msra.mxu0 %v4609
        %4664 = vmatprep.subr.mxu0 0.0
        %4665 = vmatpush2.msra.mxu0 0.0
        %4666 = vmatprep.subr.mxu0 0.0
        %4667 = vmatpush2.msra.mxu0 0.0
        %4668 = vmatprep.subr.mxu0 0.0
        %4669 = vmatpush2.msra.mxu0 0.0
        %4670 = vmatprep.subr.mxu0 0.0
        %4671 = vmatpush2.msra.mxu0 0.0
        %4672 = vmatprep.subr.mxu0 0.0
        %4673 = vmatpush2.msra.mxu0 0.0
        %4674 = vmatprep.subr.mxu0 0.0
        %4675 = vmatpush2.msra.mxu0 0.0
        %4676 = vmatprep.subr.mxu0 0.0
        %4677 = vmatpush2.msra.mxu0 0.0
        %4678 = vmatprep.subr.mxu0 0.0
        %4679 = vmatpush2.msra.mxu0 0.0
        %4680 = vmatprep.subr.mxu0 0.0
        %4681 = vmatpush2.msra.mxu0 0.0
        %4682 = vmatprep.subr.mxu0 0.0
        %4683 = vmatpush2.msra.mxu0 0.0
        %4684 = vmatprep.subr.mxu0 0.0
        %4685 = vmatpush2.msra.mxu0 0.0
        %4686 = vmatprep.subr.mxu0 0.0
        %4687 = vmatpush2.msra.mxu0 0.0
        %4688 = vmatprep.subr.mxu0 0.0
        %4689 = vmatpush2.msra.mxu0 0.0
        %4690 = vmatprep.subr.mxu0 0.0
        %4691 = vmatpush2.msra.mxu0 0.0
        %4692 = vmatprep.subr.mxu0 0.0
        %4693 = vmatpush2.msra.mxu0 0.0
        %4694 = vmatprep.subr.mxu0 0.0
        %4695 = vmatpush2.msra.mxu0 0.0
        %4696 = vmatprep.mubr.f32.mxu0 0.0
        %4697 = vmatmul.mubr.f32.gmra.mxu0 %v4621
        %v4698 = vpop.f32.mrf.mxu0
        %v4699 = vadd.f32 %v4618, %v4698
        %v4700 = vpop.f32.mrf.mxu0
        %4701 = vmatprep.mubr.f32.mxu0 0.0
        %4702 = vmatmul.mubr.f32.gmra.mxu0 %v4624
        %v4703 = vpop.f32.mrf.mxu0
        %v4704 = vadd.f32 %v4618, %v4703
        %v4705 = vpop.f32.mrf.mxu0
        %4706 = vmatprep.mubr.f32.mxu0 0.0
        %4707 = vmatmul.mubr.f32.gmra.mxu0 %v4627
        %v4708 = vpop.f32.mrf.mxu0
        %v4709 = vadd.f32 %v4618, %v4708
        %v4710 = vpop.f32.mrf.mxu0
        %4711 = vmatprep.mubr.f32.mxu0 0.0
        %4712 = vmatmul.mubr.f32.gmra.mxu0 %v4630
        %v4713 = vpop.f32.mrf.mxu0
        %v4714 = vadd.f32 %v4618, %v4713
        %v4715 = vpop.f32.mrf.mxu0
        %4716 = vdwg.mxu0
        %v4717 = vmul.f32 %v4699, 0.5
        %v4718 = vmul.f32 %v4704, 0.5
        %v4719 = vmul.f32 %v4709, 0.5
        %v4720 = vmul.f32 %v4714, 0.5
        %v4721 = vmul.f32 %v4699, 0.044715
        %v4722 = vmul.f32 %v4704, 0.044715
        %v4723 = vmul.f32 %v4709, 0.044715
        %v4724 = vmul.f32 %v4714, 0.044715
        %v4725 = vmul.f32 %v4721, %v4699
        %v4726 = vmul.f32 %v4722, %v4704
        %v4727 = vmul.f32 %v4723, %v4709
        %v4728 = vmul.f32 %v4724, %v4714
        %v4729 = vmul.f32 %v4725, %v4699
        %v4730 = vmul.f32 %v4726, %v4704
        %v4731 = vmul.f32 %v4727, %v4709
        %v4732 = vmul.f32 %v4728, %v4714
        %v4733 = vadd.f32 %v4699, %v4729
        %v4734 = vadd.f32 %v4704, %v4730
        %v4735 = vadd.f32 %v4709, %v4731
        %v4736 = vadd.f32 %v4714, %v4732
        %v4737 = vmul.f32 %v4733, 0.7978846
        %v4738 = vmul.f32 %v4734, 0.7978846
        %v4739 = vmul.f32 %v4735, 0.7978846
        %v4740 = vmul.f32 %v4736, 0.7978846
        %v4741 = vtanh.pop %v4737
        %v4742 = vtanh.pop %v4738
        %v4743 = vtanh.pop %v4739
        %v4744 = vtanh.pop %v4740
        %v4745 = vadd.f32 %v4741, 1.0
        %v4746 = vadd.f32 %v4742, 1.0
        %v4747 = vadd.f32 %v4743, 1.0
        %v4748 = vadd.f32 %v4744, 1.0
        %v4749 = vmul.f32 %v4717, %v4745
        %v4750 = vmul.f32 %v4718, %v4746
        %v4751 = vmul.f32 %v4719, %v4747
        %v4752 = vmul.f32 %v4720, %v4748
        %v4753 = vld [vmem:[%s766] sm:$0xff]
        %v4754 = vld [vmem:[%s766 + $0x8] sm:$0xff]
        %v4755 = vld [vmem:[%s766 + $0x10] sm:$0xff]
        %v4756 = vld [vmem:[%s766 + $0x18] sm:$0xff]
        %v4757 = vld [vmem:[%s873] sm:$0x1]
        %v4759 = vlaneseq
        %v4760 = vshrl.u32 %v4759, 7
        %v4761 = vsub.s32 0, %v4760
        %v4762 = vrot.slane %v4757, %v4761
        %v4765 = vsel %vm903, %v4749, 0
        %v4768 = vsel %vm903, %v4750, 0
        %v4771 = vsel %vm903, %v4751, 0
        %v4774 = vsel %vm903, %v4752, 0
        %4776 = vmatprep.subr.mxu0 0.0
        %4777 = vmatpush1.msra.mxu0 0.0
        %4778 = vmatprep.subr.mxu0 0.0
        %4779 = vmatpush1.msra.mxu0 0.0
        %4780 = vmatprep.subr.mxu0 0.0
        %4781 = vmatpush1.msra.mxu0 0.0
        %4782 = vmatprep.subr.mxu0 0.0
        %4783 = vmatpush1.msra.mxu0 0.0
        %4784 = vmatprep.subr.mxu0 0.0
        %4785 = vmatpush1.msra.mxu0 0.0
        %4786 = vmatprep.subr.mxu0 0.0
        %4787 = vmatpush1.msra.mxu0 0.0
        %4788 = vmatprep.subr.mxu0 0.0
        %4789 = vmatpush1.msra.mxu0 0.0
        %4790 = vmatprep.subr.mxu0 0.0
        %4791 = vmatpush1.msra.mxu0 0.0
        %4792 = vmatprep.subr.mxu0 0.0
        %4793 = vmatpush1.msra.mxu0 0.0
        %4794 = vmatprep.subr.mxu0 0.0
        %4795 = vmatpush1.msra.mxu0 0.0
        %4796 = vmatprep.subr.mxu0 0.0
        %4797 = vmatpush1.msra.mxu0 0.0
        %4798 = vmatprep.subr.mxu0 0.0
        %4799 = vmatpush1.msra.mxu0 0.0
        %4800 = vmatprep.subr.mxu0 0.0
        %4801 = vmatpush1.msra.mxu0 %v4756
        %4802 = vmatprep.subr.mxu0 0.0
        %4803 = vmatpush1.msra.mxu0 %v4755
        %4804 = vmatprep.subr.mxu0 0.0
        %4805 = vmatpush1.msra.mxu0 %v4754
        %4806 = vmatprep.subr.mxu0 0.0
        %4807 = vmatpush1.msra.mxu0 %v4753
        %4808 = vmatprep.subr.mxu0 0.0
        %4809 = vmatpush2.msra.mxu0 0.0
        %4810 = vmatprep.subr.mxu0 0.0
        %4811 = vmatpush2.msra.mxu0 0.0
        %4812 = vmatprep.subr.mxu0 0.0
        %4813 = vmatpush2.msra.mxu0 0.0
        %4814 = vmatprep.subr.mxu0 0.0
        %4815 = vmatpush2.msra.mxu0 0.0
        %4816 = vmatprep.subr.mxu0 0.0
        %4817 = vmatpush2.msra.mxu0 0.0
        %4818 = vmatprep.subr.mxu0 0.0
        %4819 = vmatpush2.msra.mxu0 0.0
        %4820 = vmatprep.subr.mxu0 0.0
        %4821 = vmatpush2.msra.mxu0 0.0
        %4822 = vmatprep.subr.mxu0 0.0
        %4823 = vmatpush2.msra.mxu0 0.0
        %4824 = vmatprep.subr.mxu0 0.0
        %4825 = vmatpush2.msra.mxu0 0.0
        %4826 = vmatprep.subr.mxu0 0.0
        %4827 = vmatpush2.msra.mxu0 0.0
        %4828 = vmatprep.subr.mxu0 0.0
        %4829 = vmatpush2.msra.mxu0 0.0
        %4830 = vmatprep.subr.mxu0 0.0
        %4831 = vmatpush2.msra.mxu0 0.0
        %4832 = vmatprep.subr.mxu0 0.0
        %4833 = vmatpush2.msra.mxu0 0.0
        %4834 = vmatprep.subr.mxu0 0.0
        %4835 = vmatpush2.msra.mxu0 0.0
        %4836 = vmatprep.subr.mxu0 0.0
        %4837 = vmatpush2.msra.mxu0 0.0
        %4838 = vmatprep.subr.mxu0 0.0
        %4839 = vmatpush2.msra.mxu0 0.0
        %4840 = vmatprep.mubr.f32.mxu0 0.0
        %4841 = vmatmul.mubr.f32.gmra.mxu0 %v4765
        %v4842 = vpop.f32.mrf.mxu0
        %v4843 = vadd.f32 %v4762, %v4842
        %v4844 = vpop.f32.mrf.mxu0
        %4845 = vmatprep.mubr.f32.mxu0 0.0
        %4846 = vmatmul.mubr.f32.gmra.mxu0 %v4768
        %v4847 = vpop.f32.mrf.mxu0
        %v4848 = vadd.f32 %v4762, %v4847
        %v4849 = vpop.f32.mrf.mxu0
        %4850 = vmatprep.mubr.f32.mxu0 0.0
        %4851 = vmatmul.mubr.f32.gmra.mxu0 %v4771
        %v4852 = vpop.f32.mrf.mxu0
        %v4853 = vadd.f32 %v4762, %v4852
        %v4854 = vpop.f32.mrf.mxu0
        %4855 = vmatprep.mubr.f32.mxu0 0.0
        %4856 = vmatmul.mubr.f32.gmra.mxu0 %v4774
        %v4857 = vpop.f32.mrf.mxu0
        %v4858 = vadd.f32 %v4762, %v4857
        %v4859 = vpop.f32.mrf.mxu0
        %4860 = vdwg.mxu0
        %s4861 = scalar_lea.vmem %s712, 7 [#allocation7]
        %v4862 = vld [vmem:[%s4861] sm:$0x1]
        %s4863 = scalar_lea.vmem %s721, 7 [#allocation9]
        %v4864 = vld [vmem:[%s4863] sm:$0x1]
        %v4865 = vsel %vm903, %v4843, 0.0
        %4866 = vadd.xlane.f32.xlu0 %v4865
        %v4867 = vpop.xlane.xlu0 %4866
        %v4868 = vsel %vm903, %v4848, 0.0
        %4869 = vadd.xlane.f32.xlu0 %v4868
        %v4870 = vpop.xlane.xlu0 %4869
        %v4871 = vsel %vm903, %v4853, 0.0
        %4872 = vadd.xlane.f32.xlu0 %v4871
        %v4873 = vpop.xlane.xlu0 %4872
        %v4874 = vsel %vm903, %v4858, 0.0
        %4875 = vadd.xlane.f32.xlu0 %v4874
        %v4876 = vpop.xlane.xlu0 %4875
        %v4877 = vmul.f32 %v4867, %v925
        %v4878 = vmul.f32 %v4870, %v925
        %v4879 = vmul.f32 %v4873, %v925
        %v4880 = vmul.f32 %v4876, %v925
        %v4881 = vsub.f32 %v4843, %v4877
        %v4882 = vsub.f32 %v4848, %v4878
        %v4883 = vsub.f32 %v4853, %v4879
        %v4884 = vsub.f32 %v4858, %v4880
        %v4885 = vmul.f32 %v4881, %v4881
        %v4886 = vmul.f32 %v4882, %v4882
        %v4887 = vmul.f32 %v4883, %v4883
        %v4888 = vmul.f32 %v4884, %v4884
        %v4889 = vsel %vm903, %v4885, 0.0
        %4890 = vadd.xlane.f32.xlu0 %v4889
        %v4891 = vpop.xlane.xlu0 %4890
        %v4892 = vsel %vm903, %v4886, 0.0
        %4893 = vadd.xlane.f32.xlu0 %v4892
        %v4894 = vpop.xlane.xlu0 %4893
        %v4895 = vsel %vm903, %v4887, 0.0
        %4896 = vadd.xlane.f32.xlu0 %v4895
        %v4897 = vpop.xlane.xlu0 %4896
        %v4898 = vsel %vm903, %v4888, 0.0
        %4899 = vadd.xlane.f32.xlu0 %v4898
        %v4900 = vpop.xlane.xlu0 %4899
        %v4901 = vmul.f32 %v4891, %v925
        %v4902 = vmul.f32 %v4894, %v925
        %v4903 = vmul.f32 %v4897, %v925
        %v4904 = vmul.f32 %v4900, %v925
        %v4905 = vadd.f32 %v4901, 1e-05
        %v4906 = vadd.f32 %v4902, 1e-05
        %v4907 = vadd.f32 %v4903, 1e-05
        %v4908 = vadd.f32 %v4904, 1e-05
        %v4909 = vrsqrt.pop %v4905
        %v4910 = vrsqrt.pop %v4906
        %v4911 = vrsqrt.pop %v4907
        %v4912 = vrsqrt.pop %v4908
        %v4913 = vmul.f32 %v4881, %v4909
        %v4914 = vmul.f32 %v4882, %v4910
        %v4915 = vmul.f32 %v4883, %v4911
        %v4916 = vmul.f32 %v4884, %v4912
        %v4918 = vlaneseq
        %v4919 = vshrl.u32 %v4918, 7
        %v4920 = vsub.s32 0, %v4919
        %v4921 = vrot.slane %v4862, %v4920
        %v4923 = vmul.f32 %v4913, %v4921
        %v4924 = vmul.f32 %v4914, %v4921
        %v4925 = vmul.f32 %v4915, %v4921
        %v4926 = vmul.f32 %v4916, %v4921
        %v4928 = vlaneseq
        %v4929 = vshrl.u32 %v4928, 7
        %v4930 = vsub.s32 0, %v4929
        %v4931 = vrot.slane %v4864, %v4930
        %v4933 = vadd.f32 %v4923, %v4931
        %v4934 = vadd.f32 %v4924, %v4931
        %v4935 = vadd.f32 %v4925, %v4931
        %v4936 = vadd.f32 %v4926, %v4931
        %v4937 = vmul.f32 %v4933, 0.5
        %v4938 = vmul.f32 %v4934, 0.5
        %v4939 = vmul.f32 %v4935, 0.5
        %v4940 = vmul.f32 %v4936, 0.5
        %v4941 = vadd.f32 %v4529, %v4937
        %v4942 = vadd.f32 %v4530, %v4938
        %v4943 = vadd.f32 %v4531, %v4939
        %v4944 = vadd.f32 %v4532, %v4940
        %4945 = vst.msk [vmem:[#allocation18] sm:$0xff] %vm903, %v4941
        %4946 = vst.msk [vmem:[#allocation18 + $0x8] sm:$0xff] %vm903, %v4942
        %4947 = vst.msk [vmem:[#allocation18 + $0x10] sm:$0xff] %vm903, %v4943
        %4948 = vst.msk [vmem:[#allocation18 + $0x18] sm:$0xff] %vm903, %v4944
        // Predicated region
        $region125: #{tpu_custom_call.1} parent=87 // pred_check
          %p4949 = pneg %p472
        $region126: #{tpu_custom_call.1} parent=87 // pred_check_branch
          %4951 = sbr.rel (%p4949) target = $region128
        $region127: #{tpu_custom_call.1} parent=87 // pred_region
          %s4953 = ssub.s32 512, 512
          %4954 = vsyncadd [#allocation6], %s4953
          %s4955 = sshll.u32 [#allocation18], 4
          %s4956 = int_to_ptr.vmem [resolvable:$true] %s4955
          %4961 = dma.vmem_to_hbm [thread:$0]  %s4956, 512, %s17, [#allocation6], 128, 128, 8
        $region128: #{tpu_custom_call.1} parent=87 // pred_fallthru
          _
        // Predicated region
        $region129: #{tpu_custom_call.1} parent=87 // pred_check
          %p4962 = pneg %p472
        $region130: #{tpu_custom_call.1} parent=87 // pred_check_branch
          %4964 = sbr.rel (%p4962) target = $region132
        $region131: #{tpu_custom_call.1} parent=87 // pred_region
          %4965 = dma.done [#allocation6], 512
        $region132: #{tpu_custom_call.1} parent=87 // pred_fallthru
          _
      $region88: #{tpu_custom_call.1} parent=5 // pred_fallthru
        _
      %p4966 = scmp.le.s32.totalorder 2, %s37
      // Predicated region
      $region133: #{tpu_custom_call.1} parent=5 // pred_check
        %p4967 = pneg %p4966
      $region134: #{tpu_custom_call.1} parent=5 // pred_check_branch
        %4969 = sbr.rel (%p4967) target = $region136
      $region135: #{tpu_custom_call.1} parent=5 // pred_region
        %s4970 = ssub.s32 %s37, 2
      $region136: #{tpu_custom_call.1} parent=5 // pred_fallthru
        _
    $region6: #{tpu_custom_call.1} parent=1 // loop_footer
      %s41 = sadd.s32 1, %s37
    $region7: #{tpu_custom_call.1} parent=1 // loop_footer_branch
      %36 = sbr.rel target = $region3
    $region8: #{tpu_custom_call.1} parent=1 // loop_exit
      _
    %4971 = vsyncpa [#allocation5], 1
    %s4972 = scalar_lea.sflag [#allocation5], 1
    %4973 = vsyncpa %s4972, 1
    %4974 = vsyncpa [#allocation8], 1
    %s4975 = scalar_lea.sflag [#allocation8], 1
    %4976 = vsyncpa %s4975, 1
    %4977 = vsyncpa [#allocation11], 1
    %s4978 = scalar_lea.sflag [#allocation11], 1
    %4979 = vsyncpa %s4978, 1
    %4980 = vsyncpa [#allocation14], 1
    %s4981 = scalar_lea.sflag [#allocation14], 1
    %4982 = vsyncpa %s4981, 1
    %4983 = vsyncpa [#allocation17], 1
    %s4984 = scalar_lea.sflag [#allocation17], 1
    %4985 = vsyncpa %s4984, 1
    %4986 = vsyncpa [#allocation6], 1
    %s4987 = scalar_lea.sflag [#allocation6], 1
    %4988 = vsyncpa %s4987, 1

</llo_original>
